<compile_context>
chip_gen: v5e
topology: v5e:2x2
jax: 0.10.0
libtpu: 0.0.40
codegen_flags: <defaults>
</compile_context>

<pallas_src>
import jax
import jax.numpy as jnp
from jax.experimental import pallas as pl
from jax.experimental.pallas import tpu as pltpu


# ----------------------------------------------------------------------------
# helpers
# ----------------------------------------------------------------------------
def _round_up(x, m):
    return (x + m - 1) // m * m


def _time_tile(t, max_tile=8):
    """Largest divisor of t that is <= max_tile (keeps the unrolled loop short)."""
    for d in range(min(t, max_tile), 0, -1):
        if t % d == 0:
            return d
    return 1


def _batch_tile(bp, max_tile=64):
    """Largest multiple-of-8 divisor of bp, capped at 64 (vreg pressure) and at bp//2
    when bp >= 16 so the batch grid axis has >= 2 'parallel' points (megacore)."""
    assert bp % 8 == 0
    cap = max_tile
    if bp >= 16:
        cap = min(cap, bp // 2)
    best = 8
    for d in range(8, min(cap, bp) + 1, 8):
        if bp % d == 0:
            best = d
    return best


def _vmem_limit(est_bytes):
    """Explicit scoped-VMEM limit: 2x headroom over the per-block estimate, never below
    the 32 MiB v6e/v7x default, capped safely below v7x's 64 MiB physical VMEM."""
    return int(min(max(2 * est_bytes, 32 * 1024 * 1024), 56 * 1024 * 1024))


def _spec(shape, index_map, buffers=None):
    """BlockSpec; buffers=1 single-buffers constant-index blocks (weights / biases)."""
    if buffers is None:
        return pl.BlockSpec(shape, index_map)
    try:
        return pl.BlockSpec(shape, index_map, pipeline_mode=pl.Buffered(buffers))
    except (TypeError, AttributeError):      # older jax: fall back to default buffering
        return pl.BlockSpec(shape, index_map)


# ----------------------------------------------------------------------------
# fused LSTM kernel: per grid step (batch block, time block)
#   1) one large-M MXU matmul  (TB*Bt, D) @ (D, 4H) + b  ->  VMEM scratch  (no HBM gx)
#   2) unrolled serial recurrence over TB steps, only (Bt, H) @ (H, 4H) per step
# ----------------------------------------------------------------------------
def _make_lstm_kernel(collect_seq, TB, Bt, H):
    def kernel(x_ref, wx_ref, b_ref, wh_ref, h0_ref, c0_ref, *refs):
        if collect_seq:
            hseq_ref, hT_ref, cT_ref, gx_scr, h_scr, c_scr = refs
        else:
            hT_ref, cT_ref, gx_scr, h_scr, c_scr = refs

        t = pl.program_id(1)

        @pl.when(t == 0)
        def _():
            h_scr[...] = h0_ref[...]
            c_scr[...] = c0_ref[...]

        # Input projection for the whole time block (large-M MXU matmul, f32 accum).
        x = x_ref[...]
        if x.dtype != wx_ref.dtype:
            x = x.astype(wx_ref.dtype)
        gx_scr[...] = (jnp.dot(x, wx_ref[...], preferred_element_type=jnp.float32)
                       + b_ref[...])

        h = h_scr[...]
        c = c_scr[...]
        # Unrolled serial recurrence.  wh_ref is indexed inside the loop (not hoisted)
        # to keep vreg pressure low; gate elementwise math stays f32 (safe on v5e).
        for i in range(TB):
            gates = (gx_scr[pl.ds(i * Bt, Bt), :]
                     + jnp.dot(h.astype(wh_ref.dtype), wh_ref[...],
                               preferred_element_type=jnp.float32))
            ig = jax.nn.sigmoid(gates[:, 0:H])
            fg = jax.nn.sigmoid(gates[:, H:2 * H])
            gg = jnp.tanh(gates[:, 2 * H:3 * H])
            og = jax.nn.sigmoid(gates[:, 3 * H:4 * H])
            c = fg * c + ig * gg
            h = og * jnp.tanh(c)
            if collect_seq:
                hseq_ref[pl.ds(i * Bt, Bt), :] = h      # lane-dense, sublane-aligned

        h_scr[...] = h
        c_scr[...] = c

        @pl.when(t == pl.num_programs(1) - 1)
        def _():                                        # final state written exactly once
            hT_ref[...] = h
            cT_ref[...] = c

    return kernel


def _lstm_vmem_bytes(TB, Bt, D, H, collect_seq, x_bytes, w_bytes):
    est = 2 * TB * Bt * D * x_bytes              # input block, double-buffered
    est += D * 4 * H * w_bytes + 4 * H * 4       # wx (single-buffered) + bias
    est += H * 4 * H * w_bytes                   # wh (single-buffered)
    est += 2 * 2 * Bt * H * 4                    # h0 / c0 inputs
    est += 2 * Bt * H * 4                        # hT / cT outputs (resident)
    if collect_seq:
        est += 2 * TB * Bt * H * 4               # hidden-seq output, double-buffered
    est += TB * Bt * 4 * H * 4                   # gx scratch
    est += 2 * Bt * H * 4                        # h / c scratch
    return est


def lstm_recurrence(emb, wx, b, wh, h0, c0, *, collect_seq):
    """emb: (T, Bp, D) f32, wx: (D, 4H), b: (1, 4H), wh: (H, 4H), h0/c0: (Bp, H) f32.

    Returns (h_seq_batch_major (Bp, T, H), h_T, c_T) if collect_seq else (h_T, c_T)."""
    T, Bp, D = emb.shape
    H = wh.shape[0]
    TB = _time_tile(T)
    Bt = _batch_tile(Bp)
    nt, nb = T // TB, Bp // Bt

    # Pack (time-block, batch-block) slabs so each kernel block is a 2D (TB*Bt, D) tile.
    emb_p = (emb.reshape(nt, TB, nb, Bt, D)
                .transpose(0, 2, 1, 3, 4)
                .reshape(nt, nb, TB * Bt, D))

    in_specs = [
        _spec((None, None, TB * Bt, D), lambda bb, tb: (tb, bb, 0, 0)),
        _spec((D, 4 * H), lambda bb, tb: (0, 0), buffers=1),
        _spec((1, 4 * H), lambda bb, tb: (0, 0), buffers=1),
        _spec((H, 4 * H), lambda bb, tb: (0, 0), buffers=1),
        _spec((Bt, H), lambda bb, tb: (bb, 0)),
        _spec((Bt, H), lambda bb, tb: (bb, 0)),
    ]
    state_shape = jax.ShapeDtypeStruct((Bp, H), jnp.float32)
    state_spec = _spec((Bt, H), lambda bb, tb: (bb, 0))

    if collect_seq:
        out_shape = (jax.ShapeDtypeStruct((nt, nb, TB * Bt, H), jnp.float32),
                     state_shape, state_shape)
        out_specs = (_spec((None, None, TB * Bt, H), lambda bb, tb: (tb, bb, 0, 0)),
                     state_spec, state_spec)
    else:
        out_shape = (state_shape, state_shape)
        out_specs = (state_spec, state_spec)

    est = _lstm_vmem_bytes(TB, Bt, D, H, collect_seq,
                           emb.dtype.itemsize, wx.dtype.itemsize)
    hbm_bytes = (T * Bp * D * emb.dtype.itemsize
                 + (T * Bp * H * 4 if collect_seq else 0)
                 + (D + H) * 4 * H * wx.dtype.itemsize + 4 * H * 4
                 + 4 * Bp * H * 4)

    outs = pl.pallas_call(
        _make_lstm_kernel(collect_seq, TB, Bt, H),
        out_shape=out_shape,
        grid_spec=pltpu.PrefetchScalarGridSpec(
            num_scalar_prefetch=0,
            grid=(nb, nt),
            in_specs=in_specs,
            out_specs=out_specs,
            scratch_shapes=[pltpu.VMEM((TB * Bt, 4 * H), jnp.float32),
                            pltpu.VMEM((Bt, H), jnp.float32),
                            pltpu.VMEM((Bt, H), jnp.float32)],
        ),
        compiler_params=pltpu.CompilerParams(
            dimension_semantics=("parallel", "arbitrary"),
            vmem_limit_bytes=_vmem_limit(est)),
        cost_estimate=pl.CostEstimate(
            flops=int(2 * T * Bp * (D + H) * 4 * H),
            transcendentals=int(5 * T * Bp * H),
            bytes_accessed=int(hbm_bytes)),
    )(emb_p, wx, b, wh, h0, c0)

    if collect_seq:
        hseq_p, hT, cT = outs
        # Unpack straight to batch-major (Bp, T, H) — ready for the prediction matmul,
        # so the large logits tensor is never transposed.
        hseq = (hseq_p.reshape(nt, nb, TB, Bt, H)
                      .transpose(1, 3, 0, 2, 4)
                      .reshape(Bp, T, H))
        return hseq, hT, cT
    return outs


# ----------------------------------------------------------------------------
# prediction kernel: Linear (preds) + LogSoftmax (probs), row-tiled & pipelined.
# ----------------------------------------------------------------------------
def _pred_kernel(x_ref, w_ref, b_ref, out_ref):
    x = x_ref[...]
    if x.dtype != w_ref.dtype:
        x = x.astype(w_ref.dtype)
    logits = (jnp.dot(x, w_ref[...], preferred_element_type=jnp.float32)
              + b_ref[...])                                   # (TN, ncp)
    m = jnp.max(logits, axis=-1, keepdims=True)
    lse = jnp.log(jnp.sum(jnp.exp(logits - m), axis=-1, keepdims=True)) + m
    out_ref[...] = logits - lse


def _pred_row_tile(n, ncp, hsz, w_itemsize, budget_bytes):
    """Row tile sized from ncp + the VMEM budget; fallback is 8 rows (never full-N)."""
    assert n % 8 == 0
    fixed = hsz * ncp * w_itemsize + ncp * 4          # single-buffered weight + bias
    per_row = 2 * 4 * (ncp + hsz)                     # double-buffered f32 in/out rows
    cap = max((budget_bytes - fixed) // per_row, 8)
    cap = min(int(cap), 512)
    best = 8
    for d in range(8, min(cap, n) + 1, 8):
        if n % d == 0:
            best = d
    return best


def prediction(flat_h, w, b, *, budget_bytes=24 * 1024 * 1024):
    """flat_h: (N, H) f32, w: (H, ncp), b: (1, ncp) -> (N, ncp) f32 log-probs."""
    N, H = flat_h.shape
    ncp = w.shape[1]
    TN = _pred_row_tile(N, ncp, H, w.dtype.itemsize, budget_bytes)
    est = 2 * TN * H * 4 + H * ncp * w.dtype.itemsize + ncp * 4 + 2 * TN * ncp * 4
    return pl.pallas_call(
        _pred_kernel,
        out_shape=jax.ShapeDtypeStruct((N, ncp), jnp.float32),
        grid_spec=pltpu.PrefetchScalarGridSpec(
            num_scalar_prefetch=0,
            grid=(N // TN,),
            in_specs=[_spec((TN, H), lambda i: (i, 0)),
                      _spec((H, ncp), lambda i: (0, 0), buffers=1),
                      _spec((1, ncp), lambda i: (0, 0), buffers=1)],
            out_specs=_spec((TN, ncp), lambda i: (i, 0)),
        ),
        compiler_params=pltpu.CompilerParams(
            dimension_semantics=("parallel",),
            vmem_limit_bytes=_vmem_limit(est)),
        cost_estimate=pl.CostEstimate(
            flops=int(2 * N * H * ncp),
            transcendentals=int(N * ncp),
            bytes_accessed=int(N * H * 4 + H * ncp * w.dtype.itemsize + N * ncp * 4)),
    )(flat_h, w, b)


# ----------------------------------------------------------------------------
# Seq2SeqBase.forward
# ----------------------------------------------------------------------------
def seq2seq_forward(params, src, dst, *, use_bf16_weights=True):
    B, Ts = src.shape
    _, Td = dst.shape
    H = params["enc_wh"].shape[0]
    nc = params["pred_w"].shape[1]

    def as_w(x):                       # weights to bf16 for the MXU; biases stay f32
        return x.astype(jnp.bfloat16) if use_bf16_weights else x

    # --- pad batch to a sublane multiple (token 0 rows exist in both embeddings)
    Bp = _round_up(B, 8)
    if Bp != B:
        src = jnp.pad(src, ((0, Bp - B), (0, 0)))
        dst = jnp.pad(dst, ((0, Bp - B), (0, 0)))

    # --- encode(src): src.transpose(0,1) -> embed_in -> encoder_rnn (final state only;
    #     the encoder sequence is never needed since attn is identity)
    emb_in = jnp.take(params["embed_in"], src.T, axis=0)              # (Ts, Bp, D)
    z = jnp.zeros((Bp, H), jnp.float32)
    h_T, c_T = lstm_recurrence(emb_in, as_w(params["enc_wx"]), params["enc_b"],
                               as_w(params["enc_wh"]), z, z, collect_seq=False)

    # --- decode: dst.transpose(0,1) -> embed_out -> per-step decoder_rnn
    #     (bridge = pass encoder final state; input_i / attn / dropout = identity)
    emb_out = jnp.take(params["embed_out"], dst.T, axis=0)            # (Td, Bp, D)
    dec_bm, _, _ = lstm_recurrence(emb_out, as_w(params["dec_wx"]), params["dec_b"],
                                   as_w(params["dec_wh"]), h_T, c_T,
                                   collect_seq=True)                  # (Bp, Td, H)

    # --- prediction: Linear + LogSoftmax, emitted batch-major; class dim padded to a
    #     lane multiple with -1e30 bias so padded classes do not perturb the normalizer.
    ncp = _round_up(nc, 128)
    pred_w, pred_b = params["pred_w"], params["pred_b"]
    if ncp != nc:
        pred_w = jnp.pad(pred_w, ((0, 0), (0, ncp - nc)))
        pred_b = jnp.pad(pred_b, ((0, 0), (0, ncp - nc)), constant_values=-1e30)

    flat_h = dec_bm.reshape(Bp * Td, H)
    pred = prediction(flat_h, as_w(pred_w), pred_b)                   # (Bp*Td, ncp)
    return pred.reshape(Bp, Td, ncp)[:B, :, :nc]                      # (B, Td, nc)


# ----------------------------------------------------------------------------
# pure-JAX reference (f32) for correctness checking
# ----------------------------------------------------------------------------
def seq2seq_reference(params, src, dst):
    def lstm(x_seq, wx, wh, b, h0, c0):
        H = wh.shape[0]

        def step(carry, x_t):
            h, c = carry
            gates = x_t @ wx + h @ wh + b
            i = jax.nn.sigmoid(gates[:, 0:H])
            f = jax.nn.sigmoid(gates[:, H:2 * H])
            g = jnp.tanh(gates[:, 2 * H:3 * H])
            o = jax.nn.sigmoid(gates[:, 3 * H:4 * H])
            c = f * c + i * g
            h = o * jnp.tanh(c)
            return (h, c), h

        (hT, cT), hs = jax.lax.scan(step, (h0, c0), x_seq)
        return hs, hT, cT

    B = src.shape[0]
    H = params["enc_wh"].shape[0]
    emb_in = jnp.take(params["embed_in"], src.T, axis=0)
    z = jnp.zeros((B, H), jnp.float32)
    _, hT, cT = lstm(emb_in, params["enc_wx"], params["enc_wh"], params["enc_b"], z, z)
    emb_out = jnp.take(params["embed_out"], dst.T, axis=0)
    dec_seq, _, _ = lstm(emb_out, params["dec_wx"], params["dec_wh"], params["dec_b"], hT, cT)
    Td = dec_seq.shape[0]
    logits = dec_seq.reshape(Td * B, H) @ params["pred_w"] + params["pred_b"]
    logp = jax.nn.log_softmax(logits, axis=-1).reshape(Td, B, -1)
    return jnp.transpose(logp, (1, 0, 2))


def make_params(key, vsz_in, vsz_out, dsz, hsz):
    nc = vsz_out + 1
    ks = jax.random.split(key, 9)
    s = 0.1
    return {
        "embed_in":  s * jax.random.normal(ks[0], (vsz_in + 1, dsz), jnp.float32),
        "embed_out": s * jax.random.normal(ks[1], (vsz_out + 1, dsz), jnp.float32),
        "enc_wx": s * jax.random.normal(ks[2], (dsz, 4 * hsz), jnp.float32),
        "enc_wh": s * jax.random.normal(ks[3], (hsz, 4 * hsz), jnp.float32),
        "enc_b":  jnp.zeros((1, 4 * hsz), jnp.float32),
        "dec_wx": s * jax.random.normal(ks[4], (dsz, 4 * hsz), jnp.float32),
        "dec_wh": s * jax.random.normal(ks[5], (hsz, 4 * hsz), jnp.float32),
        "dec_b":  jnp.zeros((1, 4 * hsz), jnp.float32),
        "pred_w": s * jax.random.normal(ks[6], (hsz, nc), jnp.float32),
        "pred_b": jnp.zeros((1, nc), jnp.float32),
    }


if __name__ == "__main__":
    key = jax.random.PRNGKey(0)
    # small but hardware-friendly shapes: D, H lane-aligned; B is padded to 8 internally.
    B, Ts, Ttgt = 2, 8, 9
    vsz_in, vsz_out, dsz, hsz = 20, 16, 128, 128

    pkey, skey, tkey = jax.random.split(key, 3)
    params = make_params(pkey, vsz_in, vsz_out, dsz, hsz)

    src = jax.random.randint(skey, (B, Ts), 1, vsz_in + 1, dtype=jnp.int32)
    tgt = jax.random.randint(tkey, (B, Ttgt), 1, vsz_out + 1, dtype=jnp.int32)
    dst = tgt[:, :-1]                       # make_input: dst = tgt[:, :-1]

    fwd = jax.jit(seq2seq_forward)
    out = fwd(params, src, dst)             # (B, Ttgt-1, vsz_out+1) log-probs
    jax.block_until_ready(out)

    assert out.shape == (B, Ttgt - 1, vsz_out + 1)
    # log-softmax rows sum to 1 in prob space (padded classes contribute ~0)
    assert jnp.allclose(jnp.sum(jnp.exp(out), axis=-1), 1.0, atol=1e-4)
    # matches the f32 pure-JAX reference (bf16 MXU weights -> loose tolerance)
    ref = seq2seq_reference(params, src, dst)
    assert jnp.allclose(out, ref, atol=2e-1), float(jnp.max(jnp.abs(out - ref)))
    print("KERNEL_OK")
</pallas_src>

<mosaic_0001>
module attributes {stable_mosaic.version = 11 : i64} {
  func.func @kernel(%arg0: i32, %arg1: i32, %arg2: memref<1x1x64x128xf32, #tpu.memory_space<vmem>>, %arg3: memref<128x512xbf16, #tpu.memory_space<vmem>>, %arg4: memref<1x512xf32, #tpu.memory_space<vmem>>, %arg5: memref<128x512xbf16, #tpu.memory_space<vmem>>, %arg6: memref<8x128xf32, #tpu.memory_space<vmem>>, %arg7: memref<8x128xf32, #tpu.memory_space<vmem>>, %arg8: memref<8x128xf32, #tpu.memory_space<vmem>>, %arg9: memref<8x128xf32, #tpu.memory_space<vmem>>, %arg10: memref<64x512xf32, #tpu.memory_space<vmem>>, %arg11: memref<8x128xf32, #tpu.memory_space<vmem>>, %arg12: memref<8x128xf32, #tpu.memory_space<vmem>>) attributes {dimension_semantics = [#tpu.dimension_semantics<parallel>, #tpu.dimension_semantics<arbitrary>], iteration_bounds = array<i64: 1, 1>, scalar_prefetch = 0 : i64, scratch_operands = 3 : i64, tpu.core_type = #tpu.core_type<tc>, window_params = [{transform_indices = @transform_0, window_bounds = array<i64: 1, 1, 64, 128>}, {pipeline_mode = #tpu.pipeline_mode<synchronous>, transform_indices = @transform_1, window_bounds = array<i64: 128, 512>}, {pipeline_mode = #tpu.pipeline_mode<synchronous>, transform_indices = @transform_2, window_bounds = array<i64: 1, 512>}, {pipeline_mode = #tpu.pipeline_mode<synchronous>, transform_indices = @transform_3, window_bounds = array<i64: 128, 512>}, {transform_indices = @transform_4, window_bounds = array<i64: 8, 128>}, {transform_indices = @transform_5, window_bounds = array<i64: 8, 128>}, {transform_indices = @transform_6, window_bounds = array<i64: 8, 128>}, {transform_indices = @transform_7, window_bounds = array<i64: 8, 128>}]} {
    %c0_i32 = arith.constant 0 : i32
    %0 = arith.cmpi eq, %arg1, %c0_i32 : i32
    %1 = arith.extui %0 : i1 to i32
    %c0_i32_0 = arith.constant 0 : i32
    %2 = arith.cmpi ne, %1, %c0_i32_0 : i32
    scf.if %2 {
      %c0_77 = arith.constant 0 : index
      %c0_78 = arith.constant 0 : index
      %259 = vector.load %arg6[%c0_77, %c0_78] : memref<8x128xf32, #tpu.memory_space<vmem>>, vector<8x128xf32>
      %c0_79 = arith.constant 0 : index
      %c0_80 = arith.constant 0 : index
      %260 = vector.load %arg11[%c0_79, %c0_80] : memref<8x128xf32, #tpu.memory_space<vmem>>, vector<8x128xf32>
      tpu.vector_store %arg11[%c0_79, %c0_80], %259 {strides = array<i32>} : memref<8x128xf32, #tpu.memory_space<vmem>>, vector<8x128xf32>,
      %c0_81 = arith.constant 0 : index
      %c0_82 = arith.constant 0 : index
      %261 = vector.load %arg7[%c0_81, %c0_82] : memref<8x128xf32, #tpu.memory_space<vmem>>, vector<8x128xf32>
      %c0_83 = arith.constant 0 : index
      %c0_84 = arith.constant 0 : index
      %262 = vector.load %arg12[%c0_83, %c0_84] : memref<8x128xf32, #tpu.memory_space<vmem>>, vector<8x128xf32>
      tpu.vector_store %arg12[%c0_83, %c0_84], %261 {strides = array<i32>} : memref<8x128xf32, #tpu.memory_space<vmem>>, vector<8x128xf32>,
    } else {
    }
    %c0 = arith.constant 0 : index
    %c0_1 = arith.constant 0 : index
    %c0_2 = arith.constant 0 : index
    %c0_3 = arith.constant 0 : index
    %3 = vector.load %arg2[%c0, %c0_1, %c0_2, %c0_3] : memref<1x1x64x128xf32, #tpu.memory_space<vmem>>, vector<1x1x64x128xf32>
    %4 = vector.shape_cast %3 : vector<1x1x64x128xf32> to vector<64x128xf32>
    %5 = arith.truncf %4 : vector<64x128xf32> to vector<64x128xbf16>
    %c0_4 = arith.constant 0 : index
    %c0_5 = arith.constant 0 : index
    %6 = vector.load %arg3[%c0_4, %c0_5] : memref<128x512xbf16, #tpu.memory_space<vmem>>, vector<128x512xbf16>
    %cst = arith.constant dense<0.000000e+00> : vector<64x512xf32>
    %7 = tpu.matmul %5, %6, %cst {dimension_numbers = #tpu.dot_dimension_numbers<[1], [0], [0], [1], [0, 0, 1, 1], [], []>} : vector<64x128xbf16>, vector<128x512xbf16>, vector<64x512xf32> -> vector<64x512xf32>
    %c0_6 = arith.constant 0 : index
    %c0_7 = arith.constant 0 : index
    %8 = vector.load %arg4[%c0_6, %c0_7] : memref<1x512xf32, #tpu.memory_space<vmem>>, vector<1x512xf32>
    %9 = vector.broadcast %8 : vector<1x512xf32> to vector<64x512xf32>
    %10 = arith.addf %7, %9 : vector<64x512xf32>
    %c0_8 = arith.constant 0 : index
    %c0_9 = arith.constant 0 : index
    %11 = vector.load %arg10[%c0_8, %c0_9] : memref<64x512xf32, #tpu.memory_space<vmem>>, vector<64x512xf32>
    tpu.vector_store %arg10[%c0_8, %c0_9], %10 {strides = array<i32>} : memref<64x512xf32, #tpu.memory_space<vmem>>, vector<64x512xf32>,
    %c0_10 = arith.constant 0 : index
    %c0_11 = arith.constant 0 : index
    %12 = vector.load %arg11[%c0_10, %c0_11] : memref<8x128xf32, #tpu.memory_space<vmem>>, vector<8x128xf32>
    %c0_12 = arith.constant 0 : index
    %c0_13 = arith.constant 0 : index
    %13 = vector.load %arg12[%c0_12, %c0_13] : memref<8x128xf32, #tpu.memory_space<vmem>>, vector<8x128xf32>
    %c0_14 = arith.constant 0 : index
    %c0_15 = arith.constant 0 : index
    %14 = vector.load %arg10[%c0_14, %c0_15] : memref<64x512xf32, #tpu.memory_space<vmem>>, vector<8x512xf32>
    %15 = arith.truncf %12 : vector<8x128xf32> to vector<8x128xbf16>
    %c0_16 = arith.constant 0 : index
    %c0_17 = arith.constant 0 : index
    %16 = vector.load %arg5[%c0_16, %c0_17] : memref<128x512xbf16, #tpu.memory_space<vmem>>, vector<128x512xbf16>
    %cst_18 = arith.constant dense<0.000000e+00> : vector<8x512xf32>
    %17 = tpu.matmul %15, %16, %cst_18 {dimension_numbers = #tpu.dot_dimension_numbers<[1], [0], [0], [1], [0, 0, 1, 1], [], []>} : vector<8x128xbf16>, vector<128x512xbf16>, vector<8x512xf32> -> vector<8x512xf32>
    %18 = arith.addf %14, %17 : vector<8x512xf32>
    %19 = vector.extract_strided_slice %18 {offsets = [0, 0], sizes = [8, 128], strides = [1, 1]} : vector<8x512xf32> to vector<8x128xf32>
    %20 = arith.negf %19 : vector<8x128xf32>
    %21 = math.exp %20 : vector<8x128xf32>
    %cst_19 = arith.constant 1.000000e+00 : f32
    %22 = vector.broadcast %cst_19 : f32 to vector<8x128xf32>
    %23 = arith.addf %22, %21 : vector<8x128xf32>
    %24 = arith.divf %22, %23 : vector<8x128xf32>
    %25 = vector.extract_strided_slice %18 {offsets = [0, 128], sizes = [8, 128], strides = [1, 1]} : vector<8x512xf32> to vector<8x128xf32>
    %26 = arith.negf %25 : vector<8x128xf32>
    %27 = math.exp %26 : vector<8x128xf32>
    %cst_20 = arith.constant 1.000000e+00 : f32
    %28 = vector.broadcast %cst_20 : f32 to vector<8x128xf32>
    %29 = arith.addf %28, %27 : vector<8x128xf32>
    %30 = arith.divf %28, %29 : vector<8x128xf32>
    %31 = vector.extract_strided_slice %18 {offsets = [0, 256], sizes = [8, 128], strides = [1, 1]} : vector<8x512xf32> to vector<8x128xf32>
    %32 = math.tanh %31 : vector<8x128xf32>
    %33 = vector.extract_strided_slice %18 {offsets = [0, 384], sizes = [8, 128], strides = [1, 1]} : vector<8x512xf32> to vector<8x128xf32>
    %34 = arith.negf %33 : vector<8x128xf32>
    %35 = math.exp %34 : vector<8x128xf32>
    %cst_21 = arith.constant 1.000000e+00 : f32
    %36 = vector.broadcast %cst_21 : f32 to vector<8x128xf32>
    %37 = arith.addf %36, %35 : vector<8x128xf32>
    %38 = arith.divf %36, %37 : vector<8x128xf32>
    %39 = arith.mulf %30, %13 : vector<8x128xf32>
    %40 = arith.mulf %24, %32 : vector<8x128xf32>
    %41 = arith.addf %39, %40 : vector<8x128xf32>
    %42 = math.tanh %41 : vector<8x128xf32>
    %43 = arith.mulf %38, %42 : vector<8x128xf32>
    %c8 = arith.constant 8 : index
    %c0_22 = arith.constant 0 : index
    %44 = vector.load %arg10[%c8, %c0_22] : memref<64x512xf32, #tpu.memory_space<vmem>>, vector<8x512xf32>
    %45 = arith.truncf %43 : vector<8x128xf32> to vector<8x128xbf16>
    %c0_23 = arith.constant 0 : index
    %c0_24 = arith.constant 0 : index
    %46 = vector.load %arg5[%c0_23, %c0_24] : memref<128x512xbf16, #tpu.memory_space<vmem>>, vector<128x512xbf16>
    %cst_25 = arith.constant dense<0.000000e+00> : vector<8x512xf32>
    %47 = tpu.matmul %45, %46, %cst_25 {dimension_numbers = #tpu.dot_dimension_numbers<[1], [0], [0], [1], [0, 0, 1, 1], [], []>} : vector<8x128xbf16>, vector<128x512xbf16>, vector<8x512xf32> -> vector<8x512xf32>
    %48 = arith.addf %44, %47 : vector<8x512xf32>
    %49 = vector.extract_strided_slice %48 {offsets = [0, 0], sizes = [8, 128], strides = [1, 1]} : vector<8x512xf32> to vector<8x128xf32>
    %50 = arith.negf %49 : vector<8x128xf32>
    %51 = math.exp %50 : vector<8x128xf32>
    %cst_26 = arith.constant 1.000000e+00 : f32
    %52 = vector.broadcast %cst_26 : f32 to vector<8x128xf32>
    %53 = arith.addf %52, %51 : vector<8x128xf32>
    %54 = arith.divf %52, %53 : vector<8x128xf32>
    %55 = vector.extract_strided_slice %48 {offsets = [0, 128], sizes = [8, 128], strides = [1, 1]} : vector<8x512xf32> to vector<8x128xf32>
    %56 = arith.negf %55 : vector<8x128xf32>
    %57 = math.exp %56 : vector<8x128xf32>
    %cst_27 = arith.constant 1.000000e+00 : f32
    %58 = vector.broadcast %cst_27 : f32 to vector<8x128xf32>
    %59 = arith.addf %58, %57 : vector<8x128xf32>
    %60 = arith.divf %58, %59 : vector<8x128xf32>
    %61 = vector.extract_strided_slice %48 {offsets = [0, 256], sizes = [8, 128], strides = [1, 1]} : vector<8x512xf32> to vector<8x128xf32>
    %62 = math.tanh %61 : vector<8x128xf32>
    %63 = vector.extract_strided_slice %48 {offsets = [0, 384], sizes = [8, 128], strides = [1, 1]} : vector<8x512xf32> to vector<8x128xf32>
    %64 = arith.negf %63 : vector<8x128xf32>
    %65 = math.exp %64 : vector<8x128xf32>
    %cst_28 = arith.constant 1.000000e+00 : f32
    %66 = vector.broadcast %cst_28 : f32 to vector<8x128xf32>
    %67 = arith.addf %66, %65 : vector<8x128xf32>
    %68 = arith.divf %66, %67 : vector<8x128xf32>
    %69 = arith.mulf %60, %41 : vector<8x128xf32>
    %70 = arith.mulf %54, %62 : vector<8x128xf32>
    %71 = arith.addf %69, %70 : vector<8x128xf32>
    %72 = math.tanh %71 : vector<8x128xf32>
    %73 = arith.mulf %68, %72 : vector<8x128xf32>
    %c16 = arith.constant 16 : index
    %c0_29 = arith.constant 0 : index
    %74 = vector.load %arg10[%c16, %c0_29] : memref<64x512xf32, #tpu.memory_space<vmem>>, vector<8x512xf32>
    %75 = arith.truncf %73 : vector<8x128xf32> to vector<8x128xbf16>
    %c0_30 = arith.constant 0 : index
    %c0_31 = arith.constant 0 : index
    %76 = vector.load %arg5[%c0_30, %c0_31] : memref<128x512xbf16, #tpu.memory_space<vmem>>, vector<128x512xbf16>
    %cst_32 = arith.constant dense<0.000000e+00> : vector<8x512xf32>
    %77 = tpu.matmul %75, %76, %cst_32 {dimension_numbers = #tpu.dot_dimension_numbers<[1], [0], [0], [1], [0, 0, 1, 1], [], []>} : vector<8x128xbf16>, vector<128x512xbf16>, vector<8x512xf32> -> vector<8x512xf32>
    %78 = arith.addf %74, %77 : vector<8x512xf32>
    %79 = vector.extract_strided_slice %78 {offsets = [0, 0], sizes = [8, 128], strides = [1, 1]} : vector<8x512xf32> to vector<8x128xf32>
    %80 = arith.negf %79 : vector<8x128xf32>
    %81 = math.exp %80 : vector<8x128xf32>
    %cst_33 = arith.constant 1.000000e+00 : f32
    %82 = vector.broadcast %cst_33 : f32 to vector<8x128xf32>
    %83 = arith.addf %82, %81 : vector<8x128xf32>
    %84 = arith.divf %82, %83 : vector<8x128xf32>
    %85 = vector.extract_strided_slice %78 {offsets = [0, 128], sizes = [8, 128], strides = [1, 1]} : vector<8x512xf32> to vector<8x128xf32>
    %86 = arith.negf %85 : vector<8x128xf32>
    %87 = math.exp %86 : vector<8x128xf32>
    %cst_34 = arith.constant 1.000000e+00 : f32
    %88 = vector.broadcast %cst_34 : f32 to vector<8x128xf32>
    %89 = arith.addf %88, %87 : vector<8x128xf32>
    %90 = arith.divf %88, %89 : vector<8x128xf32>
    %91 = vector.extract_strided_slice %78 {offsets = [0, 256], sizes = [8, 128], strides = [1, 1]} : vector<8x512xf32> to vector<8x128xf32>
    %92 = math.tanh %91 : vector<8x128xf32>
    %93 = vector.extract_strided_slice %78 {offsets = [0, 384], sizes = [8, 128], strides = [1, 1]} : vector<8x512xf32> to vector<8x128xf32>
    %94 = arith.negf %93 : vector<8x128xf32>
    %95 = math.exp %94 : vector<8x128xf32>
    %cst_35 = arith.constant 1.000000e+00 : f32
    %96 = vector.broadcast %cst_35 : f32 to vector<8x128xf32>
    %97 = arith.addf %96, %95 : vector<8x128xf32>
    %98 = arith.divf %96, %97 : vector<8x128xf32>
    %99 = arith.mulf %90, %71 : vector<8x128xf32>
    %100 = arith.mulf %84, %92 : vector<8x128xf32>
    %101 = arith.addf %99, %100 : vector<8x128xf32>
    %102 = math.tanh %101 : vector<8x128xf32>
    %103 = arith.mulf %98, %102 : vector<8x128xf32>
    %c24 = arith.constant 24 : index
    %c0_36 = arith.constant 0 : index
    %104 = vector.load %arg10[%c24, %c0_36] : memref<64x512xf32, #tpu.memory_space<vmem>>, vector<8x512xf32>
    %105 = arith.truncf %103 : vector<8x128xf32> to vector<8x128xbf16>
    %c0_37 = arith.constant 0 : index
    %c0_38 = arith.constant 0 : index
    %106 = vector.load %arg5[%c0_37, %c0_38] : memref<128x512xbf16, #tpu.memory_space<vmem>>, vector<128x512xbf16>
    %cst_39 = arith.constant dense<0.000000e+00> : vector<8x512xf32>
    %107 = tpu.matmul %105, %106, %cst_39 {dimension_numbers = #tpu.dot_dimension_numbers<[1], [0], [0], [1], [0, 0, 1, 1], [], []>} : vector<8x128xbf16>, vector<128x512xbf16>, vector<8x512xf32> -> vector<8x512xf32>
    %108 = arith.addf %104, %107 : vector<8x512xf32>
    %109 = vector.extract_strided_slice %108 {offsets = [0, 0], sizes = [8, 128], strides = [1, 1]} : vector<8x512xf32> to vector<8x128xf32>
    %110 = arith.negf %109 : vector<8x128xf32>
    %111 = math.exp %110 : vector<8x128xf32>
    %cst_40 = arith.constant 1.000000e+00 : f32
    %112 = vector.broadcast %cst_40 : f32 to vector<8x128xf32>
    %113 = arith.addf %112, %111 : vector<8x128xf32>
    %114 = arith.divf %112, %113 : vector<8x128xf32>
    %115 = vector.extract_strided_slice %108 {offsets = [0, 128], sizes = [8, 128], strides = [1, 1]} : vector<8x512xf32> to vector<8x128xf32>
    %116 = arith.negf %115 : vector<8x128xf32>
    %117 = math.exp %116 : vector<8x128xf32>
    %cst_41 = arith.constant 1.000000e+00 : f32
    %118 = vector.broadcast %cst_41 : f32 to vector<8x128xf32>
    %119 = arith.addf %118, %117 : vector<8x128xf32>
    %120 = arith.divf %118, %119 : vector<8x128xf32>
    %121 = vector.extract_strided_slice %108 {offsets = [0, 256], sizes = [8, 128], strides = [1, 1]} : vector<8x512xf32> to vector<8x128xf32>
    %122 = math.tanh %121 : vector<8x128xf32>
    %123 = vector.extract_strided_slice %108 {offsets = [0, 384], sizes = [8, 128], strides = [1, 1]} : vector<8x512xf32> to vector<8x128xf32>
    %124 = arith.negf %123 : vector<8x128xf32>
    %125 = math.exp %124 : vector<8x128xf32>
    %cst_42 = arith.constant 1.000000e+00 : f32
    %126 = vector.broadcast %cst_42 : f32 to vector<8x128xf32>
    %127 = arith.addf %126, %125 : vector<8x128xf32>
    %128 = arith.divf %126, %127 : vector<8x128xf32>
    %129 = arith.mulf %120, %101 : vector<8x128xf32>
    %130 = arith.mulf %114, %122 : vector<8x128xf32>
    %131 = arith.addf %129, %130 : vector<8x128xf32>
    %132 = math.tanh %131 : vector<8x128xf32>
    %133 = arith.mulf %128, %132 : vector<8x128xf32>
    %c32 = arith.constant 32 : index
    %c0_43 = arith.constant 0 : index
    %134 = vector.load %arg10[%c32, %c0_43] : memref<64x512xf32, #tpu.memory_space<vmem>>, vector<8x512xf32>
    %135 = arith.truncf %133 : vector<8x128xf32> to vector<8x128xbf16>
    %c0_44 = arith.constant 0 : index
    %c0_45 = arith.constant 0 : index
    %136 = vector.load %arg5[%c0_44, %c0_45] : memref<128x512xbf16, #tpu.memory_space<vmem>>, vector<128x512xbf16>
    %cst_46 = arith.constant dense<0.000000e+00> : vector<8x512xf32>
    %137 = tpu.matmul %135, %136, %cst_46 {dimension_numbers = #tpu.dot_dimension_numbers<[1], [0], [0], [1], [0, 0, 1, 1], [], []>} : vector<8x128xbf16>, vector<128x512xbf16>, vector<8x512xf32> -> vector<8x512xf32>
    %138 = arith.addf %134, %137 : vector<8x512xf32>
    %139 = vector.extract_strided_slice %138 {offsets = [0, 0], sizes = [8, 128], strides = [1, 1]} : vector<8x512xf32> to vector<8x128xf32>
    %140 = arith.negf %139 : vector<8x128xf32>
    %141 = math.exp %140 : vector<8x128xf32>
    %cst_47 = arith.constant 1.000000e+00 : f32
    %142 = vector.broadcast %cst_47 : f32 to vector<8x128xf32>
    %143 = arith.addf %142, %141 : vector<8x128xf32>
    %144 = arith.divf %142, %143 : vector<8x128xf32>
    %145 = vector.extract_strided_slice %138 {offsets = [0, 128], sizes = [8, 128], strides = [1, 1]} : vector<8x512xf32> to vector<8x128xf32>
    %146 = arith.negf %145 : vector<8x128xf32>
    %147 = math.exp %146 : vector<8x128xf32>
    %cst_48 = arith.constant 1.000000e+00 : f32
    %148 = vector.broadcast %cst_48 : f32 to vector<8x128xf32>
    %149 = arith.addf %148, %147 : vector<8x128xf32>
    %150 = arith.divf %148, %149 : vector<8x128xf32>
    %151 = vector.extract_strided_slice %138 {offsets = [0, 256], sizes = [8, 128], strides = [1, 1]} : vector<8x512xf32> to vector<8x128xf32>
    %152 = math.tanh %151 : vector<8x128xf32>
    %153 = vector.extract_strided_slice %138 {offsets = [0, 384], sizes = [8, 128], strides = [1, 1]} : vector<8x512xf32> to vector<8x128xf32>
    %154 = arith.negf %153 : vector<8x128xf32>
    %155 = math.exp %154 : vector<8x128xf32>
    %cst_49 = arith.constant 1.000000e+00 : f32
    %156 = vector.broadcast %cst_49 : f32 to vector<8x128xf32>
    %157 = arith.addf %156, %155 : vector<8x128xf32>
    %158 = arith.divf %156, %157 : vector<8x128xf32>
    %159 = arith.mulf %150, %131 : vector<8x128xf32>
    %160 = arith.mulf %144, %152 : vector<8x128xf32>
    %161 = arith.addf %159, %160 : vector<8x128xf32>
    %162 = math.tanh %161 : vector<8x128xf32>
    %163 = arith.mulf %158, %162 : vector<8x128xf32>
    %c40 = arith.constant 40 : index
    %c0_50 = arith.constant 0 : index
    %164 = vector.load %arg10[%c40, %c0_50] : memref<64x512xf32, #tpu.memory_space<vmem>>, vector<8x512xf32>
    %165 = arith.truncf %163 : vector<8x128xf32> to vector<8x128xbf16>
    %c0_51 = arith.constant 0 : index
    %c0_52 = arith.constant 0 : index
    %166 = vector.load %arg5[%c0_51, %c0_52] : memref<128x512xbf16, #tpu.memory_space<vmem>>, vector<128x512xbf16>
    %cst_53 = arith.constant dense<0.000000e+00> : vector<8x512xf32>
    %167 = tpu.matmul %165, %166, %cst_53 {dimension_numbers = #tpu.dot_dimension_numbers<[1], [0], [0], [1], [0, 0, 1, 1], [], []>} : vector<8x128xbf16>, vector<128x512xbf16>, vector<8x512xf32> -> vector<8x512xf32>
    %168 = arith.addf %164, %167 : vector<8x512xf32>
    %169 = vector.extract_strided_slice %168 {offsets = [0, 0], sizes = [8, 128], strides = [1, 1]} : vector<8x512xf32> to vector<8x128xf32>
    %170 = arith.negf %169 : vector<8x128xf32>
    %171 = math.exp %170 : vector<8x128xf32>
    %cst_54 = arith.constant 1.000000e+00 : f32
    %172 = vector.broadcast %cst_54 : f32 to vector<8x128xf32>
    %173 = arith.addf %172, %171 : vector<8x128xf32>
    %174 = arith.divf %172, %173 : vector<8x128xf32>
    %175 = vector.extract_strided_slice %168 {offsets = [0, 128], sizes = [8, 128], strides = [1, 1]} : vector<8x512xf32> to vector<8x128xf32>
    %176 = arith.negf %175 : vector<8x128xf32>
    %177 = math.exp %176 : vector<8x128xf32>
    %cst_55 = arith.constant 1.000000e+00 : f32
    %178 = vector.broadcast %cst_55 : f32 to vector<8x128xf32>
    %179 = arith.addf %178, %177 : vector<8x128xf32>
    %180 = arith.divf %178, %179 : vector<8x128xf32>
    %181 = vector.extract_strided_slice %168 {offsets = [0, 256], sizes = [8, 128], strides = [1, 1]} : vector<8x512xf32> to vector<8x128xf32>
    %182 = math.tanh %181 : vector<8x128xf32>
    %183 = vector.extract_strided_slice %168 {offsets = [0, 384], sizes = [8, 128], strides = [1, 1]} : vector<8x512xf32> to vector<8x128xf32>
    %184 = arith.negf %183 : vector<8x128xf32>
    %185 = math.exp %184 : vector<8x128xf32>
    %cst_56 = arith.constant 1.000000e+00 : f32
    %186 = vector.broadcast %cst_56 : f32 to vector<8x128xf32>
    %187 = arith.addf %186, %185 : vector<8x128xf32>
    %188 = arith.divf %186, %187 : vector<8x128xf32>
    %189 = arith.mulf %180, %161 : vector<8x128xf32>
    %190 = arith.mulf %174, %182 : vector<8x128xf32>
    %191 = arith.addf %189, %190 : vector<8x128xf32>
    %192 = math.tanh %191 : vector<8x128xf32>
    %193 = arith.mulf %188, %192 : vector<8x128xf32>
    %c48 = arith.constant 48 : index
    %c0_57 = arith.constant 0 : index
    %194 = vector.load %arg10[%c48, %c0_57] : memref<64x512xf32, #tpu.memory_space<vmem>>, vector<8x512xf32>
    %195 = arith.truncf %193 : vector<8x128xf32> to vector<8x128xbf16>
    %c0_58 = arith.constant 0 : index
    %c0_59 = arith.constant 0 : index
    %196 = vector.load %arg5[%c0_58, %c0_59] : memref<128x512xbf16, #tpu.memory_space<vmem>>, vector<128x512xbf16>
    %cst_60 = arith.constant dense<0.000000e+00> : vector<8x512xf32>
    %197 = tpu.matmul %195, %196, %cst_60 {dimension_numbers = #tpu.dot_dimension_numbers<[1], [0], [0], [1], [0, 0, 1, 1], [], []>} : vector<8x128xbf16>, vector<128x512xbf16>, vector<8x512xf32> -> vector<8x512xf32>
    %198 = arith.addf %194, %197 : vector<8x512xf32>
    %199 = vector.extract_strided_slice %198 {offsets = [0, 0], sizes = [8, 128], strides = [1, 1]} : vector<8x512xf32> to vector<8x128xf32>
    %200 = arith.negf %199 : vector<8x128xf32>
    %201 = math.exp %200 : vector<8x128xf32>
    %cst_61 = arith.constant 1.000000e+00 : f32
    %202 = vector.broadcast %cst_61 : f32 to vector<8x128xf32>
    %203 = arith.addf %202, %201 : vector<8x128xf32>
    %204 = arith.divf %202, %203 : vector<8x128xf32>
    %205 = vector.extract_strided_slice %198 {offsets = [0, 128], sizes = [8, 128], strides = [1, 1]} : vector<8x512xf32> to vector<8x128xf32>
    %206 = arith.negf %205 : vector<8x128xf32>
    %207 = math.exp %206 : vector<8x128xf32>
    %cst_62 = arith.constant 1.000000e+00 : f32
    %208 = vector.broadcast %cst_62 : f32 to vector<8x128xf32>
    %209 = arith.addf %208, %207 : vector<8x128xf32>
    %210 = arith.divf %208, %209 : vector<8x128xf32>
    %211 = vector.extract_strided_slice %198 {offsets = [0, 256], sizes = [8, 128], strides = [1, 1]} : vector<8x512xf32> to vector<8x128xf32>
    %212 = math.tanh %211 : vector<8x128xf32>
    %213 = vector.extract_strided_slice %198 {offsets = [0, 384], sizes = [8, 128], strides = [1, 1]} : vector<8x512xf32> to vector<8x128xf32>
    %214 = arith.negf %213 : vector<8x128xf32>
    %215 = math.exp %214 : vector<8x128xf32>
    %cst_63 = arith.constant 1.000000e+00 : f32
    %216 = vector.broadcast %cst_63 : f32 to vector<8x128xf32>
    %217 = arith.addf %216, %215 : vector<8x128xf32>
    %218 = arith.divf %216, %217 : vector<8x128xf32>
    %219 = arith.mulf %210, %191 : vector<8x128xf32>
    %220 = arith.mulf %204, %212 : vector<8x128xf32>
    %221 = arith.addf %219, %220 : vector<8x128xf32>
    %222 = math.tanh %221 : vector<8x128xf32>
    %223 = arith.mulf %218, %222 : vector<8x128xf32>
    %c56 = arith.constant 56 : index
    %c0_64 = arith.constant 0 : index
    %224 = vector.load %arg10[%c56, %c0_64] : memref<64x512xf32, #tpu.memory_space<vmem>>, vector<8x512xf32>
    %225 = arith.truncf %223 : vector<8x128xf32> to vector<8x128xbf16>
    %c0_65 = arith.constant 0 : index
    %c0_66 = arith.constant 0 : index
    %226 = vector.load %arg5[%c0_65, %c0_66] : memref<128x512xbf16, #tpu.memory_space<vmem>>, vector<128x512xbf16>
    %cst_67 = arith.constant dense<0.000000e+00> : vector<8x512xf32>
    %227 = tpu.matmul %225, %226, %cst_67 {dimension_numbers = #tpu.dot_dimension_numbers<[1], [0], [0], [1], [0, 0, 1, 1], [], []>} : vector<8x128xbf16>, vector<128x512xbf16>, vector<8x512xf32> -> vector<8x512xf32>
    %228 = arith.addf %224, %227 : vector<8x512xf32>
    %229 = vector.extract_strided_slice %228 {offsets = [0, 0], sizes = [8, 128], strides = [1, 1]} : vector<8x512xf32> to vector<8x128xf32>
    %230 = arith.negf %229 : vector<8x128xf32>
    %231 = math.exp %230 : vector<8x128xf32>
    %cst_68 = arith.constant 1.000000e+00 : f32
    %232 = vector.broadcast %cst_68 : f32 to vector<8x128xf32>
    %233 = arith.addf %232, %231 : vector<8x128xf32>
    %234 = arith.divf %232, %233 : vector<8x128xf32>
    %235 = vector.extract_strided_slice %228 {offsets = [0, 128], sizes = [8, 128], strides = [1, 1]} : vector<8x512xf32> to vector<8x128xf32>
    %236 = arith.negf %235 : vector<8x128xf32>
    %237 = math.exp %236 : vector<8x128xf32>
    %cst_69 = arith.constant 1.000000e+00 : f32
    %238 = vector.broadcast %cst_69 : f32 to vector<8x128xf32>
    %239 = arith.addf %238, %237 : vector<8x128xf32>
    %240 = arith.divf %238, %239 : vector<8x128xf32>
    %241 = vector.extract_strided_slice %228 {offsets = [0, 256], sizes = [8, 128], strides = [1, 1]} : vector<8x512xf32> to vector<8x128xf32>
    %242 = math.tanh %241 : vector<8x128xf32>
    %243 = vector.extract_strided_slice %228 {offsets = [0, 384], sizes = [8, 128], strides = [1, 1]} : vector<8x512xf32> to vector<8x128xf32>
    %244 = arith.negf %243 : vector<8x128xf32>
    %245 = math.exp %244 : vector<8x128xf32>
    %cst_70 = arith.constant 1.000000e+00 : f32
    %246 = vector.broadcast %cst_70 : f32 to vector<8x128xf32>
    %247 = arith.addf %246, %245 : vector<8x128xf32>
    %248 = arith.divf %246, %247 : vector<8x128xf32>
    %249 = arith.mulf %240, %221 : vector<8x128xf32>
    %250 = arith.mulf %234, %242 : vector<8x128xf32>
    %251 = arith.addf %249, %250 : vector<8x128xf32>
    %252 = math.tanh %251 : vector<8x128xf32>
    %253 = arith.mulf %248, %252 : vector<8x128xf32>
    %c0_71 = arith.constant 0 : index
    %c0_72 = arith.constant 0 : index
    %254 = vector.load %arg11[%c0_71, %c0_72] : memref<8x128xf32, #tpu.memory_space<vmem>>, vector<8x128xf32>
    tpu.vector_store %arg11[%c0_71, %c0_72], %253 {strides = array<i32>} : memref<8x128xf32, #tpu.memory_space<vmem>>, vector<8x128xf32>,
    %c0_73 = arith.constant 0 : index
    %c0_74 = arith.constant 0 : index
    %255 = vector.load %arg12[%c0_73, %c0_74] : memref<8x128xf32, #tpu.memory_space<vmem>>, vector<8x128xf32>
    tpu.vector_store %arg12[%c0_73, %c0_74], %251 {strides = array<i32>} : memref<8x128xf32, #tpu.memory_space<vmem>>, vector<8x128xf32>,
    %c0_i32_75 = arith.constant 0 : i32
    %256 = arith.cmpi eq, %arg1, %c0_i32_75 : i32
    %257 = arith.extui %256 : i1 to i32
    %c0_i32_76 = arith.constant 0 : i32
    %258 = arith.cmpi ne, %257, %c0_i32_76 : i32
    scf.if %258 {
      %c0_77 = arith.constant 0 : index
      %c0_78 = arith.constant 0 : index
      %259 = vector.load %arg8[%c0_77, %c0_78] : memref<8x128xf32, #tpu.memory_space<vmem>>, vector<8x128xf32>
      tpu.vector_store %arg8[%c0_77, %c0_78], %253 {strides = array<i32>} : memref<8x128xf32, #tpu.memory_space<vmem>>, vector<8x128xf32>,
      %c0_79 = arith.constant 0 : index
      %c0_80 = arith.constant 0 : index
      %260 = vector.load %arg9[%c0_79, %c0_80] : memref<8x128xf32, #tpu.memory_space<vmem>>, vector<8x128xf32>
      tpu.vector_store %arg9[%c0_79, %c0_80], %251 {strides = array<i32>} : memref<8x128xf32, #tpu.memory_space<vmem>>, vector<8x128xf32>,
    } else {
    }
    return
  }
  func.func @transform_0(%arg0: i32, %arg1: i32) -> (i32, i32, i32, i32) {
    %c0_i32 = arith.constant 0 : i32
    %c0_i32_0 = arith.constant 0 : i32
    %c0_i32_1 = arith.constant 0 : i32
    return %arg1, %arg0, %c0_i32, %c0_i32_0 : i32, i32, i32, i32
  }
  func.func @transform_1(%arg0: i32, %arg1: i32) -> (i32, i32) {
    %c0_i32 = arith.constant 0 : i32
    %c0_i32_0 = arith.constant 0 : i32
    %c0_i32_1 = arith.constant 0 : i32
    return %c0_i32, %c0_i32_0 : i32, i32
  }
  func.func @transform_2(%arg0: i32, %arg1: i32) -> (i32, i32) {
    %c0_i32 = arith.constant 0 : i32
    %c0_i32_0 = arith.constant 0 : i32
    %c0_i32_1 = arith.constant 0 : i32
    return %c0_i32, %c0_i32_0 : i32, i32
  }
  func.func @transform_3(%arg0: i32, %arg1: i32) -> (i32, i32) {
    %c0_i32 = arith.constant 0 : i32
    %c0_i32_0 = arith.constant 0 : i32
    %c0_i32_1 = arith.constant 0 : i32
    return %c0_i32, %c0_i32_0 : i32, i32
  }
  func.func @transform_4(%arg0: i32, %arg1: i32) -> (i32, i32) {
    %c0_i32 = arith.constant 0 : i32
    %c0_i32_0 = arith.constant 0 : i32
    return %arg0, %c0_i32 : i32, i32
  }
  func.func @transform_5(%arg0: i32, %arg1: i32) -> (i32, i32) {
    %c0_i32 = arith.constant 0 : i32
    %c0_i32_0 = arith.constant 0 : i32
    return %arg0, %c0_i32 : i32, i32
  }
  func.func @transform_6(%arg0: i32, %arg1: i32) -> (i32, i32) {
    %c0_i32 = arith.constant 0 : i32
    %c0_i32_0 = arith.constant 0 : i32
    return %arg0, %c0_i32 : i32, i32
  }
  func.func @transform_7(%arg0: i32, %arg1: i32) -> (i32, i32) {
    %c0_i32 = arith.constant 0 : i32
    %c0_i32_0 = arith.constant 0 : i32
    return %arg0, %c0_i32 : i32, i32
  }
}

module attributes {stable_mosaic.version = 11 : i64} {
  func.func @kernel(%arg0: i32, %arg1: i32, %arg2: memref<1x1x64x128xf32, #tpu.memory_space<vmem>>, %arg3: memref<128x512xbf16, #tpu.memory_space<vmem>>, %arg4: memref<1x512xf32, #tpu.memory_space<vmem>>, %arg5: memref<128x512xbf16, #tpu.memory_space<vmem>>, %arg6: memref<8x128xf32, #tpu.memory_space<vmem>>, %arg7: memref<8x128xf32, #tpu.memory_space<vmem>>, %arg8: memref<1x1x64x128xf32, #tpu.memory_space<vmem>>, %arg9: memref<8x128xf32, #tpu.memory_space<vmem>>, %arg10: memref<8x128xf32, #tpu.memory_space<vmem>>, %arg11: memref<64x512xf32, #tpu.memory_space<vmem>>, %arg12: memref<8x128xf32, #tpu.memory_space<vmem>>, %arg13: memref<8x128xf32, #tpu.memory_space<vmem>>) attributes {dimension_semantics = [#tpu.dimension_semantics<parallel>, #tpu.dimension_semantics<arbitrary>], iteration_bounds = array<i64: 1, 1>, scalar_prefetch = 0 : i64, scratch_operands = 3 : i64, tpu.core_type = #tpu.core_type<tc>, window_params = [{transform_indices = @transform_0, window_bounds = array<i64: 1, 1, 64, 128>}, {pipeline_mode = #tpu.pipeline_mode<synchronous>, transform_indices = @transform_1, window_bounds = array<i64: 128, 512>}, {pipeline_mode = #tpu.pipeline_mode<synchronous>, transform_indices = @transform_2, window_bounds = array<i64: 1, 512>}, {pipeline_mode = #tpu.pipeline_mode<synchronous>, transform_indices = @transform_3, window_bounds = array<i64: 128, 512>}, {transform_indices = @transform_4, window_bounds = array<i64: 8, 128>}, {transform_indices = @transform_5, window_bounds = array<i64: 8, 128>}, {transform_indices = @transform_6, window_bounds = array<i64: 1, 1, 64, 128>}, {transform_indices = @transform_7, window_bounds = array<i64: 8, 128>}, {transform_indices = @transform_8, window_bounds = array<i64: 8, 128>}]} {
    %c0_i32 = arith.constant 0 : i32
    %0 = arith.cmpi eq, %arg1, %c0_i32 : i32
    %1 = arith.extui %0 : i1 to i32
    %c0_i32_0 = arith.constant 0 : i32
    %2 = arith.cmpi ne, %1, %c0_i32_0 : i32
    scf.if %2 {
      %c0_109 = arith.constant 0 : index
      %c0_110 = arith.constant 0 : index
      %283 = vector.load %arg6[%c0_109, %c0_110] : memref<8x128xf32, #tpu.memory_space<vmem>>, vector<8x128xf32>
      %c0_111 = arith.constant 0 : index
      %c0_112 = arith.constant 0 : index
      %284 = vector.load %arg12[%c0_111, %c0_112] : memref<8x128xf32, #tpu.memory_space<vmem>>, vector<8x128xf32>
      tpu.vector_store %arg12[%c0_111, %c0_112], %283 {strides = array<i32>} : memref<8x128xf32, #tpu.memory_space<vmem>>, vector<8x128xf32>,
      %c0_113 = arith.constant 0 : index
      %c0_114 = arith.constant 0 : index
      %285 = vector.load %arg7[%c0_113, %c0_114] : memref<8x128xf32, #tpu.memory_space<vmem>>, vector<8x128xf32>
      %c0_115 = arith.constant 0 : index
      %c0_116 = arith.constant 0 : index
      %286 = vector.load %arg13[%c0_115, %c0_116] : memref<8x128xf32, #tpu.memory_space<vmem>>, vector<8x128xf32>
      tpu.vector_store %arg13[%c0_115, %c0_116], %285 {strides = array<i32>} : memref<8x128xf32, #tpu.memory_space<vmem>>, vector<8x128xf32>,
    } else {
    }
    %c0 = arith.constant 0 : index
    %c0_1 = arith.constant 0 : index
    %c0_2 = arith.constant 0 : index
    %c0_3 = arith.constant 0 : index
    %3 = vector.load %arg2[%c0, %c0_1, %c0_2, %c0_3] : memref<1x1x64x128xf32, #tpu.memory_space<vmem>>, vector<1x1x64x128xf32>
    %4 = vector.shape_cast %3 : vector<1x1x64x128xf32> to vector<64x128xf32>
    %5 = arith.truncf %4 : vector<64x128xf32> to vector<64x128xbf16>
    %c0_4 = arith.constant 0 : index
    %c0_5 = arith.constant 0 : index
    %6 = vector.load %arg3[%c0_4, %c0_5] : memref<128x512xbf16, #tpu.memory_space<vmem>>, vector<128x512xbf16>
    %cst = arith.constant dense<0.000000e+00> : vector<64x512xf32>
    %7 = tpu.matmul %5, %6, %cst {dimension_numbers = #tpu.dot_dimension_numbers<[1], [0], [0], [1], [0, 0, 1, 1], [], []>} : vector<64x128xbf16>, vector<128x512xbf16>, vector<64x512xf32> -> vector<64x512xf32>
    %c0_6 = arith.constant 0 : index
    %c0_7 = arith.constant 0 : index
    %8 = vector.load %arg4[%c0_6, %c0_7] : memref<1x512xf32, #tpu.memory_space<vmem>>, vector<1x512xf32>
    %9 = vector.broadcast %8 : vector<1x512xf32> to vector<64x512xf32>
    %10 = arith.addf %7, %9 : vector<64x512xf32>
    %c0_8 = arith.constant 0 : index
    %c0_9 = arith.constant 0 : index
    %11 = vector.load %arg11[%c0_8, %c0_9] : memref<64x512xf32, #tpu.memory_space<vmem>>, vector<64x512xf32>
    tpu.vector_store %arg11[%c0_8, %c0_9], %10 {strides = array<i32>} : memref<64x512xf32, #tpu.memory_space<vmem>>, vector<64x512xf32>,
    %c0_10 = arith.constant 0 : index
    %c0_11 = arith.constant 0 : index
    %12 = vector.load %arg12[%c0_10, %c0_11] : memref<8x128xf32, #tpu.memory_space<vmem>>, vector<8x128xf32>
    %c0_12 = arith.constant 0 : index
    %c0_13 = arith.constant 0 : index
    %13 = vector.load %arg13[%c0_12, %c0_13] : memref<8x128xf32, #tpu.memory_space<vmem>>, vector<8x128xf32>
    %c0_14 = arith.constant 0 : index
    %c0_15 = arith.constant 0 : index
    %14 = vector.load %arg11[%c0_14, %c0_15] : memref<64x512xf32, #tpu.memory_space<vmem>>, vector<8x512xf32>
    %15 = arith.truncf %12 : vector<8x128xf32> to vector<8x128xbf16>
    %c0_16 = arith.constant 0 : index
    %c0_17 = arith.constant 0 : index
    %16 = vector.load %arg5[%c0_16, %c0_17] : memref<128x512xbf16, #tpu.memory_space<vmem>>, vector<128x512xbf16>
    %cst_18 = arith.constant dense<0.000000e+00> : vector<8x512xf32>
    %17 = tpu.matmul %15, %16, %cst_18 {dimension_numbers = #tpu.dot_dimension_numbers<[1], [0], [0], [1], [0, 0, 1, 1], [], []>} : vector<8x128xbf16>, vector<128x512xbf16>, vector<8x512xf32> -> vector<8x512xf32>
    %18 = arith.addf %14, %17 : vector<8x512xf32>
    %19 = vector.extract_strided_slice %18 {offsets = [0, 0], sizes = [8, 128], strides = [1, 1]} : vector<8x512xf32> to vector<8x128xf32>
    %20 = arith.negf %19 : vector<8x128xf32>
    %21 = math.exp %20 : vector<8x128xf32>
    %cst_19 = arith.constant 1.000000e+00 : f32
    %22 = vector.broadcast %cst_19 : f32 to vector<8x128xf32>
    %23 = arith.addf %22, %21 : vector<8x128xf32>
    %24 = arith.divf %22, %23 : vector<8x128xf32>
    %25 = vector.extract_strided_slice %18 {offsets = [0, 128], sizes = [8, 128], strides = [1, 1]} : vector<8x512xf32> to vector<8x128xf32>
    %26 = arith.negf %25 : vector<8x128xf32>
    %27 = math.exp %26 : vector<8x128xf32>
    %cst_20 = arith.constant 1.000000e+00 : f32
    %28 = vector.broadcast %cst_20 : f32 to vector<8x128xf32>
    %29 = arith.addf %28, %27 : vector<8x128xf32>
    %30 = arith.divf %28, %29 : vector<8x128xf32>
    %31 = vector.extract_strided_slice %18 {offsets = [0, 256], sizes = [8, 128], strides = [1, 1]} : vector<8x512xf32> to vector<8x128xf32>
    %32 = math.tanh %31 : vector<8x128xf32>
    %33 = vector.extract_strided_slice %18 {offsets = [0, 384], sizes = [8, 128], strides = [1, 1]} : vector<8x512xf32> to vector<8x128xf32>
    %34 = arith.negf %33 : vector<8x128xf32>
    %35 = math.exp %34 : vector<8x128xf32>
    %cst_21 = arith.constant 1.000000e+00 : f32
    %36 = vector.broadcast %cst_21 : f32 to vector<8x128xf32>
    %37 = arith.addf %36, %35 : vector<8x128xf32>
    %38 = arith.divf %36, %37 : vector<8x128xf32>
    %39 = arith.mulf %30, %13 : vector<8x128xf32>
    %40 = arith.mulf %24, %32 : vector<8x128xf32>
    %41 = arith.addf %39, %40 : vector<8x128xf32>
    %42 = math.tanh %41 : vector<8x128xf32>
    %43 = arith.mulf %38, %42 : vector<8x128xf32>
    %c0_22 = arith.constant 0 : index
    %c0_23 = arith.constant 0 : index
    %c0_24 = arith.constant 0 : index
    %c0_25 = arith.constant 0 : index
    %44 = vector.load %arg8[%c0_22, %c0_23, %c0_24, %c0_25] : memref<1x1x64x128xf32, #tpu.memory_space<vmem>>, vector<1x1x8x128xf32>
    %45 = vector.shape_cast %44 : vector<1x1x8x128xf32> to vector<8x128xf32>
    %46 = vector.shape_cast %43 : vector<8x128xf32> to vector<1x1x8x128xf32>
    tpu.vector_store %arg8[%c0_22, %c0_23, %c0_24, %c0_25], %46 {strides = array<i32>} : memref<1x1x64x128xf32, #tpu.memory_space<vmem>>, vector<1x1x8x128xf32>,
    %c8 = arith.constant 8 : index
    %c0_26 = arith.constant 0 : index
    %47 = vector.load %arg11[%c8, %c0_26] : memref<64x512xf32, #tpu.memory_space<vmem>>, vector<8x512xf32>
    %48 = arith.truncf %43 : vector<8x128xf32> to vector<8x128xbf16>
    %c0_27 = arith.constant 0 : index
    %c0_28 = arith.constant 0 : index
    %49 = vector.load %arg5[%c0_27, %c0_28] : memref<128x512xbf16, #tpu.memory_space<vmem>>, vector<128x512xbf16>
    %cst_29 = arith.constant dense<0.000000e+00> : vector<8x512xf32>
    %50 = tpu.matmul %48, %49, %cst_29 {dimension_numbers = #tpu.dot_dimension_numbers<[1], [0], [0], [1], [0, 0, 1, 1], [], []>} : vector<8x128xbf16>, vector<128x512xbf16>, vector<8x512xf32> -> vector<8x512xf32>
    %51 = arith.addf %47, %50 : vector<8x512xf32>
    %52 = vector.extract_strided_slice %51 {offsets = [0, 0], sizes = [8, 128], strides = [1, 1]} : vector<8x512xf32> to vector<8x128xf32>
    %53 = arith.negf %52 : vector<8x128xf32>
    %54 = math.exp %53 : vector<8x128xf32>
    %cst_30 = arith.constant 1.000000e+00 : f32
    %55 = vector.broadcast %cst_30 : f32 to vector<8x128xf32>
    %56 = arith.addf %55, %54 : vector<8x128xf32>
    %57 = arith.divf %55, %56 : vector<8x128xf32>
    %58 = vector.extract_strided_slice %51 {offsets = [0, 128], sizes = [8, 128], strides = [1, 1]} : vector<8x512xf32> to vector<8x128xf32>
    %59 = arith.negf %58 : vector<8x128xf32>
    %60 = math.exp %59 : vector<8x128xf32>
    %cst_31 = arith.constant 1.000000e+00 : f32
    %61 = vector.broadcast %cst_31 : f32 to vector<8x128xf32>
    %62 = arith.addf %61, %60 : vector<8x128xf32>
    %63 = arith.divf %61, %62 : vector<8x128xf32>
    %64 = vector.extract_strided_slice %51 {offsets = [0, 256], sizes = [8, 128], strides = [1, 1]} : vector<8x512xf32> to vector<8x128xf32>
    %65 = math.tanh %64 : vector<8x128xf32>
    %66 = vector.extract_strided_slice %51 {offsets = [0, 384], sizes = [8, 128], strides = [1, 1]} : vector<8x512xf32> to vector<8x128xf32>
    %67 = arith.negf %66 : vector<8x128xf32>
    %68 = math.exp %67 : vector<8x128xf32>
    %cst_32 = arith.constant 1.000000e+00 : f32
    %69 = vector.broadcast %cst_32 : f32 to vector<8x128xf32>
    %70 = arith.addf %69, %68 : vector<8x128xf32>
    %71 = arith.divf %69, %70 : vector<8x128xf32>
    %72 = arith.mulf %63, %41 : vector<8x128xf32>
    %73 = arith.mulf %57, %65 : vector<8x128xf32>
    %74 = arith.addf %72, %73 : vector<8x128xf32>
    %75 = math.tanh %74 : vector<8x128xf32>
    %76 = arith.mulf %71, %75 : vector<8x128xf32>
    %c0_33 = arith.constant 0 : index
    %c0_34 = arith.constant 0 : index
    %c8_35 = arith.constant 8 : index
    %c0_36 = arith.constant 0 : index
    %77 = vector.load %arg8[%c0_33, %c0_34, %c8_35, %c0_36] : memref<1x1x64x128xf32, #tpu.memory_space<vmem>>, vector<1x1x8x128xf32>
    %78 = vector.shape_cast %77 : vector<1x1x8x128xf32> to vector<8x128xf32>
    %79 = vector.shape_cast %76 : vector<8x128xf32> to vector<1x1x8x128xf32>
    tpu.vector_store %arg8[%c0_33, %c0_34, %c8_35, %c0_36], %79 {strides = array<i32>} : memref<1x1x64x128xf32, #tpu.memory_space<vmem>>, vector<1x1x8x128xf32>,
    %c16 = arith.constant 16 : index
    %c0_37 = arith.constant 0 : index
    %80 = vector.load %arg11[%c16, %c0_37] : memref<64x512xf32, #tpu.memory_space<vmem>>, vector<8x512xf32>
    %81 = arith.truncf %76 : vector<8x128xf32> to vector<8x128xbf16>
    %c0_38 = arith.constant 0 : index
    %c0_39 = arith.constant 0 : index
    %82 = vector.load %arg5[%c0_38, %c0_39] : memref<128x512xbf16, #tpu.memory_space<vmem>>, vector<128x512xbf16>
    %cst_40 = arith.constant dense<0.000000e+00> : vector<8x512xf32>
    %83 = tpu.matmul %81, %82, %cst_40 {dimension_numbers = #tpu.dot_dimension_numbers<[1], [0], [0], [1], [0, 0, 1, 1], [], []>} : vector<8x128xbf16>, vector<128x512xbf16>, vector<8x512xf32> -> vector<8x512xf32>
    %84 = arith.addf %80, %83 : vector<8x512xf32>
    %85 = vector.extract_strided_slice %84 {offsets = [0, 0], sizes = [8, 128], strides = [1, 1]} : vector<8x512xf32> to vector<8x128xf32>
    %86 = arith.negf %85 : vector<8x128xf32>
    %87 = math.exp %86 : vector<8x128xf32>
    %cst_41 = arith.constant 1.000000e+00 : f32
    %88 = vector.broadcast %cst_41 : f32 to vector<8x128xf32>
    %89 = arith.addf %88, %87 : vector<8x128xf32>
    %90 = arith.divf %88, %89 : vector<8x128xf32>
    %91 = vector.extract_strided_slice %84 {offsets = [0, 128], sizes = [8, 128], strides = [1, 1]} : vector<8x512xf32> to vector<8x128xf32>
    %92 = arith.negf %91 : vector<8x128xf32>
    %93 = math.exp %92 : vector<8x128xf32>
    %cst_42 = arith.constant 1.000000e+00 : f32
    %94 = vector.broadcast %cst_42 : f32 to vector<8x128xf32>
    %95 = arith.addf %94, %93 : vector<8x128xf32>
    %96 = arith.divf %94, %95 : vector<8x128xf32>
    %97 = vector.extract_strided_slice %84 {offsets = [0, 256], sizes = [8, 128], strides = [1, 1]} : vector<8x512xf32> to vector<8x128xf32>
    %98 = math.tanh %97 : vector<8x128xf32>
    %99 = vector.extract_strided_slice %84 {offsets = [0, 384], sizes = [8, 128], strides = [1, 1]} : vector<8x512xf32> to vector<8x128xf32>
    %100 = arith.negf %99 : vector<8x128xf32>
    %101 = math.exp %100 : vector<8x128xf32>
    %cst_43 = arith.constant 1.000000e+00 : f32
    %102 = vector.broadcast %cst_43 : f32 to vector<8x128xf32>
    %103 = arith.addf %102, %101 : vector<8x128xf32>
    %104 = arith.divf %102, %103 : vector<8x128xf32>
    %105 = arith.mulf %96, %74 : vector<8x128xf32>
    %106 = arith.mulf %90, %98 : vector<8x128xf32>
    %107 = arith.addf %105, %106 : vector<8x128xf32>
    %108 = math.tanh %107 : vector<8x128xf32>
    %109 = arith.mulf %104, %108 : vector<8x128xf32>
    %c0_44 = arith.constant 0 : index
    %c0_45 = arith.constant 0 : index
    %c16_46 = arith.constant 16 : index
    %c0_47 = arith.constant 0 : index
    %110 = vector.load %arg8[%c0_44, %c0_45, %c16_46, %c0_47] : memref<1x1x64x128xf32, #tpu.memory_space<vmem>>, vector<1x1x8x128xf32>
    %111 = vector.shape_cast %110 : vector<1x1x8x128xf32> to vector<8x128xf32>
    %112 = vector.shape_cast %109 : vector<8x128xf32> to vector<1x1x8x128xf32>
    tpu.vector_store %arg8[%c0_44, %c0_45, %c16_46, %c0_47], %112 {strides = array<i32>} : memref<1x1x64x128xf32, #tpu.memory_space<vmem>>, vector<1x1x8x128xf32>,
    %c24 = arith.constant 24 : index
    %c0_48 = arith.constant 0 : index
    %113 = vector.load %arg11[%c24, %c0_48] : memref<64x512xf32, #tpu.memory_space<vmem>>, vector<8x512xf32>
    %114 = arith.truncf %109 : vector<8x128xf32> to vector<8x128xbf16>
    %c0_49 = arith.constant 0 : index
    %c0_50 = arith.constant 0 : index
    %115 = vector.load %arg5[%c0_49, %c0_50] : memref<128x512xbf16, #tpu.memory_space<vmem>>, vector<128x512xbf16>
    %cst_51 = arith.constant dense<0.000000e+00> : vector<8x512xf32>
    %116 = tpu.matmul %114, %115, %cst_51 {dimension_numbers = #tpu.dot_dimension_numbers<[1], [0], [0], [1], [0, 0, 1, 1], [], []>} : vector<8x128xbf16>, vector<128x512xbf16>, vector<8x512xf32> -> vector<8x512xf32>
    %117 = arith.addf %113, %116 : vector<8x512xf32>
    %118 = vector.extract_strided_slice %117 {offsets = [0, 0], sizes = [8, 128], strides = [1, 1]} : vector<8x512xf32> to vector<8x128xf32>
    %119 = arith.negf %118 : vector<8x128xf32>
    %120 = math.exp %119 : vector<8x128xf32>
    %cst_52 = arith.constant 1.000000e+00 : f32
    %121 = vector.broadcast %cst_52 : f32 to vector<8x128xf32>
    %122 = arith.addf %121, %120 : vector<8x128xf32>
    %123 = arith.divf %121, %122 : vector<8x128xf32>
    %124 = vector.extract_strided_slice %117 {offsets = [0, 128], sizes = [8, 128], strides = [1, 1]} : vector<8x512xf32> to vector<8x128xf32>
    %125 = arith.negf %124 : vector<8x128xf32>
    %126 = math.exp %125 : vector<8x128xf32>
    %cst_53 = arith.constant 1.000000e+00 : f32
    %127 = vector.broadcast %cst_53 : f32 to vector<8x128xf32>
    %128 = arith.addf %127, %126 : vector<8x128xf32>
    %129 = arith.divf %127, %128 : vector<8x128xf32>
    %130 = vector.extract_strided_slice %117 {offsets = [0, 256], sizes = [8, 128], strides = [1, 1]} : vector<8x512xf32> to vector<8x128xf32>
    %131 = math.tanh %130 : vector<8x128xf32>
    %132 = vector.extract_strided_slice %117 {offsets = [0, 384], sizes = [8, 128], strides = [1, 1]} : vector<8x512xf32> to vector<8x128xf32>
    %133 = arith.negf %132 : vector<8x128xf32>
    %134 = math.exp %133 : vector<8x128xf32>
    %cst_54 = arith.constant 1.000000e+00 : f32
    %135 = vector.broadcast %cst_54 : f32 to vector<8x128xf32>
    %136 = arith.addf %135, %134 : vector<8x128xf32>
    %137 = arith.divf %135, %136 : vector<8x128xf32>
    %138 = arith.mulf %129, %107 : vector<8x128xf32>
    %139 = arith.mulf %123, %131 : vector<8x128xf32>
    %140 = arith.addf %138, %139 : vector<8x128xf32>
    %141 = math.tanh %140 : vector<8x128xf32>
    %142 = arith.mulf %137, %141 : vector<8x128xf32>
    %c0_55 = arith.constant 0 : index
    %c0_56 = arith.constant 0 : index
    %c24_57 = arith.constant 24 : index
    %c0_58 = arith.constant 0 : index
    %143 = vector.load %arg8[%c0_55, %c0_56, %c24_57, %c0_58] : memref<1x1x64x128xf32, #tpu.memory_space<vmem>>, vector<1x1x8x128xf32>
    %144 = vector.shape_cast %143 : vector<1x1x8x128xf32> to vector<8x128xf32>
    %145 = vector.shape_cast %142 : vector<8x128xf32> to vector<1x1x8x128xf32>
    tpu.vector_store %arg8[%c0_55, %c0_56, %c24_57, %c0_58], %145 {strides = array<i32>} : memref<1x1x64x128xf32, #tpu.memory_space<vmem>>, vector<1x1x8x128xf32>,
    %c32 = arith.constant 32 : index
    %c0_59 = arith.constant 0 : index
    %146 = vector.load %arg11[%c32, %c0_59] : memref<64x512xf32, #tpu.memory_space<vmem>>, vector<8x512xf32>
    %147 = arith.truncf %142 : vector<8x128xf32> to vector<8x128xbf16>
    %c0_60 = arith.constant 0 : index
    %c0_61 = arith.constant 0 : index
    %148 = vector.load %arg5[%c0_60, %c0_61] : memref<128x512xbf16, #tpu.memory_space<vmem>>, vector<128x512xbf16>
    %cst_62 = arith.constant dense<0.000000e+00> : vector<8x512xf32>
    %149 = tpu.matmul %147, %148, %cst_62 {dimension_numbers = #tpu.dot_dimension_numbers<[1], [0], [0], [1], [0, 0, 1, 1], [], []>} : vector<8x128xbf16>, vector<128x512xbf16>, vector<8x512xf32> -> vector<8x512xf32>
    %150 = arith.addf %146, %149 : vector<8x512xf32>
    %151 = vector.extract_strided_slice %150 {offsets = [0, 0], sizes = [8, 128], strides = [1, 1]} : vector<8x512xf32> to vector<8x128xf32>
    %152 = arith.negf %151 : vector<8x128xf32>
    %153 = math.exp %152 : vector<8x128xf32>
    %cst_63 = arith.constant 1.000000e+00 : f32
    %154 = vector.broadcast %cst_63 : f32 to vector<8x128xf32>
    %155 = arith.addf %154, %153 : vector<8x128xf32>
    %156 = arith.divf %154, %155 : vector<8x128xf32>
    %157 = vector.extract_strided_slice %150 {offsets = [0, 128], sizes = [8, 128], strides = [1, 1]} : vector<8x512xf32> to vector<8x128xf32>
    %158 = arith.negf %157 : vector<8x128xf32>
    %159 = math.exp %158 : vector<8x128xf32>
    %cst_64 = arith.constant 1.000000e+00 : f32
    %160 = vector.broadcast %cst_64 : f32 to vector<8x128xf32>
    %161 = arith.addf %160, %159 : vector<8x128xf32>
    %162 = arith.divf %160, %161 : vector<8x128xf32>
    %163 = vector.extract_strided_slice %150 {offsets = [0, 256], sizes = [8, 128], strides = [1, 1]} : vector<8x512xf32> to vector<8x128xf32>
    %164 = math.tanh %163 : vector<8x128xf32>
    %165 = vector.extract_strided_slice %150 {offsets = [0, 384], sizes = [8, 128], strides = [1, 1]} : vector<8x512xf32> to vector<8x128xf32>
    %166 = arith.negf %165 : vector<8x128xf32>
    %167 = math.exp %166 : vector<8x128xf32>
    %cst_65 = arith.constant 1.000000e+00 : f32
    %168 = vector.broadcast %cst_65 : f32 to vector<8x128xf32>
    %169 = arith.addf %168, %167 : vector<8x128xf32>
    %170 = arith.divf %168, %169 : vector<8x128xf32>
    %171 = arith.mulf %162, %140 : vector<8x128xf32>
    %172 = arith.mulf %156, %164 : vector<8x128xf32>
    %173 = arith.addf %171, %172 : vector<8x128xf32>
    %174 = math.tanh %173 : vector<8x128xf32>
    %175 = arith.mulf %170, %174 : vector<8x128xf32>
    %c0_66 = arith.constant 0 : index
    %c0_67 = arith.constant 0 : index
    %c32_68 = arith.constant 32 : index
    %c0_69 = arith.constant 0 : index
    %176 = vector.load %arg8[%c0_66, %c0_67, %c32_68, %c0_69] : memref<1x1x64x128xf32, #tpu.memory_space<vmem>>, vector<1x1x8x128xf32>
    %177 = vector.shape_cast %176 : vector<1x1x8x128xf32> to vector<8x128xf32>
    %178 = vector.shape_cast %175 : vector<8x128xf32> to vector<1x1x8x128xf32>
    tpu.vector_store %arg8[%c0_66, %c0_67, %c32_68, %c0_69], %178 {strides = array<i32>} : memref<1x1x64x128xf32, #tpu.memory_space<vmem>>, vector<1x1x8x128xf32>,
    %c40 = arith.constant 40 : index
    %c0_70 = arith.constant 0 : index
    %179 = vector.load %arg11[%c40, %c0_70] : memref<64x512xf32, #tpu.memory_space<vmem>>, vector<8x512xf32>
    %180 = arith.truncf %175 : vector<8x128xf32> to vector<8x128xbf16>
    %c0_71 = arith.constant 0 : index
    %c0_72 = arith.constant 0 : index
    %181 = vector.load %arg5[%c0_71, %c0_72] : memref<128x512xbf16, #tpu.memory_space<vmem>>, vector<128x512xbf16>
    %cst_73 = arith.constant dense<0.000000e+00> : vector<8x512xf32>
    %182 = tpu.matmul %180, %181, %cst_73 {dimension_numbers = #tpu.dot_dimension_numbers<[1], [0], [0], [1], [0, 0, 1, 1], [], []>} : vector<8x128xbf16>, vector<128x512xbf16>, vector<8x512xf32> -> vector<8x512xf32>
    %183 = arith.addf %179, %182 : vector<8x512xf32>
    %184 = vector.extract_strided_slice %183 {offsets = [0, 0], sizes = [8, 128], strides = [1, 1]} : vector<8x512xf32> to vector<8x128xf32>
    %185 = arith.negf %184 : vector<8x128xf32>
    %186 = math.exp %185 : vector<8x128xf32>
    %cst_74 = arith.constant 1.000000e+00 : f32
    %187 = vector.broadcast %cst_74 : f32 to vector<8x128xf32>
    %188 = arith.addf %187, %186 : vector<8x128xf32>
    %189 = arith.divf %187, %188 : vector<8x128xf32>
    %190 = vector.extract_strided_slice %183 {offsets = [0, 128], sizes = [8, 128], strides = [1, 1]} : vector<8x512xf32> to vector<8x128xf32>
    %191 = arith.negf %190 : vector<8x128xf32>
    %192 = math.exp %191 : vector<8x128xf32>
    %cst_75 = arith.constant 1.000000e+00 : f32
    %193 = vector.broadcast %cst_75 : f32 to vector<8x128xf32>
    %194 = arith.addf %193, %192 : vector<8x128xf32>
    %195 = arith.divf %193, %194 : vector<8x128xf32>
    %196 = vector.extract_strided_slice %183 {offsets = [0, 256], sizes = [8, 128], strides = [1, 1]} : vector<8x512xf32> to vector<8x128xf32>
    %197 = math.tanh %196 : vector<8x128xf32>
    %198 = vector.extract_strided_slice %183 {offsets = [0, 384], sizes = [8, 128], strides = [1, 1]} : vector<8x512xf32> to vector<8x128xf32>
    %199 = arith.negf %198 : vector<8x128xf32>
    %200 = math.exp %199 : vector<8x128xf32>
    %cst_76 = arith.constant 1.000000e+00 : f32
    %201 = vector.broadcast %cst_76 : f32 to vector<8x128xf32>
    %202 = arith.addf %201, %200 : vector<8x128xf32>
    %203 = arith.divf %201, %202 : vector<8x128xf32>
    %204 = arith.mulf %195, %173 : vector<8x128xf32>
    %205 = arith.mulf %189, %197 : vector<8x128xf32>
    %206 = arith.addf %204, %205 : vector<8x128xf32>
    %207 = math.tanh %206 : vector<8x128xf32>
    %208 = arith.mulf %203, %207 : vector<8x128xf32>
    %c0_77 = arith.constant 0 : index
    %c0_78 = arith.constant 0 : index
    %c40_79 = arith.constant 40 : index
    %c0_80 = arith.constant 0 : index
    %209 = vector.load %arg8[%c0_77, %c0_78, %c40_79, %c0_80] : memref<1x1x64x128xf32, #tpu.memory_space<vmem>>, vector<1x1x8x128xf32>
    %210 = vector.shape_cast %209 : vector<1x1x8x128xf32> to vector<8x128xf32>
    %211 = vector.shape_cast %208 : vector<8x128xf32> to vector<1x1x8x128xf32>
    tpu.vector_store %arg8[%c0_77, %c0_78, %c40_79, %c0_80], %211 {strides = array<i32>} : memref<1x1x64x128xf32, #tpu.memory_space<vmem>>, vector<1x1x8x128xf32>,
    %c48 = arith.constant 48 : index
    %c0_81 = arith.constant 0 : index
    %212 = vector.load %arg11[%c48, %c0_81] : memref<64x512xf32, #tpu.memory_space<vmem>>, vector<8x512xf32>
    %213 = arith.truncf %208 : vector<8x128xf32> to vector<8x128xbf16>
    %c0_82 = arith.constant 0 : index
    %c0_83 = arith.constant 0 : index
    %214 = vector.load %arg5[%c0_82, %c0_83] : memref<128x512xbf16, #tpu.memory_space<vmem>>, vector<128x512xbf16>
    %cst_84 = arith.constant dense<0.000000e+00> : vector<8x512xf32>
    %215 = tpu.matmul %213, %214, %cst_84 {dimension_numbers = #tpu.dot_dimension_numbers<[1], [0], [0], [1], [0, 0, 1, 1], [], []>} : vector<8x128xbf16>, vector<128x512xbf16>, vector<8x512xf32> -> vector<8x512xf32>
    %216 = arith.addf %212, %215 : vector<8x512xf32>
    %217 = vector.extract_strided_slice %216 {offsets = [0, 0], sizes = [8, 128], strides = [1, 1]} : vector<8x512xf32> to vector<8x128xf32>
    %218 = arith.negf %217 : vector<8x128xf32>
    %219 = math.exp %218 : vector<8x128xf32>
    %cst_85 = arith.constant 1.000000e+00 : f32
    %220 = vector.broadcast %cst_85 : f32 to vector<8x128xf32>
    %221 = arith.addf %220, %219 : vector<8x128xf32>
    %222 = arith.divf %220, %221 : vector<8x128xf32>
    %223 = vector.extract_strided_slice %216 {offsets = [0, 128], sizes = [8, 128], strides = [1, 1]} : vector<8x512xf32> to vector<8x128xf32>
    %224 = arith.negf %223 : vector<8x128xf32>
    %225 = math.exp %224 : vector<8x128xf32>
    %cst_86 = arith.constant 1.000000e+00 : f32
    %226 = vector.broadcast %cst_86 : f32 to vector<8x128xf32>
    %227 = arith.addf %226, %225 : vector<8x128xf32>
    %228 = arith.divf %226, %227 : vector<8x128xf32>
    %229 = vector.extract_strided_slice %216 {offsets = [0, 256], sizes = [8, 128], strides = [1, 1]} : vector<8x512xf32> to vector<8x128xf32>
    %230 = math.tanh %229 : vector<8x128xf32>
    %231 = vector.extract_strided_slice %216 {offsets = [0, 384], sizes = [8, 128], strides = [1, 1]} : vector<8x512xf32> to vector<8x128xf32>
    %232 = arith.negf %231 : vector<8x128xf32>
    %233 = math.exp %232 : vector<8x128xf32>
    %cst_87 = arith.constant 1.000000e+00 : f32
    %234 = vector.broadcast %cst_87 : f32 to vector<8x128xf32>
    %235 = arith.addf %234, %233 : vector<8x128xf32>
    %236 = arith.divf %234, %235 : vector<8x128xf32>
    %237 = arith.mulf %228, %206 : vector<8x128xf32>
    %238 = arith.mulf %222, %230 : vector<8x128xf32>
    %239 = arith.addf %237, %238 : vector<8x128xf32>
    %240 = math.tanh %239 : vector<8x128xf32>
    %241 = arith.mulf %236, %240 : vector<8x128xf32>
    %c0_88 = arith.constant 0 : index
    %c0_89 = arith.constant 0 : index
    %c48_90 = arith.constant 48 : index
    %c0_91 = arith.constant 0 : index
    %242 = vector.load %arg8[%c0_88, %c0_89, %c48_90, %c0_91] : memref<1x1x64x128xf32, #tpu.memory_space<vmem>>, vector<1x1x8x128xf32>
    %243 = vector.shape_cast %242 : vector<1x1x8x128xf32> to vector<8x128xf32>
    %244 = vector.shape_cast %241 : vector<8x128xf32> to vector<1x1x8x128xf32>
    tpu.vector_store %arg8[%c0_88, %c0_89, %c48_90, %c0_91], %244 {strides = array<i32>} : memref<1x1x64x128xf32, #tpu.memory_space<vmem>>, vector<1x1x8x128xf32>,
    %c56 = arith.constant 56 : index
    %c0_92 = arith.constant 0 : index
    %245 = vector.load %arg11[%c56, %c0_92] : memref<64x512xf32, #tpu.memory_space<vmem>>, vector<8x512xf32>
    %246 = arith.truncf %241 : vector<8x128xf32> to vector<8x128xbf16>
    %c0_93 = arith.constant 0 : index
    %c0_94 = arith.constant 0 : index
    %247 = vector.load %arg5[%c0_93, %c0_94] : memref<128x512xbf16, #tpu.memory_space<vmem>>, vector<128x512xbf16>
    %cst_95 = arith.constant dense<0.000000e+00> : vector<8x512xf32>
    %248 = tpu.matmul %246, %247, %cst_95 {dimension_numbers = #tpu.dot_dimension_numbers<[1], [0], [0], [1], [0, 0, 1, 1], [], []>} : vector<8x128xbf16>, vector<128x512xbf16>, vector<8x512xf32> -> vector<8x512xf32>
    %249 = arith.addf %245, %248 : vector<8x512xf32>
    %250 = vector.extract_strided_slice %249 {offsets = [0, 0], sizes = [8, 128], strides = [1, 1]} : vector<8x512xf32> to vector<8x128xf32>
    %251 = arith.negf %250 : vector<8x128xf32>
    %252 = math.exp %251 : vector<8x128xf32>
    %cst_96 = arith.constant 1.000000e+00 : f32
    %253 = vector.broadcast %cst_96 : f32 to vector<8x128xf32>
    %254 = arith.addf %253, %252 : vector<8x128xf32>
    %255 = arith.divf %253, %254 : vector<8x128xf32>
    %256 = vector.extract_strided_slice %249 {offsets = [0, 128], sizes = [8, 128], strides = [1, 1]} : vector<8x512xf32> to vector<8x128xf32>
    %257 = arith.negf %256 : vector<8x128xf32>
    %258 = math.exp %257 : vector<8x128xf32>
    %cst_97 = arith.constant 1.000000e+00 : f32
    %259 = vector.broadcast %cst_97 : f32 to vector<8x128xf32>
    %260 = arith.addf %259, %258 : vector<8x128xf32>
    %261 = arith.divf %259, %260 : vector<8x128xf32>
    %262 = vector.extract_strided_slice %249 {offsets = [0, 256], sizes = [8, 128], strides = [1, 1]} : vector<8x512xf32> to vector<8x128xf32>
    %263 = math.tanh %262 : vector<8x128xf32>
    %264 = vector.extract_strided_slice %249 {offsets = [0, 384], sizes = [8, 128], strides = [1, 1]} : vector<8x512xf32> to vector<8x128xf32>
    %265 = arith.negf %264 : vector<8x128xf32>
    %266 = math.exp %265 : vector<8x128xf32>
    %cst_98 = arith.constant 1.000000e+00 : f32
    %267 = vector.broadcast %cst_98 : f32 to vector<8x128xf32>
    %268 = arith.addf %267, %266 : vector<8x128xf32>
    %269 = arith.divf %267, %268 : vector<8x128xf32>
    %270 = arith.mulf %261, %239 : vector<8x128xf32>
    %271 = arith.mulf %255, %263 : vector<8x128xf32>
    %272 = arith.addf %270, %271 : vector<8x128xf32>
    %273 = math.tanh %272 : vector<8x128xf32>
    %274 = arith.mulf %269, %273 : vector<8x128xf32>
    %c0_99 = arith.constant 0 : index
    %c0_100 = arith.constant 0 : index
    %c56_101 = arith.constant 56 : index
    %c0_102 = arith.constant 0 : index
    %275 = vector.load %arg8[%c0_99, %c0_100, %c56_101, %c0_102] : memref<1x1x64x128xf32, #tpu.memory_space<vmem>>, vector<1x1x8x128xf32>
    %276 = vector.shape_cast %275 : vector<1x1x8x128xf32> to vector<8x128xf32>
    %277 = vector.shape_cast %274 : vector<8x128xf32> to vector<1x1x8x128xf32>
    tpu.vector_store %arg8[%c0_99, %c0_100, %c56_101, %c0_102], %277 {strides = array<i32>} : memref<1x1x64x128xf32, #tpu.memory_space<vmem>>, vector<1x1x8x128xf32>,
    %c0_103 = arith.constant 0 : index
    %c0_104 = arith.constant 0 : index
    %278 = vector.load %arg12[%c0_103, %c0_104] : memref<8x128xf32, #tpu.memory_space<vmem>>, vector<8x128xf32>
    tpu.vector_store %arg12[%c0_103, %c0_104], %274 {strides = array<i32>} : memref<8x128xf32, #tpu.memory_space<vmem>>, vector<8x128xf32>,
    %c0_105 = arith.constant 0 : index
    %c0_106 = arith.constant 0 : index
    %279 = vector.load %arg13[%c0_105, %c0_106] : memref<8x128xf32, #tpu.memory_space<vmem>>, vector<8x128xf32>
    tpu.vector_store %arg13[%c0_105, %c0_106], %272 {strides = array<i32>} : memref<8x128xf32, #tpu.memory_space<vmem>>, vector<8x128xf32>,
    %c0_i32_107 = arith.constant 0 : i32
    %280 = arith.cmpi eq, %arg1, %c0_i32_107 : i32
    %281 = arith.extui %280 : i1 to i32
    %c0_i32_108 = arith.constant 0 : i32
    %282 = arith.cmpi ne, %281, %c0_i32_108 : i32
    scf.if %282 {
      %c0_109 = arith.constant 0 : index
      %c0_110 = arith.constant 0 : index
      %283 = vector.load %arg9[%c0_109, %c0_110] : memref<8x128xf32, #tpu.memory_space<vmem>>, vector<8x128xf32>
      tpu.vector_store %arg9[%c0_109, %c0_110], %274 {strides = array<i32>} : memref<8x128xf32, #tpu.memory_space<vmem>>, vector<8x128xf32>,
      %c0_111 = arith.constant 0 : index
      %c0_112 = arith.constant 0 : index
      %284 = vector.load %arg10[%c0_111, %c0_112] : memref<8x128xf32, #tpu.memory_space<vmem>>, vector<8x128xf32>
      tpu.vector_store %arg10[%c0_111, %c0_112], %272 {strides = array<i32>} : memref<8x128xf32, #tpu.memory_space<vmem>>, vector<8x128xf32>,
    } else {
    }
    return
  }
  func.func @transform_0(%arg0: i32, %arg1: i32) -> (i32, i32, i32, i32) {
    %c0_i32 = arith.constant 0 : i32
    %c0_i32_0 = arith.constant 0 : i32
    %c0_i32_1 = arith.constant 0 : i32
    return %arg1, %arg0, %c0_i32, %c0_i32_0 : i32, i32, i32, i32
  }
  func.func @transform_1(%arg0: i32, %arg1: i32) -> (i32, i32) {
    %c0_i32 = arith.constant 0 : i32
    %c0_i32_0 = arith.constant 0 : i32
    %c0_i32_1 = arith.constant 0 : i32
    return %c0_i32, %c0_i32_0 : i32, i32
  }
  func.func @transform_2(%arg0: i32, %arg1: i32) -> (i32, i32) {
    %c0_i32 = arith.constant 0 : i32
    %c0_i32_0 = arith.constant 0 : i32
    %c0_i32_1 = arith.constant 0 : i32
    return %c0_i32, %c0_i32_0 : i32, i32
  }
  func.func @transform_3(%arg0: i32, %arg1: i32) -> (i32, i32) {
    %c0_i32 = arith.constant 0 : i32
    %c0_i32_0 = arith.constant 0 : i32
    %c0_i32_1 = arith.constant 0 : i32
    return %c0_i32, %c0_i32_0 : i32, i32
  }
  func.func @transform_4(%arg0: i32, %arg1: i32) -> (i32, i32) {
    %c0_i32 = arith.constant 0 : i32
    %c0_i32_0 = arith.constant 0 : i32
    return %arg0, %c0_i32 : i32, i32
  }
  func.func @transform_5(%arg0: i32, %arg1: i32) -> (i32, i32) {
    %c0_i32 = arith.constant 0 : i32
    %c0_i32_0 = arith.constant 0 : i32
    return %arg0, %c0_i32 : i32, i32
  }
  func.func @transform_6(%arg0: i32, %arg1: i32) -> (i32, i32, i32, i32) {
    %c0_i32 = arith.constant 0 : i32
    %c0_i32_0 = arith.constant 0 : i32
    %c0_i32_1 = arith.constant 0 : i32
    return %arg1, %arg0, %c0_i32, %c0_i32_0 : i32, i32, i32, i32
  }
  func.func @transform_7(%arg0: i32, %arg1: i32) -> (i32, i32) {
    %c0_i32 = arith.constant 0 : i32
    %c0_i32_0 = arith.constant 0 : i32
    return %arg0, %c0_i32 : i32, i32
  }
  func.func @transform_8(%arg0: i32, %arg1: i32) -> (i32, i32) {
    %c0_i32 = arith.constant 0 : i32
    %c0_i32_0 = arith.constant 0 : i32
    return %arg0, %c0_i32 : i32, i32
  }
}

module attributes {stable_mosaic.version = 11 : i64} {
  func.func @_pred_kernel(%arg0: i32, %arg1: memref<64x128xf32, #tpu.memory_space<vmem>>, %arg2: memref<128x128xbf16, #tpu.memory_space<vmem>>, %arg3: memref<1x128xf32, #tpu.memory_space<vmem>>, %arg4: memref<64x128xf32, #tpu.memory_space<vmem>>) attributes {dimension_semantics = [#tpu.dimension_semantics<parallel>], iteration_bounds = array<i64: 1>, scalar_prefetch = 0 : i64, scratch_operands = 0 : i64, tpu.core_type = #tpu.core_type<tc>, window_params = [{transform_indices = @transform_0, window_bounds = array<i64: 64, 128>}, {pipeline_mode = #tpu.pipeline_mode<synchronous>, transform_indices = @transform_1, window_bounds = array<i64: 128, 128>}, {pipeline_mode = #tpu.pipeline_mode<synchronous>, transform_indices = @transform_2, window_bounds = array<i64: 1, 128>}, {transform_indices = @transform_3, window_bounds = array<i64: 64, 128>}]} {
    %c0 = arith.constant 0 : index
    %c0_0 = arith.constant 0 : index
    %0 = vector.load %arg1[%c0, %c0_0] : memref<64x128xf32, #tpu.memory_space<vmem>>, vector<64x128xf32>
    %1 = arith.truncf %0 : vector<64x128xf32> to vector<64x128xbf16>
    %c0_1 = arith.constant 0 : index
    %c0_2 = arith.constant 0 : index
    %2 = vector.load %arg2[%c0_1, %c0_2] : memref<128x128xbf16, #tpu.memory_space<vmem>>, vector<128x128xbf16>
    %cst = arith.constant dense<0.000000e+00> : vector<64x128xf32>
    %3 = tpu.matmul %1, %2, %cst {dimension_numbers = #tpu.dot_dimension_numbers<[1], [0], [0], [1], [0, 0, 1, 1], [], []>} : vector<64x128xbf16>, vector<128x128xbf16>, vector<64x128xf32> -> vector<64x128xf32>
    %c0_3 = arith.constant 0 : index
    %c0_4 = arith.constant 0 : index
    %4 = vector.load %arg3[%c0_3, %c0_4] : memref<1x128xf32, #tpu.memory_space<vmem>>, vector<1x128xf32>
    %5 = vector.broadcast %4 : vector<1x128xf32> to vector<64x128xf32>
    %6 = arith.addf %3, %5 : vector<64x128xf32>
    %cst_5 = arith.constant dense<0xFF800000> : vector<64xf32>
    %7 = vector.multi_reduction <maximumf>, %6, %cst_5 [1] : vector<64x128xf32> to vector<64xf32>
    %8 = vector.shape_cast %7 : vector<64xf32> to vector<64x1xf32>
    %9 = vector.broadcast %8 : vector<64x1xf32> to vector<64x128xf32>
    %10 = arith.subf %6, %9 : vector<64x128xf32>
    %11 = math.exp %10 : vector<64x128xf32>
    %cst_6 = arith.constant dense<0.000000e+00> : vector<64xf32>
    %12 = vector.multi_reduction <add>, %11, %cst_6 [1] : vector<64x128xf32> to vector<64xf32>
    %13 = vector.shape_cast %12 : vector<64xf32> to vector<64x1xf32>
    %14 = math.log %13 : vector<64x1xf32>
    %15 = arith.addf %14, %8 : vector<64x1xf32>
    %16 = vector.broadcast %15 : vector<64x1xf32> to vector<64x128xf32>
    %17 = arith.subf %6, %16 : vector<64x128xf32>
    %c0_7 = arith.constant 0 : index
    %c0_8 = arith.constant 0 : index
    %18 = vector.load %arg4[%c0_7, %c0_8] : memref<64x128xf32, #tpu.memory_space<vmem>>, vector<64x128xf32>
    tpu.vector_store %arg4[%c0_7, %c0_8], %17 {strides = array<i32>} : memref<64x128xf32, #tpu.memory_space<vmem>>, vector<64x128xf32>,
    return
  }
  func.func @transform_0(%arg0: i32) -> (i32, i32) {
    %c0_i32 = arith.constant 0 : i32
    %c0_i32_0 = arith.constant 0 : i32
    return %arg0, %c0_i32 : i32, i32
  }
  func.func @transform_1(%arg0: i32) -> (i32, i32) {
    %c0_i32 = arith.constant 0 : i32
    %c0_i32_0 = arith.constant 0 : i32
    %c0_i32_1 = arith.constant 0 : i32
    return %c0_i32, %c0_i32_0 : i32, i32
  }
  func.func @transform_2(%arg0: i32) -> (i32, i32) {
    %c0_i32 = arith.constant 0 : i32
    %c0_i32_0 = arith.constant 0 : i32
    %c0_i32_1 = arith.constant 0 : i32
    return %c0_i32, %c0_i32_0 : i32, i32
  }
  func.func @transform_3(%arg0: i32) -> (i32, i32) {
    %c0_i32 = arith.constant 0 : i32
    %c0_i32_0 = arith.constant 0 : i32
    return %arg0, %c0_i32 : i32, i32
  }
}

</mosaic_0001>

<llo_original>
// kernel: seq2seq_forward.5
$region0: #{seq2seq_forward.5}
  #allocation0 [shape = 'u32[]', space=smem, size = 0x4, offset = 0x4, fixed_abs, tag = 'smem constant byte address 0x4 - core index']
  #allocation1 [shape = 'u32[72,128]{1,0:T(1,128)}', space=vmem, size = 0x9000, scoped, tag = 'internal scratch']
  %s0 = inlined_call_operand.vmem [shape: f32[64,128], index: 0, kind: input, shape index: {}]
  %s1 = inlined_call_operand.vmem [shape: bf16[128,128], index: 1, kind: input, shape index: {}]
  %s2 = inlined_call_operand.vmem [shape: f32[1,128], index: 2, kind: input, shape index: {}]
  %s3 = inlined_call_operand.vmem [shape: f32[64,128], index: 3, kind: output, shape index: {}]
  %s4 = sld [smem:[#allocation0]]
  $region22: #{seq2seq_forward.5} parent=0
    _
  %s6 = ssub.s32 1, %s4
  %s7 = scalar_select 0, %s6, %s4
  // Predicated region
  $region2: #{seq2seq_forward.5} parent=0 // pred_check
    _
  $region3: #{seq2seq_forward.5} parent=0 // pred_check_branch
    %9 = sbr.rel (0) target = $region5
  $region4: #{seq2seq_forward.5} parent=0 // pred_region
    _
  $region5: #{seq2seq_forward.5} parent=0 // pred_fallthru
    _
  // Predicated region
  $region6: #{seq2seq_forward.5} parent=0 // pred_check
    _
  $region7: #{seq2seq_forward.5} parent=0 // pred_check_branch
    %11 = sbr.rel (0) target = $region9
  $region8: #{seq2seq_forward.5} parent=0 // pred_region
    _
  $region9: #{seq2seq_forward.5} parent=0 // pred_fallthru
    _
  // Predicated region
  $region10: #{seq2seq_forward.5} parent=0 // pred_check
    _
  $region11: #{seq2seq_forward.5} parent=0 // pred_check_branch
    %13 = sbr.rel (0) target = $region13
  $region12: #{seq2seq_forward.5} parent=0 // pred_region
    _
  $region13: #{seq2seq_forward.5} parent=0 // pred_fallthru
    _
  %v14 = vld [vmem:[%s0] sm:$0xff]
  %v15 = vld [vmem:[%s0 + $0x8] sm:$0xff]
  %v16 = vld [vmem:[%s0 + $0x10] sm:$0xff]
  %v17 = vld [vmem:[%s0 + $0x18] sm:$0xff]
  %v18 = vld [vmem:[%s0 + $0x20] sm:$0xff]
  %v19 = vld [vmem:[%s0 + $0x28] sm:$0xff]
  %v20 = vld [vmem:[%s0 + $0x30] sm:$0xff]
  %v21 = vld [vmem:[%s0 + $0x38] sm:$0xff]
  %v22 = vpack.c.bf16 %v15, %v14
  %v23 = vpack.c.bf16 %v17, %v16
  %v24 = vpack.c.bf16 %v19, %v18
  %v25 = vpack.c.bf16 %v21, %v20
  %v26 = vld [vmem:[%s1] sm:$0xf]
  %v27 = vld [vmem:[%s1 + $0x4] sm:$0xf]
  %v28 = vld [vmem:[%s1 + $0x8] sm:$0xf]
  %v29 = vld [vmem:[%s1 + $0xc] sm:$0xf]
  %v30 = vld [vmem:[%s1 + $0x10] sm:$0xf]
  %v31 = vld [vmem:[%s1 + $0x14] sm:$0xf]
  %v32 = vld [vmem:[%s1 + $0x18] sm:$0xf]
  %v33 = vld [vmem:[%s1 + $0x1c] sm:$0xf]
  %v34 = vld [vmem:[%s1 + $0x20] sm:$0xf]
  %v35 = vld [vmem:[%s1 + $0x24] sm:$0xf]
  %v36 = vld [vmem:[%s1 + $0x28] sm:$0xf]
  %v37 = vld [vmem:[%s1 + $0x2c] sm:$0xf]
  %v38 = vld [vmem:[%s1 + $0x30] sm:$0xf]
  %v39 = vld [vmem:[%s1 + $0x34] sm:$0xf]
  %v40 = vld [vmem:[%s1 + $0x38] sm:$0xf]
  %v41 = vld [vmem:[%s1 + $0x3c] sm:$0xf]
  %v42 = vld [vmem:[%s2] sm:$0x1]
  %v44 = vperm.slane %v42, 0
  %v62 = vunpack.c.l.b16 %v26
  %v63 = vunpack.c.l.b16 %v27
  %v64 = vunpack.c.l.b16 %v28
  %v65 = vunpack.c.l.b16 %v29
  %v66 = vunpack.c.l.b16 %v30
  %v67 = vunpack.c.l.b16 %v31
  %v68 = vunpack.c.l.b16 %v32
  %v69 = vunpack.c.l.b16 %v33
  %v70 = vunpack.c.l.b16 %v34
  %v71 = vunpack.c.l.b16 %v35
  %v72 = vunpack.c.l.b16 %v36
  %v73 = vunpack.c.l.b16 %v37
  %v74 = vunpack.c.l.b16 %v38
  %v75 = vunpack.c.l.b16 %v39
  %v76 = vunpack.c.l.b16 %v40
  %v77 = vunpack.c.l.b16 %v41
  %v78 = vpack.c.b16 %v63, %v62
  %v79 = vpack.c.b16 %v65, %v64
  %v80 = vpack.c.b16 %v67, %v66
  %v81 = vpack.c.b16 %v69, %v68
  %v82 = vpack.c.b16 %v71, %v70
  %v83 = vpack.c.b16 %v73, %v72
  %v84 = vpack.c.b16 %v75, %v74
  %v85 = vpack.c.b16 %v77, %v76
  %94 = vmatpush.bf16.msra.mxu0 %v85
  %95 = vmatpush.bf16.msra.mxu0 %v84
  %96 = vmatpush.bf16.msra.mxu0 %v83
  %97 = vmatpush.bf16.msra.mxu0 %v82
  %98 = vmatpush.bf16.msra.mxu0 %v81
  %99 = vmatpush.bf16.msra.mxu0 %v80
  %100 = vmatpush.bf16.msra.mxu0 %v79
  %101 = vmatpush.bf16.msra.mxu0 %v78
  %102 = vmatmul.bf16.gmra.mxu0 %v22
  %v103 = vpop.f32.mrf.mxu0
  %v104 = vadd.f32 %v44, %v103
  %v105 = vpop.f32.mrf.mxu0
  %v106 = vadd.f32 %v44, %v105
  %107 = vmatmul.bf16.gmra.mxu0 %v23
  %v108 = vpop.f32.mrf.mxu0
  %v109 = vadd.f32 %v44, %v108
  %v110 = vpop.f32.mrf.mxu0
  %v111 = vadd.f32 %v44, %v110
  %112 = vmatmul.bf16.gmra.mxu0 %v24
  %v113 = vpop.f32.mrf.mxu0
  %v114 = vadd.f32 %v44, %v113
  %v115 = vpop.f32.mrf.mxu0
  %v116 = vadd.f32 %v44, %v115
  %117 = vmatmul.bf16.gmra.mxu0 %v25
  %v118 = vpop.f32.mrf.mxu0
  %v119 = vadd.f32 %v44, %v118
  %v120 = vpop.f32.mrf.mxu0
  %v121 = vadd.f32 %v44, %v120
  %122 = vdwg.mxu0
  %123 = vmax.xlane.f32.xlu0 %v104
  %v124 = vpop.xlane.xlu0 %123
  %125 = vmax.xlane.f32.xlu0 %v106
  %v126 = vpop.xlane.xlu0 %125
  %127 = vmax.xlane.f32.xlu0 %v109
  %v128 = vpop.xlane.xlu0 %127
  %129 = vmax.xlane.f32.xlu0 %v111
  %v130 = vpop.xlane.xlu0 %129
  %131 = vmax.xlane.f32.xlu0 %v114
  %v132 = vpop.xlane.xlu0 %131
  %133 = vmax.xlane.f32.xlu0 %v116
  %v134 = vpop.xlane.xlu0 %133
  %135 = vmax.xlane.f32.xlu0 %v119
  %v136 = vpop.xlane.xlu0 %135
  %137 = vmax.xlane.f32.xlu0 %v121
  %v138 = vpop.xlane.xlu0 %137
  %v139 = vsub.f32 %v104, %v124
  %v140 = vsub.f32 %v106, %v126
  %v141 = vsub.f32 %v109, %v128
  %v142 = vsub.f32 %v111, %v130
  %v143 = vsub.f32 %v114, %v132
  %v144 = vsub.f32 %v116, %v134
  %v145 = vsub.f32 %v119, %v136
  %v146 = vsub.f32 %v121, %v138
  %v147 = vmul.f32 %v139, 1.442695
  %v148 = vpow.pop %v147
  %v149 = vmul.f32 %v140, 1.442695
  %v150 = vpow.pop %v149
  %v151 = vmul.f32 %v141, 1.442695
  %v152 = vpow.pop %v151
  %v153 = vmul.f32 %v142, 1.442695
  %v154 = vpow.pop %v153
  %v155 = vmul.f32 %v143, 1.442695
  %v156 = vpow.pop %v155
  %v157 = vmul.f32 %v144, 1.442695
  %v158 = vpow.pop %v157
  %v159 = vmul.f32 %v145, 1.442695
  %v160 = vpow.pop %v159
  %v161 = vmul.f32 %v146, 1.442695
  %v162 = vpow.pop %v161
  %163 = vadd.xlane.f32.xlu0 %v148
  %v164 = vpop.xlane.xlu0 %163
  %165 = vadd.xlane.f32.xlu0 %v150
  %v166 = vpop.xlane.xlu0 %165
  %167 = vadd.xlane.f32.xlu0 %v152
  %v168 = vpop.xlane.xlu0 %167
  %169 = vadd.xlane.f32.xlu0 %v154
  %v170 = vpop.xlane.xlu0 %169
  %171 = vadd.xlane.f32.xlu0 %v156
  %v172 = vpop.xlane.xlu0 %171
  %173 = vadd.xlane.f32.xlu0 %v158
  %v174 = vpop.xlane.xlu0 %173
  %175 = vadd.xlane.f32.xlu0 %v160
  %v176 = vpop.xlane.xlu0 %175
  %177 = vadd.xlane.f32.xlu0 %v162
  %v178 = vpop.xlane.xlu0 %177
  %v179 = vlog2.pop %v164
  %v180 = vmul.f32 %v179, 0.6931472
  %v181 = vlog2.pop %v166
  %v182 = vmul.f32 %v181, 0.6931472
  %v183 = vlog2.pop %v168
  %v184 = vmul.f32 %v183, 0.6931472
  %v185 = vlog2.pop %v170
  %v186 = vmul.f32 %v185, 0.6931472
  %v187 = vlog2.pop %v172
  %v188 = vmul.f32 %v187, 0.6931472
  %v189 = vlog2.pop %v174
  %v190 = vmul.f32 %v189, 0.6931472
  %v191 = vlog2.pop %v176
  %v192 = vmul.f32 %v191, 0.6931472
  %v193 = vlog2.pop %v178
  %v194 = vmul.f32 %v193, 0.6931472
  %v195 = vadd.f32 %v180, %v124
  %v196 = vadd.f32 %v182, %v126
  %v197 = vadd.f32 %v184, %v128
  %v198 = vadd.f32 %v186, %v130
  %v199 = vadd.f32 %v188, %v132
  %v200 = vadd.f32 %v190, %v134
  %v201 = vadd.f32 %v192, %v136
  %v202 = vadd.f32 %v194, %v138
  %v203 = vsub.f32 %v104, %v195
  %v204 = vsub.f32 %v106, %v196
  %v205 = vsub.f32 %v109, %v197
  %v206 = vsub.f32 %v111, %v198
  %v207 = vsub.f32 %v114, %v199
  %v208 = vsub.f32 %v116, %v200
  %v209 = vsub.f32 %v119, %v201
  %v210 = vsub.f32 %v121, %v202
  %211 = vst [vmem:[%s3] sm:$0xff] %v203
  %212 = vst [vmem:[%s3 + $0x8] sm:$0xff] %v204
  %213 = vst [vmem:[%s3 + $0x10] sm:$0xff] %v205
  %214 = vst [vmem:[%s3 + $0x18] sm:$0xff] %v206
  %215 = vst [vmem:[%s3 + $0x20] sm:$0xff] %v207
  %216 = vst [vmem:[%s3 + $0x28] sm:$0xff] %v208
  %217 = vst [vmem:[%s3 + $0x30] sm:$0xff] %v209
  %218 = vst [vmem:[%s3 + $0x38] sm:$0xff] %v210
  // Predicated region
  $region14: #{seq2seq_forward.5} parent=0 // pred_check
    _
  $region15: #{seq2seq_forward.5} parent=0 // pred_check_branch
    %220 = sbr.rel (0) target = $region17
  $region16: #{seq2seq_forward.5} parent=0 // pred_region
    _
  $region17: #{seq2seq_forward.5} parent=0 // pred_fallthru
    _
  // Predicated region
  $region18: #{seq2seq_forward.5} parent=0 // pred_check
    _
  $region19: #{seq2seq_forward.5} parent=0 // pred_check_branch
    %222 = sbr.rel (0) target = $region21
  $region20: #{seq2seq_forward.5} parent=0 // pred_region
    _
  $region21: #{seq2seq_forward.5} parent=0 // pred_fallthru
    _

// kernel: seq2seq_forward.3
$region0: #{seq2seq_forward.3}
  #allocation0 [shape = 'u32[]', space=smem, size = 0x4, offset = 0x4, fixed_abs, tag = 'smem constant byte address 0x4 - core index']
  #allocation1 [shape = 'u32[72,128]{1,0:T(1,128)}', space=vmem, size = 0x9000, scoped, tag = 'internal scratch']
  #allocation2 [shape = 'f32[64,512]{1,0:T(8,128)}', space=vmem, size = 0x20000, scoped, tag = 'scratch operand']
  #allocation3 [shape = 'f32[8,128]{1,0:T(8,128)}', space=vmem, size = 0x1000, scoped, tag = 'scratch operand']
  #allocation4 [shape = 'f32[8,128]{1,0:T(8,128)}', space=vmem, size = 0x1000, scoped, tag = 'scratch operand']
  %s0 = inlined_call_operand.vmem [shape: f32[1,1,64,128], index: 0, kind: input, shape index: {}]
  %s1 = inlined_call_operand.vmem [shape: bf16[128,512], index: 1, kind: input, shape index: {}]
  %s2 = inlined_call_operand.vmem [shape: f32[1,512], index: 2, kind: input, shape index: {}]
  %s3 = inlined_call_operand.vmem [shape: bf16[128,512], index: 3, kind: input, shape index: {}]
  %s4 = inlined_call_operand.vmem [shape: f32[8,128], index: 4, kind: input, shape index: {}, may-alias: {4,5}]
  %s5 = inlined_call_operand.vmem [shape: f32[8,128], index: 5, kind: input, shape index: {}, may-alias: {4,5}]
  %s6 = inlined_call_operand.vmem [shape: f32[8,128], index: 6, kind: output, shape index: {0}]
  %s7 = inlined_call_operand.vmem [shape: f32[8,128], index: 7, kind: output, shape index: {1}]
  %8 = xla_tuple %s6, %s7
  %s9 = sld [smem:[#allocation0]]
  $region50: #{seq2seq_forward.3} parent=0
    _
  %s11 = ssub.s32 1, %s9
  %s12 = scalar_select 0, %s11, %s9
  // Predicated region
  $region2: #{seq2seq_forward.3} parent=0 // pred_check
    _
  $region3: #{seq2seq_forward.3} parent=0 // pred_check_branch
    %14 = sbr.rel (0) target = $region5
  $region4: #{seq2seq_forward.3} parent=0 // pred_region
    _
  $region5: #{seq2seq_forward.3} parent=0 // pred_fallthru
    _
  // Predicated region
  $region6: #{seq2seq_forward.3} parent=0 // pred_check
    _
  $region7: #{seq2seq_forward.3} parent=0 // pred_check_branch
    %16 = sbr.rel (0) target = $region9
  $region8: #{seq2seq_forward.3} parent=0 // pred_region
    _
  $region9: #{seq2seq_forward.3} parent=0 // pred_fallthru
    _
  // Predicated region
  $region10: #{seq2seq_forward.3} parent=0 // pred_check
    _
  $region11: #{seq2seq_forward.3} parent=0 // pred_check_branch
    %18 = sbr.rel (0) target = $region13
  $region12: #{seq2seq_forward.3} parent=0 // pred_region
    _
  $region13: #{seq2seq_forward.3} parent=0 // pred_fallthru
    _
  // Predicated region
  $region14: #{seq2seq_forward.3} parent=0 // pred_check
    _
  $region15: #{seq2seq_forward.3} parent=0 // pred_check_branch
    %20 = sbr.rel (0) target = $region17
  $region16: #{seq2seq_forward.3} parent=0 // pred_region
    _
  $region17: #{seq2seq_forward.3} parent=0 // pred_fallthru
    _
  // Predicated region
  $region18: #{seq2seq_forward.3} parent=0 // pred_check
    _
  $region19: #{seq2seq_forward.3} parent=0 // pred_check_branch
    %22 = sbr.rel (0) target = $region21
  $region20: #{seq2seq_forward.3} parent=0 // pred_region
    _
  $region21: #{seq2seq_forward.3} parent=0 // pred_fallthru
    _
  // Predicated region
  $region22: #{seq2seq_forward.3} parent=0 // pred_check
    _
  $region23: #{seq2seq_forward.3} parent=0 // pred_check_branch
    %24 = sbr.rel (0) target = $region25
  $region24: #{seq2seq_forward.3} parent=0 // pred_region
    _
  $region25: #{seq2seq_forward.3} parent=0 // pred_fallthru
    _
  %p25 = scmp.eq.s32.totalorder 0, 0
  // Predicated region
  $region26: #{seq2seq_forward.3} parent=0 // pred_check
    %p26 = pneg %p25
  $region27: #{seq2seq_forward.3} parent=0 // pred_check_branch
    %28 = sbr.rel (%p26) target = $region29
  $region28: #{seq2seq_forward.3} parent=0 // pred_region
    %v29 = vld [vmem:[%s4] sm:$0xff]
    %30 = vst [vmem:[#allocation3] sm:$0xff] %v29
    %v31 = vld [vmem:[%s5] sm:$0xff]
    %32 = vst [vmem:[#allocation4] sm:$0xff] %v31
  $region29: #{seq2seq_forward.3} parent=0 // pred_fallthru
    _
  %v33 = vld [vmem:[%s0] sm:$0xff]
  %v34 = vld [vmem:[%s0 + $0x8] sm:$0xff]
  %v35 = vld [vmem:[%s0 + $0x10] sm:$0xff]
  %v36 = vld [vmem:[%s0 + $0x18] sm:$0xff]
  %v37 = vld [vmem:[%s0 + $0x20] sm:$0xff]
  %v38 = vld [vmem:[%s0 + $0x28] sm:$0xff]
  %v39 = vld [vmem:[%s0 + $0x30] sm:$0xff]
  %v40 = vld [vmem:[%s0 + $0x38] sm:$0xff]
  %v41 = vpack.c.bf16 %v34, %v33
  %v42 = vpack.c.bf16 %v36, %v35
  %v43 = vpack.c.bf16 %v38, %v37
  %v44 = vpack.c.bf16 %v40, %v39
  %v45 = vld [vmem:[%s1] sm:$0xff]
  %v46 = vld [vmem:[%s1 + $0x8] sm:$0xff]
  %v47 = vld [vmem:[%s1 + $0x10] sm:$0xff]
  %v48 = vld [vmem:[%s1 + $0x18] sm:$0xff]
  %v49 = vld [vmem:[%s1 + $0x20] sm:$0xff]
  %v50 = vld [vmem:[%s1 + $0x28] sm:$0xff]
  %v51 = vld [vmem:[%s1 + $0x30] sm:$0xff]
  %v52 = vld [vmem:[%s1 + $0x38] sm:$0xff]
  %v53 = vld [vmem:[%s1 + $0x40] sm:$0xff]
  %v54 = vld [vmem:[%s1 + $0x48] sm:$0xff]
  %v55 = vld [vmem:[%s1 + $0x50] sm:$0xff]
  %v56 = vld [vmem:[%s1 + $0x58] sm:$0xff]
  %v57 = vld [vmem:[%s1 + $0x60] sm:$0xff]
  %v58 = vld [vmem:[%s1 + $0x68] sm:$0xff]
  %v59 = vld [vmem:[%s1 + $0x70] sm:$0xff]
  %v60 = vld [vmem:[%s1 + $0x78] sm:$0xff]
  %v61 = vld [vmem:[%s1 + $0x80] sm:$0xff]
  %v62 = vld [vmem:[%s1 + $0x88] sm:$0xff]
  %v63 = vld [vmem:[%s1 + $0x90] sm:$0xff]
  %v64 = vld [vmem:[%s1 + $0x98] sm:$0xff]
  %v65 = vld [vmem:[%s1 + $0xa0] sm:$0xff]
  %v66 = vld [vmem:[%s1 + $0xa8] sm:$0xff]
  %v67 = vld [vmem:[%s1 + $0xb0] sm:$0xff]
  %v68 = vld [vmem:[%s1 + $0xb8] sm:$0xff]
  %v69 = vld [vmem:[%s1 + $0xc0] sm:$0xff]
  %v70 = vld [vmem:[%s1 + $0xc8] sm:$0xff]
  %v71 = vld [vmem:[%s1 + $0xd0] sm:$0xff]
  %v72 = vld [vmem:[%s1 + $0xd8] sm:$0xff]
  %v73 = vld [vmem:[%s1 + $0xe0] sm:$0xff]
  %v74 = vld [vmem:[%s1 + $0xe8] sm:$0xff]
  %v75 = vld [vmem:[%s1 + $0xf0] sm:$0xff]
  %v76 = vld [vmem:[%s1 + $0xf8] sm:$0xff]
  %v77 = vld [vmem:[%s2] sm:$0xf]
  %v79 = vperm.slane %v77, 0
  %v80 = vperm.slane %v77, 1
  %v81 = vperm.slane %v77, 2
  %v82 = vperm.slane %v77, 3
  %v119 = vunpack.c.l.b16 %v45
  %v120 = vunpack.c.h.b16 %v45
  %v121 = vunpack.c.l.b16 %v46
  %v122 = vunpack.c.h.b16 %v46
  %v123 = vunpack.c.l.b16 %v47
  %v124 = vunpack.c.h.b16 %v47
  %v125 = vunpack.c.l.b16 %v48
  %v126 = vunpack.c.h.b16 %v48
  %v127 = vunpack.c.l.b16 %v49
  %v128 = vunpack.c.h.b16 %v49
  %v129 = vunpack.c.l.b16 %v50
  %v130 = vunpack.c.h.b16 %v50
  %v131 = vunpack.c.l.b16 %v51
  %v132 = vunpack.c.h.b16 %v51
  %v133 = vunpack.c.l.b16 %v52
  %v134 = vunpack.c.h.b16 %v52
  %v135 = vunpack.c.l.b16 %v53
  %v136 = vunpack.c.h.b16 %v53
  %v137 = vunpack.c.l.b16 %v54
  %v138 = vunpack.c.h.b16 %v54
  %v139 = vunpack.c.l.b16 %v55
  %v140 = vunpack.c.h.b16 %v55
  %v141 = vunpack.c.l.b16 %v56
  %v142 = vunpack.c.h.b16 %v56
  %v143 = vunpack.c.l.b16 %v57
  %v144 = vunpack.c.h.b16 %v57
  %v145 = vunpack.c.l.b16 %v58
  %v146 = vunpack.c.h.b16 %v58
  %v147 = vunpack.c.l.b16 %v59
  %v148 = vunpack.c.h.b16 %v59
  %v149 = vunpack.c.l.b16 %v60
  %v150 = vunpack.c.h.b16 %v60
  %v151 = vunpack.c.l.b16 %v61
  %v152 = vunpack.c.h.b16 %v61
  %v153 = vunpack.c.l.b16 %v62
  %v154 = vunpack.c.h.b16 %v62
  %v155 = vunpack.c.l.b16 %v63
  %v156 = vunpack.c.h.b16 %v63
  %v157 = vunpack.c.l.b16 %v64
  %v158 = vunpack.c.h.b16 %v64
  %v159 = vunpack.c.l.b16 %v65
  %v160 = vunpack.c.h.b16 %v65
  %v161 = vunpack.c.l.b16 %v66
  %v162 = vunpack.c.h.b16 %v66
  %v163 = vunpack.c.l.b16 %v67
  %v164 = vunpack.c.h.b16 %v67
  %v165 = vunpack.c.l.b16 %v68
  %v166 = vunpack.c.h.b16 %v68
  %v167 = vunpack.c.l.b16 %v69
  %v168 = vunpack.c.h.b16 %v69
  %v169 = vunpack.c.l.b16 %v70
  %v170 = vunpack.c.h.b16 %v70
  %v171 = vunpack.c.l.b16 %v71
  %v172 = vunpack.c.h.b16 %v71
  %v173 = vunpack.c.l.b16 %v72
  %v174 = vunpack.c.h.b16 %v72
  %v175 = vunpack.c.l.b16 %v73
  %v176 = vunpack.c.h.b16 %v73
  %v177 = vunpack.c.l.b16 %v74
  %v178 = vunpack.c.h.b16 %v74
  %v179 = vunpack.c.l.b16 %v75
  %v180 = vunpack.c.h.b16 %v75
  %v181 = vunpack.c.l.b16 %v76
  %v182 = vunpack.c.h.b16 %v76
  %v183 = vpack.c.b16 %v123, %v119
  %v184 = vpack.c.b16 %v124, %v120
  %v185 = vpack.c.b16 %v125, %v121
  %v186 = vpack.c.b16 %v126, %v122
  %v187 = vpack.c.b16 %v131, %v127
  %v188 = vpack.c.b16 %v132, %v128
  %v189 = vpack.c.b16 %v133, %v129
  %v190 = vpack.c.b16 %v134, %v130
  %v191 = vpack.c.b16 %v139, %v135
  %v192 = vpack.c.b16 %v140, %v136
  %v193 = vpack.c.b16 %v141, %v137
  %v194 = vpack.c.b16 %v142, %v138
  %v195 = vpack.c.b16 %v147, %v143
  %v196 = vpack.c.b16 %v148, %v144
  %v197 = vpack.c.b16 %v149, %v145
  %v198 = vpack.c.b16 %v150, %v146
  %v199 = vpack.c.b16 %v155, %v151
  %v200 = vpack.c.b16 %v156, %v152
  %v201 = vpack.c.b16 %v157, %v153
  %v202 = vpack.c.b16 %v158, %v154
  %v203 = vpack.c.b16 %v163, %v159
  %v204 = vpack.c.b16 %v164, %v160
  %v205 = vpack.c.b16 %v165, %v161
  %v206 = vpack.c.b16 %v166, %v162
  %v207 = vpack.c.b16 %v171, %v167
  %v208 = vpack.c.b16 %v172, %v168
  %v209 = vpack.c.b16 %v173, %v169
  %v210 = vpack.c.b16 %v174, %v170
  %v211 = vpack.c.b16 %v179, %v175
  %v212 = vpack.c.b16 %v180, %v176
  %v213 = vpack.c.b16 %v181, %v177
  %v214 = vpack.c.b16 %v182, %v178
  %247 = vmatpush.bf16.msra.mxu0 %v211
  %248 = vmatpush.bf16.msra.mxu0 %v207
  %249 = vmatpush.bf16.msra.mxu0 %v203
  %250 = vmatpush.bf16.msra.mxu0 %v199
  %251 = vmatpush.bf16.msra.mxu0 %v195
  %252 = vmatpush.bf16.msra.mxu0 %v191
  %253 = vmatpush.bf16.msra.mxu0 %v187
  %254 = vmatpush.bf16.msra.mxu0 %v183
  %255 = vmatmul.bf16.gmra.mxu0 %v41
  %v256 = vpop.f32.mrf.mxu0
  %v257 = vadd.f32 %v79, %v256
  %v258 = vpop.f32.mrf.mxu0
  %v259 = vadd.f32 %v79, %v258
  %260 = vmatmul.bf16.gmra.mxu0 %v42
  %v261 = vpop.f32.mrf.mxu0
  %v262 = vadd.f32 %v79, %v261
  %v263 = vpop.f32.mrf.mxu0
  %v264 = vadd.f32 %v79, %v263
  %265 = vmatmul.bf16.gmra.mxu0 %v43
  %v266 = vpop.f32.mrf.mxu0
  %v267 = vadd.f32 %v79, %v266
  %v268 = vpop.f32.mrf.mxu0
  %v269 = vadd.f32 %v79, %v268
  %270 = vmatmul.bf16.gmra.mxu0 %v44
  %v271 = vpop.f32.mrf.mxu0
  %v272 = vadd.f32 %v79, %v271
  %v273 = vpop.f32.mrf.mxu0
  %v274 = vadd.f32 %v79, %v273
  %275 = vdwg.mxu0
  %276 = vmatpush.bf16.msra.mxu0 %v212
  %277 = vmatpush.bf16.msra.mxu0 %v208
  %278 = vmatpush.bf16.msra.mxu0 %v204
  %279 = vmatpush.bf16.msra.mxu0 %v200
  %280 = vmatpush.bf16.msra.mxu0 %v196
  %281 = vmatpush.bf16.msra.mxu0 %v192
  %282 = vmatpush.bf16.msra.mxu0 %v188
  %283 = vmatpush.bf16.msra.mxu0 %v184
  %284 = vmatmul.bf16.gmra.mxu0 %v41
  %v285 = vpop.f32.mrf.mxu0
  %v286 = vadd.f32 %v80, %v285
  %v287 = vpop.f32.mrf.mxu0
  %v288 = vadd.f32 %v80, %v287
  %289 = vmatmul.bf16.gmra.mxu0 %v42
  %v290 = vpop.f32.mrf.mxu0
  %v291 = vadd.f32 %v80, %v290
  %v292 = vpop.f32.mrf.mxu0
  %v293 = vadd.f32 %v80, %v292
  %294 = vmatmul.bf16.gmra.mxu0 %v43
  %v295 = vpop.f32.mrf.mxu0
  %v296 = vadd.f32 %v80, %v295
  %v297 = vpop.f32.mrf.mxu0
  %v298 = vadd.f32 %v80, %v297
  %299 = vmatmul.bf16.gmra.mxu0 %v44
  %v300 = vpop.f32.mrf.mxu0
  %v301 = vadd.f32 %v80, %v300
  %v302 = vpop.f32.mrf.mxu0
  %v303 = vadd.f32 %v80, %v302
  %304 = vdwg.mxu0
  %305 = vmatpush.bf16.msra.mxu0 %v213
  %306 = vmatpush.bf16.msra.mxu0 %v209
  %307 = vmatpush.bf16.msra.mxu0 %v205
  %308 = vmatpush.bf16.msra.mxu0 %v201
  %309 = vmatpush.bf16.msra.mxu0 %v197
  %310 = vmatpush.bf16.msra.mxu0 %v193
  %311 = vmatpush.bf16.msra.mxu0 %v189
  %312 = vmatpush.bf16.msra.mxu0 %v185
  %313 = vmatmul.bf16.gmra.mxu0 %v41
  %v314 = vpop.f32.mrf.mxu0
  %v315 = vadd.f32 %v81, %v314
  %v316 = vpop.f32.mrf.mxu0
  %v317 = vadd.f32 %v81, %v316
  %318 = vmatmul.bf16.gmra.mxu0 %v42
  %v319 = vpop.f32.mrf.mxu0
  %v320 = vadd.f32 %v81, %v319
  %v321 = vpop.f32.mrf.mxu0
  %v322 = vadd.f32 %v81, %v321
  %323 = vmatmul.bf16.gmra.mxu0 %v43
  %v324 = vpop.f32.mrf.mxu0
  %v325 = vadd.f32 %v81, %v324
  %v326 = vpop.f32.mrf.mxu0
  %v327 = vadd.f32 %v81, %v326
  %328 = vmatmul.bf16.gmra.mxu0 %v44
  %v329 = vpop.f32.mrf.mxu0
  %v330 = vadd.f32 %v81, %v329
  %v331 = vpop.f32.mrf.mxu0
  %v332 = vadd.f32 %v81, %v331
  %333 = vdwg.mxu0
  %334 = vmatpush.bf16.msra.mxu0 %v214
  %335 = vmatpush.bf16.msra.mxu0 %v210
  %336 = vmatpush.bf16.msra.mxu0 %v206
  %337 = vmatpush.bf16.msra.mxu0 %v202
  %338 = vmatpush.bf16.msra.mxu0 %v198
  %339 = vmatpush.bf16.msra.mxu0 %v194
  %340 = vmatpush.bf16.msra.mxu0 %v190
  %341 = vmatpush.bf16.msra.mxu0 %v186
  %342 = vmatmul.bf16.gmra.mxu0 %v41
  %v343 = vpop.f32.mrf.mxu0
  %v344 = vadd.f32 %v82, %v343
  %v345 = vpop.f32.mrf.mxu0
  %v346 = vadd.f32 %v82, %v345
  %347 = vmatmul.bf16.gmra.mxu0 %v42
  %v348 = vpop.f32.mrf.mxu0
  %v349 = vadd.f32 %v82, %v348
  %v350 = vpop.f32.mrf.mxu0
  %v351 = vadd.f32 %v82, %v350
  %352 = vmatmul.bf16.gmra.mxu0 %v43
  %v353 = vpop.f32.mrf.mxu0
  %v354 = vadd.f32 %v82, %v353
  %v355 = vpop.f32.mrf.mxu0
  %v356 = vadd.f32 %v82, %v355
  %357 = vmatmul.bf16.gmra.mxu0 %v44
  %v358 = vpop.f32.mrf.mxu0
  %v359 = vadd.f32 %v82, %v358
  %v360 = vpop.f32.mrf.mxu0
  %v361 = vadd.f32 %v82, %v360
  %362 = vdwg.mxu0
  %363 = vst [vmem:[#allocation2] sm:$0xff] %v257
  %364 = vst [vmem:[#allocation2 + $0x8] sm:$0xff] %v286
  %365 = vst [vmem:[#allocation2 + $0x10] sm:$0xff] %v315
  %366 = vst [vmem:[#allocation2 + $0x18] sm:$0xff] %v344
  %367 = vst [vmem:[#allocation2 + $0x20] sm:$0xff] %v259
  %368 = vst [vmem:[#allocation2 + $0x28] sm:$0xff] %v288
  %369 = vst [vmem:[#allocation2 + $0x30] sm:$0xff] %v317
  %370 = vst [vmem:[#allocation2 + $0x38] sm:$0xff] %v346
  %371 = vst [vmem:[#allocation2 + $0x40] sm:$0xff] %v262
  %372 = vst [vmem:[#allocation2 + $0x48] sm:$0xff] %v291
  %373 = vst [vmem:[#allocation2 + $0x50] sm:$0xff] %v320
  %374 = vst [vmem:[#allocation2 + $0x58] sm:$0xff] %v349
  %375 = vst [vmem:[#allocation2 + $0x60] sm:$0xff] %v264
  %376 = vst [vmem:[#allocation2 + $0x68] sm:$0xff] %v293
  %377 = vst [vmem:[#allocation2 + $0x70] sm:$0xff] %v322
  %378 = vst [vmem:[#allocation2 + $0x78] sm:$0xff] %v351
  %379 = vst [vmem:[#allocation2 + $0x80] sm:$0xff] %v267
  %380 = vst [vmem:[#allocation2 + $0x88] sm:$0xff] %v296
  %381 = vst [vmem:[#allocation2 + $0x90] sm:$0xff] %v325
  %382 = vst [vmem:[#allocation2 + $0x98] sm:$0xff] %v354
  %383 = vst [vmem:[#allocation2 + $0xa0] sm:$0xff] %v269
  %384 = vst [vmem:[#allocation2 + $0xa8] sm:$0xff] %v298
  %385 = vst [vmem:[#allocation2 + $0xb0] sm:$0xff] %v327
  %386 = vst [vmem:[#allocation2 + $0xb8] sm:$0xff] %v356
  %387 = vst [vmem:[#allocation2 + $0xc0] sm:$0xff] %v272
  %388 = vst [vmem:[#allocation2 + $0xc8] sm:$0xff] %v301
  %389 = vst [vmem:[#allocation2 + $0xd0] sm:$0xff] %v330
  %390 = vst [vmem:[#allocation2 + $0xd8] sm:$0xff] %v359
  %391 = vst [vmem:[#allocation2 + $0xe0] sm:$0xff] %v274
  %392 = vst [vmem:[#allocation2 + $0xe8] sm:$0xff] %v303
  %393 = vst [vmem:[#allocation2 + $0xf0] sm:$0xff] %v332
  %394 = vst [vmem:[#allocation2 + $0xf8] sm:$0xff] %v361
  %v395 = vld [vmem:[#allocation3] sm:$0xff]
  %v396 = vld [vmem:[#allocation4] sm:$0xff]
  %v397 = vld [vmem:[#allocation2] sm:$0xff]
  %v398 = vld [vmem:[#allocation2 + $0x8] sm:$0xff]
  %v399 = vld [vmem:[#allocation2 + $0x10] sm:$0xff]
  %v400 = vld [vmem:[#allocation2 + $0x18] sm:$0xff]
  %v401 = vpack.c.bf16 %v395, %v395
  %v402 = vld [vmem:[%s3] sm:$0xff]
  %v403 = vld [vmem:[%s3 + $0x8] sm:$0xff]
  %v404 = vld [vmem:[%s3 + $0x10] sm:$0xff]
  %v405 = vld [vmem:[%s3 + $0x18] sm:$0xff]
  %v406 = vld [vmem:[%s3 + $0x20] sm:$0xff]
  %v407 = vld [vmem:[%s3 + $0x28] sm:$0xff]
  %v408 = vld [vmem:[%s3 + $0x30] sm:$0xff]
  %v409 = vld [vmem:[%s3 + $0x38] sm:$0xff]
  %v410 = vld [vmem:[%s3 + $0x40] sm:$0xff]
  %v411 = vld [vmem:[%s3 + $0x48] sm:$0xff]
  %v412 = vld [vmem:[%s3 + $0x50] sm:$0xff]
  %v413 = vld [vmem:[%s3 + $0x58] sm:$0xff]
  %v414 = vld [vmem:[%s3 + $0x60] sm:$0xff]
  %v415 = vld [vmem:[%s3 + $0x68] sm:$0xff]
  %v416 = vld [vmem:[%s3 + $0x70] sm:$0xff]
  %v417 = vld [vmem:[%s3 + $0x78] sm:$0xff]
  %v418 = vld [vmem:[%s3 + $0x80] sm:$0xff]
  %v419 = vld [vmem:[%s3 + $0x88] sm:$0xff]
  %v420 = vld [vmem:[%s3 + $0x90] sm:$0xff]
  %v421 = vld [vmem:[%s3 + $0x98] sm:$0xff]
  %v422 = vld [vmem:[%s3 + $0xa0] sm:$0xff]
  %v423 = vld [vmem:[%s3 + $0xa8] sm:$0xff]
  %v424 = vld [vmem:[%s3 + $0xb0] sm:$0xff]
  %v425 = vld [vmem:[%s3 + $0xb8] sm:$0xff]
  %v426 = vld [vmem:[%s3 + $0xc0] sm:$0xff]
  %v427 = vld [vmem:[%s3 + $0xc8] sm:$0xff]
  %v428 = vld [vmem:[%s3 + $0xd0] sm:$0xff]
  %v429 = vld [vmem:[%s3 + $0xd8] sm:$0xff]
  %v430 = vld [vmem:[%s3 + $0xe0] sm:$0xff]
  %v431 = vld [vmem:[%s3 + $0xe8] sm:$0xff]
  %v432 = vld [vmem:[%s3 + $0xf0] sm:$0xff]
  %v433 = vld [vmem:[%s3 + $0xf8] sm:$0xff]
  %v466 = vunpack.c.l.b16 %v402
  %v467 = vunpack.c.h.b16 %v402
  %v468 = vunpack.c.l.b16 %v403
  %v469 = vunpack.c.h.b16 %v403
  %v470 = vunpack.c.l.b16 %v404
  %v471 = vunpack.c.h.b16 %v404
  %v472 = vunpack.c.l.b16 %v405
  %v473 = vunpack.c.h.b16 %v405
  %v474 = vunpack.c.l.b16 %v406
  %v475 = vunpack.c.h.b16 %v406
  %v476 = vunpack.c.l.b16 %v407
  %v477 = vunpack.c.h.b16 %v407
  %v478 = vunpack.c.l.b16 %v408
  %v479 = vunpack.c.h.b16 %v408
  %v480 = vunpack.c.l.b16 %v409
  %v481 = vunpack.c.h.b16 %v409
  %v482 = vunpack.c.l.b16 %v410
  %v483 = vunpack.c.h.b16 %v410
  %v484 = vunpack.c.l.b16 %v411
  %v485 = vunpack.c.h.b16 %v411
  %v486 = vunpack.c.l.b16 %v412
  %v487 = vunpack.c.h.b16 %v412
  %v488 = vunpack.c.l.b16 %v413
  %v489 = vunpack.c.h.b16 %v413
  %v490 = vunpack.c.l.b16 %v414
  %v491 = vunpack.c.h.b16 %v414
  %v492 = vunpack.c.l.b16 %v415
  %v493 = vunpack.c.h.b16 %v415
  %v494 = vunpack.c.l.b16 %v416
  %v495 = vunpack.c.h.b16 %v416
  %v496 = vunpack.c.l.b16 %v417
  %v497 = vunpack.c.h.b16 %v417
  %v498 = vunpack.c.l.b16 %v418
  %v499 = vunpack.c.h.b16 %v418
  %v500 = vunpack.c.l.b16 %v419
  %v501 = vunpack.c.h.b16 %v419
  %v502 = vunpack.c.l.b16 %v420
  %v503 = vunpack.c.h.b16 %v420
  %v504 = vunpack.c.l.b16 %v421
  %v505 = vunpack.c.h.b16 %v421
  %v506 = vunpack.c.l.b16 %v422
  %v507 = vunpack.c.h.b16 %v422
  %v508 = vunpack.c.l.b16 %v423
  %v509 = vunpack.c.h.b16 %v423
  %v510 = vunpack.c.l.b16 %v424
  %v511 = vunpack.c.h.b16 %v424
  %v512 = vunpack.c.l.b16 %v425
  %v513 = vunpack.c.h.b16 %v425
  %v514 = vunpack.c.l.b16 %v426
  %v515 = vunpack.c.h.b16 %v426
  %v516 = vunpack.c.l.b16 %v427
  %v517 = vunpack.c.h.b16 %v427
  %v518 = vunpack.c.l.b16 %v428
  %v519 = vunpack.c.h.b16 %v428
  %v520 = vunpack.c.l.b16 %v429
  %v521 = vunpack.c.h.b16 %v429
  %v522 = vunpack.c.l.b16 %v430
  %v523 = vunpack.c.h.b16 %v430
  %v524 = vunpack.c.l.b16 %v431
  %v525 = vunpack.c.h.b16 %v431
  %v526 = vunpack.c.l.b16 %v432
  %v527 = vunpack.c.h.b16 %v432
  %v528 = vunpack.c.l.b16 %v433
  %v529 = vunpack.c.h.b16 %v433
  %v530 = vpack.c.b16 %v470, %v466
  %v531 = vpack.c.b16 %v471, %v467
  %v532 = vpack.c.b16 %v472, %v468
  %v533 = vpack.c.b16 %v473, %v469
  %v534 = vpack.c.b16 %v478, %v474
  %v535 = vpack.c.b16 %v479, %v475
  %v536 = vpack.c.b16 %v480, %v476
  %v537 = vpack.c.b16 %v481, %v477
  %v538 = vpack.c.b16 %v486, %v482
  %v539 = vpack.c.b16 %v487, %v483
  %v540 = vpack.c.b16 %v488, %v484
  %v541 = vpack.c.b16 %v489, %v485
  %v542 = vpack.c.b16 %v494, %v490
  %v543 = vpack.c.b16 %v495, %v491
  %v544 = vpack.c.b16 %v496, %v492
  %v545 = vpack.c.b16 %v497, %v493
  %v546 = vpack.c.b16 %v502, %v498
  %v547 = vpack.c.b16 %v503, %v499
  %v548 = vpack.c.b16 %v504, %v500
  %v549 = vpack.c.b16 %v505, %v501
  %v550 = vpack.c.b16 %v510, %v506
  %v551 = vpack.c.b16 %v511, %v507
  %v552 = vpack.c.b16 %v512, %v508
  %v553 = vpack.c.b16 %v513, %v509
  %v554 = vpack.c.b16 %v518, %v514
  %v555 = vpack.c.b16 %v519, %v515
  %v556 = vpack.c.b16 %v520, %v516
  %v557 = vpack.c.b16 %v521, %v517
  %v558 = vpack.c.b16 %v526, %v522
  %v559 = vpack.c.b16 %v527, %v523
  %v560 = vpack.c.b16 %v528, %v524
  %v561 = vpack.c.b16 %v529, %v525
  %594 = vmatpush.bf16.msra.mxu0 %v558
  %595 = vmatpush.bf16.msra.mxu0 %v554
  %596 = vmatpush.bf16.msra.mxu0 %v550
  %597 = vmatpush.bf16.msra.mxu0 %v546
  %598 = vmatpush.bf16.msra.mxu0 %v542
  %599 = vmatpush.bf16.msra.mxu0 %v538
  %600 = vmatpush.bf16.msra.mxu0 %v534
  %601 = vmatpush.bf16.msra.mxu0 %v530
  %602 = vmatmul.bf16.gmra.mxu0 %v401
  %v603 = vpop.f32.mrf.mxu0
  %v604 = vadd.f32 0.0, %v603
  %v605 = vpop.f32.mrf.mxu0
  %606 = vdwg.mxu0
  %607 = vmatpush.bf16.msra.mxu0 %v559
  %608 = vmatpush.bf16.msra.mxu0 %v555
  %609 = vmatpush.bf16.msra.mxu0 %v551
  %610 = vmatpush.bf16.msra.mxu0 %v547
  %611 = vmatpush.bf16.msra.mxu0 %v543
  %612 = vmatpush.bf16.msra.mxu0 %v539
  %613 = vmatpush.bf16.msra.mxu0 %v535
  %614 = vmatpush.bf16.msra.mxu0 %v531
  %615 = vmatmul.bf16.gmra.mxu0 %v401
  %v616 = vpop.f32.mrf.mxu0
  %v617 = vadd.f32 0.0, %v616
  %v618 = vpop.f32.mrf.mxu0
  %619 = vdwg.mxu0
  %620 = vmatpush.bf16.msra.mxu0 %v560
  %621 = vmatpush.bf16.msra.mxu0 %v556
  %622 = vmatpush.bf16.msra.mxu0 %v552
  %623 = vmatpush.bf16.msra.mxu0 %v548
  %624 = vmatpush.bf16.msra.mxu0 %v544
  %625 = vmatpush.bf16.msra.mxu0 %v540
  %626 = vmatpush.bf16.msra.mxu0 %v536
  %627 = vmatpush.bf16.msra.mxu0 %v532
  %628 = vmatmul.bf16.gmra.mxu0 %v401
  %v629 = vpop.f32.mrf.mxu0
  %v630 = vadd.f32 0.0, %v629
  %v631 = vpop.f32.mrf.mxu0
  %632 = vdwg.mxu0
  %633 = vmatpush.bf16.msra.mxu0 %v561
  %634 = vmatpush.bf16.msra.mxu0 %v557
  %635 = vmatpush.bf16.msra.mxu0 %v553
  %636 = vmatpush.bf16.msra.mxu0 %v549
  %637 = vmatpush.bf16.msra.mxu0 %v545
  %638 = vmatpush.bf16.msra.mxu0 %v541
  %639 = vmatpush.bf16.msra.mxu0 %v537
  %640 = vmatpush.bf16.msra.mxu0 %v533
  %641 = vmatmul.bf16.gmra.mxu0 %v401
  %v642 = vpop.f32.mrf.mxu0
  %v643 = vadd.f32 0.0, %v642
  %v644 = vpop.f32.mrf.mxu0
  %645 = vdwg.mxu0
  %v646 = vadd.f32 %v397, %v604
  %v647 = vadd.f32 %v398, %v617
  %v648 = vadd.f32 %v399, %v630
  %v649 = vadd.f32 %v400, %v643
  %v650 = vxor.u32 %v646, 2147483648
  %v651 = vmul.f32 %v650, 1.442695
  %v652 = vpow.pop %v651
  %v653 = vadd.f32 %v652, 1.0
  %v654 = vrcp.pop %v653
  %v655 = vmul.f32 %v653, %v654
  %v656 = vsub.f32 1.0, %v655
  %v657 = vmul.f32 %v654, %v656
  %v658 = vadd.f32 %v654, %v657
  %vm659 = vweird.f32 %v653
  %vm660 = vweird.f32 %v654
  %vm661 = vmor %vm659, %vm660
  %v662 = vsel %vm661, %v654, %v658
  %v663 = vand.u32 2147483647, %v653
  %vm664 = vcmp.eq.f32.partialorder %v663, 8.507059e+37
  %v665 = vand.u32 %v653, 2147483648
  %v666 = vor.u32 1.1754944e-38, %v665
  %v667 = vsel %vm664, %v666, %v662
  %v668 = vmul.f32 1.0, %v667
  %v669 = vxor.u32 %v647, 2147483648
  %v670 = vmul.f32 %v669, 1.442695
  %v671 = vpow.pop %v670
  %v672 = vadd.f32 %v671, 1.0
  %v673 = vrcp.pop %v672
  %v674 = vmul.f32 %v672, %v673
  %v675 = vsub.f32 1.0, %v674
  %v676 = vmul.f32 %v673, %v675
  %v677 = vadd.f32 %v673, %v676
  %vm678 = vweird.f32 %v672
  %vm679 = vweird.f32 %v673
  %vm680 = vmor %vm678, %vm679
  %v681 = vsel %vm680, %v673, %v677
  %v682 = vand.u32 2147483647, %v672
  %vm683 = vcmp.eq.f32.partialorder %v682, 8.507059e+37
  %v684 = vand.u32 %v672, 2147483648
  %v685 = vor.u32 1.1754944e-38, %v684
  %v686 = vsel %vm683, %v685, %v681
  %v687 = vmul.f32 1.0, %v686
  %v688 = vtanh.pop %v648
  %v689 = vxor.u32 %v649, 2147483648
  %v690 = vmul.f32 %v689, 1.442695
  %v691 = vpow.pop %v690
  %v692 = vadd.f32 %v691, 1.0
  %v693 = vrcp.pop %v692
  %v694 = vmul.f32 %v692, %v693
  %v695 = vsub.f32 1.0, %v694
  %v696 = vmul.f32 %v693, %v695
  %v697 = vadd.f32 %v693, %v696
  %vm698 = vweird.f32 %v692
  %vm699 = vweird.f32 %v693
  %vm700 = vmor %vm698, %vm699
  %v701 = vsel %vm700, %v693, %v697
  %v702 = vand.u32 2147483647, %v692
  %vm703 = vcmp.eq.f32.partialorder %v702, 8.507059e+37
  %v704 = vand.u32 %v692, 2147483648
  %v705 = vor.u32 1.1754944e-38, %v704
  %v706 = vsel %vm703, %v705, %v701
  %v707 = vmul.f32 1.0, %v706
  %v708 = vmul.f32 %v687, %v396
  %v709 = vmul.f32 %v668, %v688
  %v710 = vadd.f32 %v708, %v709
  %v711 = vtanh.pop %v710
  %v712 = vmul.f32 %v707, %v711
  %v713 = vld [vmem:[#allocation2 + $0x20] sm:$0xff]
  %v714 = vld [vmem:[#allocation2 + $0x28] sm:$0xff]
  %v715 = vld [vmem:[#allocation2 + $0x30] sm:$0xff]
  %v716 = vld [vmem:[#allocation2 + $0x38] sm:$0xff]
  %v717 = vpack.c.bf16 %v712, %v712
  %718 = vmatpush.bf16.msra.mxu0 %v558
  %719 = vmatpush.bf16.msra.mxu0 %v554
  %720 = vmatpush.bf16.msra.mxu0 %v550
  %721 = vmatpush.bf16.msra.mxu0 %v546
  %722 = vmatpush.bf16.msra.mxu0 %v542
  %723 = vmatpush.bf16.msra.mxu0 %v538
  %724 = vmatpush.bf16.msra.mxu0 %v534
  %725 = vmatpush.bf16.msra.mxu0 %v530
  %726 = vmatmul.bf16.gmra.mxu0 %v717
  %v727 = vpop.f32.mrf.mxu0
  %v728 = vadd.f32 0.0, %v727
  %v729 = vpop.f32.mrf.mxu0
  %730 = vdwg.mxu0
  %731 = vmatpush.bf16.msra.mxu0 %v559
  %732 = vmatpush.bf16.msra.mxu0 %v555
  %733 = vmatpush.bf16.msra.mxu0 %v551
  %734 = vmatpush.bf16.msra.mxu0 %v547
  %735 = vmatpush.bf16.msra.mxu0 %v543
  %736 = vmatpush.bf16.msra.mxu0 %v539
  %737 = vmatpush.bf16.msra.mxu0 %v535
  %738 = vmatpush.bf16.msra.mxu0 %v531
  %739 = vmatmul.bf16.gmra.mxu0 %v717
  %v740 = vpop.f32.mrf.mxu0
  %v741 = vadd.f32 0.0, %v740
  %v742 = vpop.f32.mrf.mxu0
  %743 = vdwg.mxu0
  %744 = vmatpush.bf16.msra.mxu0 %v560
  %745 = vmatpush.bf16.msra.mxu0 %v556
  %746 = vmatpush.bf16.msra.mxu0 %v552
  %747 = vmatpush.bf16.msra.mxu0 %v548
  %748 = vmatpush.bf16.msra.mxu0 %v544
  %749 = vmatpush.bf16.msra.mxu0 %v540
  %750 = vmatpush.bf16.msra.mxu0 %v536
  %751 = vmatpush.bf16.msra.mxu0 %v532
  %752 = vmatmul.bf16.gmra.mxu0 %v717
  %v753 = vpop.f32.mrf.mxu0
  %v754 = vadd.f32 0.0, %v753
  %v755 = vpop.f32.mrf.mxu0
  %756 = vdwg.mxu0
  %757 = vmatpush.bf16.msra.mxu0 %v561
  %758 = vmatpush.bf16.msra.mxu0 %v557
  %759 = vmatpush.bf16.msra.mxu0 %v553
  %760 = vmatpush.bf16.msra.mxu0 %v549
  %761 = vmatpush.bf16.msra.mxu0 %v545
  %762 = vmatpush.bf16.msra.mxu0 %v541
  %763 = vmatpush.bf16.msra.mxu0 %v537
  %764 = vmatpush.bf16.msra.mxu0 %v533
  %765 = vmatmul.bf16.gmra.mxu0 %v717
  %v766 = vpop.f32.mrf.mxu0
  %v767 = vadd.f32 0.0, %v766
  %v768 = vpop.f32.mrf.mxu0
  %769 = vdwg.mxu0
  %v770 = vadd.f32 %v713, %v728
  %v771 = vadd.f32 %v714, %v741
  %v772 = vadd.f32 %v715, %v754
  %v773 = vadd.f32 %v716, %v767
  %v774 = vxor.u32 %v770, 2147483648
  %v775 = vmul.f32 %v774, 1.442695
  %v776 = vpow.pop %v775
  %v777 = vadd.f32 %v776, 1.0
  %v778 = vrcp.pop %v777
  %v779 = vmul.f32 %v777, %v778
  %v780 = vsub.f32 1.0, %v779
  %v781 = vmul.f32 %v778, %v780
  %v782 = vadd.f32 %v778, %v781
  %vm783 = vweird.f32 %v777
  %vm784 = vweird.f32 %v778
  %vm785 = vmor %vm783, %vm784
  %v786 = vsel %vm785, %v778, %v782
  %v787 = vand.u32 2147483647, %v777
  %vm788 = vcmp.eq.f32.partialorder %v787, 8.507059e+37
  %v789 = vand.u32 %v777, 2147483648
  %v790 = vor.u32 1.1754944e-38, %v789
  %v791 = vsel %vm788, %v790, %v786
  %v792 = vmul.f32 1.0, %v791
  %v793 = vxor.u32 %v771, 2147483648
  %v794 = vmul.f32 %v793, 1.442695
  %v795 = vpow.pop %v794
  %v796 = vadd.f32 %v795, 1.0
  %v797 = vrcp.pop %v796
  %v798 = vmul.f32 %v796, %v797
  %v799 = vsub.f32 1.0, %v798
  %v800 = vmul.f32 %v797, %v799
  %v801 = vadd.f32 %v797, %v800
  %vm802 = vweird.f32 %v796
  %vm803 = vweird.f32 %v797
  %vm804 = vmor %vm802, %vm803
  %v805 = vsel %vm804, %v797, %v801
  %v806 = vand.u32 2147483647, %v796
  %vm807 = vcmp.eq.f32.partialorder %v806, 8.507059e+37
  %v808 = vand.u32 %v796, 2147483648
  %v809 = vor.u32 1.1754944e-38, %v808
  %v810 = vsel %vm807, %v809, %v805
  %v811 = vmul.f32 1.0, %v810
  %v812 = vtanh.pop %v772
  %v813 = vxor.u32 %v773, 2147483648
  %v814 = vmul.f32 %v813, 1.442695
  %v815 = vpow.pop %v814
  %v816 = vadd.f32 %v815, 1.0
  %v817 = vrcp.pop %v816
  %v818 = vmul.f32 %v816, %v817
  %v819 = vsub.f32 1.0, %v818
  %v820 = vmul.f32 %v817, %v819
  %v821 = vadd.f32 %v817, %v820
  %vm822 = vweird.f32 %v816
  %vm823 = vweird.f32 %v817
  %vm824 = vmor %vm822, %vm823
  %v825 = vsel %vm824, %v817, %v821
  %v826 = vand.u32 2147483647, %v816
  %vm827 = vcmp.eq.f32.partialorder %v826, 8.507059e+37
  %v828 = vand.u32 %v816, 2147483648
  %v829 = vor.u32 1.1754944e-38, %v828
  %v830 = vsel %vm827, %v829, %v825
  %v831 = vmul.f32 1.0, %v830
  %v832 = vmul.f32 %v811, %v710
  %v833 = vmul.f32 %v792, %v812
  %v834 = vadd.f32 %v832, %v833
  %v835 = vtanh.pop %v834
  %v836 = vmul.f32 %v831, %v835
  %v837 = vld [vmem:[#allocation2 + $0x40] sm:$0xff]
  %v838 = vld [vmem:[#allocation2 + $0x48] sm:$0xff]
  %v839 = vld [vmem:[#allocation2 + $0x50] sm:$0xff]
  %v840 = vld [vmem:[#allocation2 + $0x58] sm:$0xff]
  %v841 = vpack.c.bf16 %v836, %v836
  %842 = vmatpush.bf16.msra.mxu0 %v558
  %843 = vmatpush.bf16.msra.mxu0 %v554
  %844 = vmatpush.bf16.msra.mxu0 %v550
  %845 = vmatpush.bf16.msra.mxu0 %v546
  %846 = vmatpush.bf16.msra.mxu0 %v542
  %847 = vmatpush.bf16.msra.mxu0 %v538
  %848 = vmatpush.bf16.msra.mxu0 %v534
  %849 = vmatpush.bf16.msra.mxu0 %v530
  %850 = vmatmul.bf16.gmra.mxu0 %v841
  %v851 = vpop.f32.mrf.mxu0
  %v852 = vadd.f32 0.0, %v851
  %v853 = vpop.f32.mrf.mxu0
  %854 = vdwg.mxu0
  %855 = vmatpush.bf16.msra.mxu0 %v559
  %856 = vmatpush.bf16.msra.mxu0 %v555
  %857 = vmatpush.bf16.msra.mxu0 %v551
  %858 = vmatpush.bf16.msra.mxu0 %v547
  %859 = vmatpush.bf16.msra.mxu0 %v543
  %860 = vmatpush.bf16.msra.mxu0 %v539
  %861 = vmatpush.bf16.msra.mxu0 %v535
  %862 = vmatpush.bf16.msra.mxu0 %v531
  %863 = vmatmul.bf16.gmra.mxu0 %v841
  %v864 = vpop.f32.mrf.mxu0
  %v865 = vadd.f32 0.0, %v864
  %v866 = vpop.f32.mrf.mxu0
  %867 = vdwg.mxu0
  %868 = vmatpush.bf16.msra.mxu0 %v560
  %869 = vmatpush.bf16.msra.mxu0 %v556
  %870 = vmatpush.bf16.msra.mxu0 %v552
  %871 = vmatpush.bf16.msra.mxu0 %v548
  %872 = vmatpush.bf16.msra.mxu0 %v544
  %873 = vmatpush.bf16.msra.mxu0 %v540
  %874 = vmatpush.bf16.msra.mxu0 %v536
  %875 = vmatpush.bf16.msra.mxu0 %v532
  %876 = vmatmul.bf16.gmra.mxu0 %v841
  %v877 = vpop.f32.mrf.mxu0
  %v878 = vadd.f32 0.0, %v877
  %v879 = vpop.f32.mrf.mxu0
  %880 = vdwg.mxu0
  %881 = vmatpush.bf16.msra.mxu0 %v561
  %882 = vmatpush.bf16.msra.mxu0 %v557
  %883 = vmatpush.bf16.msra.mxu0 %v553
  %884 = vmatpush.bf16.msra.mxu0 %v549
  %885 = vmatpush.bf16.msra.mxu0 %v545
  %886 = vmatpush.bf16.msra.mxu0 %v541
  %887 = vmatpush.bf16.msra.mxu0 %v537
  %888 = vmatpush.bf16.msra.mxu0 %v533
  %889 = vmatmul.bf16.gmra.mxu0 %v841
  %v890 = vpop.f32.mrf.mxu0
  %v891 = vadd.f32 0.0, %v890
  %v892 = vpop.f32.mrf.mxu0
  %893 = vdwg.mxu0
  %v894 = vadd.f32 %v837, %v852
  %v895 = vadd.f32 %v838, %v865
  %v896 = vadd.f32 %v839, %v878
  %v897 = vadd.f32 %v840, %v891
  %v898 = vxor.u32 %v894, 2147483648
  %v899 = vmul.f32 %v898, 1.442695
  %v900 = vpow.pop %v899
  %v901 = vadd.f32 %v900, 1.0
  %v902 = vrcp.pop %v901
  %v903 = vmul.f32 %v901, %v902
  %v904 = vsub.f32 1.0, %v903
  %v905 = vmul.f32 %v902, %v904
  %v906 = vadd.f32 %v902, %v905
  %vm907 = vweird.f32 %v901
  %vm908 = vweird.f32 %v902
  %vm909 = vmor %vm907, %vm908
  %v910 = vsel %vm909, %v902, %v906
  %v911 = vand.u32 2147483647, %v901
  %vm912 = vcmp.eq.f32.partialorder %v911, 8.507059e+37
  %v913 = vand.u32 %v901, 2147483648
  %v914 = vor.u32 1.1754944e-38, %v913
  %v915 = vsel %vm912, %v914, %v910
  %v916 = vmul.f32 1.0, %v915
  %v917 = vxor.u32 %v895, 2147483648
  %v918 = vmul.f32 %v917, 1.442695
  %v919 = vpow.pop %v918
  %v920 = vadd.f32 %v919, 1.0
  %v921 = vrcp.pop %v920
  %v922 = vmul.f32 %v920, %v921
  %v923 = vsub.f32 1.0, %v922
  %v924 = vmul.f32 %v921, %v923
  %v925 = vadd.f32 %v921, %v924
  %vm926 = vweird.f32 %v920
  %vm927 = vweird.f32 %v921
  %vm928 = vmor %vm926, %vm927
  %v929 = vsel %vm928, %v921, %v925
  %v930 = vand.u32 2147483647, %v920
  %vm931 = vcmp.eq.f32.partialorder %v930, 8.507059e+37
  %v932 = vand.u32 %v920, 2147483648
  %v933 = vor.u32 1.1754944e-38, %v932
  %v934 = vsel %vm931, %v933, %v929
  %v935 = vmul.f32 1.0, %v934
  %v936 = vtanh.pop %v896
  %v937 = vxor.u32 %v897, 2147483648
  %v938 = vmul.f32 %v937, 1.442695
  %v939 = vpow.pop %v938
  %v940 = vadd.f32 %v939, 1.0
  %v941 = vrcp.pop %v940
  %v942 = vmul.f32 %v940, %v941
  %v943 = vsub.f32 1.0, %v942
  %v944 = vmul.f32 %v941, %v943
  %v945 = vadd.f32 %v941, %v944
  %vm946 = vweird.f32 %v940
  %vm947 = vweird.f32 %v941
  %vm948 = vmor %vm946, %vm947
  %v949 = vsel %vm948, %v941, %v945
  %v950 = vand.u32 2147483647, %v940
  %vm951 = vcmp.eq.f32.partialorder %v950, 8.507059e+37
  %v952 = vand.u32 %v940, 2147483648
  %v953 = vor.u32 1.1754944e-38, %v952
  %v954 = vsel %vm951, %v953, %v949
  %v955 = vmul.f32 1.0, %v954
  %v956 = vmul.f32 %v935, %v834
  %v957 = vmul.f32 %v916, %v936
  %v958 = vadd.f32 %v956, %v957
  %v959 = vtanh.pop %v958
  %v960 = vmul.f32 %v955, %v959
  %v961 = vld [vmem:[#allocation2 + $0x60] sm:$0xff]
  %v962 = vld [vmem:[#allocation2 + $0x68] sm:$0xff]
  %v963 = vld [vmem:[#allocation2 + $0x70] sm:$0xff]
  %v964 = vld [vmem:[#allocation2 + $0x78] sm:$0xff]
  %v965 = vpack.c.bf16 %v960, %v960
  %966 = vmatpush.bf16.msra.mxu0 %v558
  %967 = vmatpush.bf16.msra.mxu0 %v554
  %968 = vmatpush.bf16.msra.mxu0 %v550
  %969 = vmatpush.bf16.msra.mxu0 %v546
  %970 = vmatpush.bf16.msra.mxu0 %v542
  %971 = vmatpush.bf16.msra.mxu0 %v538
  %972 = vmatpush.bf16.msra.mxu0 %v534
  %973 = vmatpush.bf16.msra.mxu0 %v530
  %974 = vmatmul.bf16.gmra.mxu0 %v965
  %v975 = vpop.f32.mrf.mxu0
  %v976 = vadd.f32 0.0, %v975
  %v977 = vpop.f32.mrf.mxu0
  %978 = vdwg.mxu0
  %979 = vmatpush.bf16.msra.mxu0 %v559
  %980 = vmatpush.bf16.msra.mxu0 %v555
  %981 = vmatpush.bf16.msra.mxu0 %v551
  %982 = vmatpush.bf16.msra.mxu0 %v547
  %983 = vmatpush.bf16.msra.mxu0 %v543
  %984 = vmatpush.bf16.msra.mxu0 %v539
  %985 = vmatpush.bf16.msra.mxu0 %v535
  %986 = vmatpush.bf16.msra.mxu0 %v531
  %987 = vmatmul.bf16.gmra.mxu0 %v965
  %v988 = vpop.f32.mrf.mxu0
  %v989 = vadd.f32 0.0, %v988
  %v990 = vpop.f32.mrf.mxu0
  %991 = vdwg.mxu0
  %992 = vmatpush.bf16.msra.mxu0 %v560
  %993 = vmatpush.bf16.msra.mxu0 %v556
  %994 = vmatpush.bf16.msra.mxu0 %v552
  %995 = vmatpush.bf16.msra.mxu0 %v548
  %996 = vmatpush.bf16.msra.mxu0 %v544
  %997 = vmatpush.bf16.msra.mxu0 %v540
  %998 = vmatpush.bf16.msra.mxu0 %v536
  %999 = vmatpush.bf16.msra.mxu0 %v532
  %1000 = vmatmul.bf16.gmra.mxu0 %v965
  %v1001 = vpop.f32.mrf.mxu0
  %v1002 = vadd.f32 0.0, %v1001
  %v1003 = vpop.f32.mrf.mxu0
  %1004 = vdwg.mxu0
  %1005 = vmatpush.bf16.msra.mxu0 %v561
  %1006 = vmatpush.bf16.msra.mxu0 %v557
  %1007 = vmatpush.bf16.msra.mxu0 %v553
  %1008 = vmatpush.bf16.msra.mxu0 %v549
  %1009 = vmatpush.bf16.msra.mxu0 %v545
  %1010 = vmatpush.bf16.msra.mxu0 %v541
  %1011 = vmatpush.bf16.msra.mxu0 %v537
  %1012 = vmatpush.bf16.msra.mxu0 %v533
  %1013 = vmatmul.bf16.gmra.mxu0 %v965
  %v1014 = vpop.f32.mrf.mxu0
  %v1015 = vadd.f32 0.0, %v1014
  %v1016 = vpop.f32.mrf.mxu0
  %1017 = vdwg.mxu0
  %v1018 = vadd.f32 %v961, %v976
  %v1019 = vadd.f32 %v962, %v989
  %v1020 = vadd.f32 %v963, %v1002
  %v1021 = vadd.f32 %v964, %v1015
  %v1022 = vxor.u32 %v1018, 2147483648
  %v1023 = vmul.f32 %v1022, 1.442695
  %v1024 = vpow.pop %v1023
  %v1025 = vadd.f32 %v1024, 1.0
  %v1026 = vrcp.pop %v1025
  %v1027 = vmul.f32 %v1025, %v1026
  %v1028 = vsub.f32 1.0, %v1027
  %v1029 = vmul.f32 %v1026, %v1028
  %v1030 = vadd.f32 %v1026, %v1029
  %vm1031 = vweird.f32 %v1025
  %vm1032 = vweird.f32 %v1026
  %vm1033 = vmor %vm1031, %vm1032
  %v1034 = vsel %vm1033, %v1026, %v1030
  %v1035 = vand.u32 2147483647, %v1025
  %vm1036 = vcmp.eq.f32.partialorder %v1035, 8.507059e+37
  %v1037 = vand.u32 %v1025, 2147483648
  %v1038 = vor.u32 1.1754944e-38, %v1037
  %v1039 = vsel %vm1036, %v1038, %v1034
  %v1040 = vmul.f32 1.0, %v1039
  %v1041 = vxor.u32 %v1019, 2147483648
  %v1042 = vmul.f32 %v1041, 1.442695
  %v1043 = vpow.pop %v1042
  %v1044 = vadd.f32 %v1043, 1.0
  %v1045 = vrcp.pop %v1044
  %v1046 = vmul.f32 %v1044, %v1045
  %v1047 = vsub.f32 1.0, %v1046
  %v1048 = vmul.f32 %v1045, %v1047
  %v1049 = vadd.f32 %v1045, %v1048
  %vm1050 = vweird.f32 %v1044
  %vm1051 = vweird.f32 %v1045
  %vm1052 = vmor %vm1050, %vm1051
  %v1053 = vsel %vm1052, %v1045, %v1049
  %v1054 = vand.u32 2147483647, %v1044
  %vm1055 = vcmp.eq.f32.partialorder %v1054, 8.507059e+37
  %v1056 = vand.u32 %v1044, 2147483648
  %v1057 = vor.u32 1.1754944e-38, %v1056
  %v1058 = vsel %vm1055, %v1057, %v1053
  %v1059 = vmul.f32 1.0, %v1058
  %v1060 = vtanh.pop %v1020
  %v1061 = vxor.u32 %v1021, 2147483648
  %v1062 = vmul.f32 %v1061, 1.442695
  %v1063 = vpow.pop %v1062
  %v1064 = vadd.f32 %v1063, 1.0
  %v1065 = vrcp.pop %v1064
  %v1066 = vmul.f32 %v1064, %v1065
  %v1067 = vsub.f32 1.0, %v1066
  %v1068 = vmul.f32 %v1065, %v1067
  %v1069 = vadd.f32 %v1065, %v1068
  %vm1070 = vweird.f32 %v1064
  %vm1071 = vweird.f32 %v1065
  %vm1072 = vmor %vm1070, %vm1071
  %v1073 = vsel %vm1072, %v1065, %v1069
  %v1074 = vand.u32 2147483647, %v1064
  %vm1075 = vcmp.eq.f32.partialorder %v1074, 8.507059e+37
  %v1076 = vand.u32 %v1064, 2147483648
  %v1077 = vor.u32 1.1754944e-38, %v1076
  %v1078 = vsel %vm1075, %v1077, %v1073
  %v1079 = vmul.f32 1.0, %v1078
  %v1080 = vmul.f32 %v1059, %v958
  %v1081 = vmul.f32 %v1040, %v1060
  %v1082 = vadd.f32 %v1080, %v1081
  %v1083 = vtanh.pop %v1082
  %v1084 = vmul.f32 %v1079, %v1083
  %v1085 = vld [vmem:[#allocation2 + $0x80] sm:$0xff]
  %v1086 = vld [vmem:[#allocation2 + $0x88] sm:$0xff]
  %v1087 = vld [vmem:[#allocation2 + $0x90] sm:$0xff]
  %v1088 = vld [vmem:[#allocation2 + $0x98] sm:$0xff]
  %v1089 = vpack.c.bf16 %v1084, %v1084
  %1090 = vmatpush.bf16.msra.mxu0 %v558
  %1091 = vmatpush.bf16.msra.mxu0 %v554
  %1092 = vmatpush.bf16.msra.mxu0 %v550
  %1093 = vmatpush.bf16.msra.mxu0 %v546
  %1094 = vmatpush.bf16.msra.mxu0 %v542
  %1095 = vmatpush.bf16.msra.mxu0 %v538
  %1096 = vmatpush.bf16.msra.mxu0 %v534
  %1097 = vmatpush.bf16.msra.mxu0 %v530
  %1098 = vmatmul.bf16.gmra.mxu0 %v1089
  %v1099 = vpop.f32.mrf.mxu0
  %v1100 = vadd.f32 0.0, %v1099
  %v1101 = vpop.f32.mrf.mxu0
  %1102 = vdwg.mxu0
  %1103 = vmatpush.bf16.msra.mxu0 %v559
  %1104 = vmatpush.bf16.msra.mxu0 %v555
  %1105 = vmatpush.bf16.msra.mxu0 %v551
  %1106 = vmatpush.bf16.msra.mxu0 %v547
  %1107 = vmatpush.bf16.msra.mxu0 %v543
  %1108 = vmatpush.bf16.msra.mxu0 %v539
  %1109 = vmatpush.bf16.msra.mxu0 %v535
  %1110 = vmatpush.bf16.msra.mxu0 %v531
  %1111 = vmatmul.bf16.gmra.mxu0 %v1089
  %v1112 = vpop.f32.mrf.mxu0
  %v1113 = vadd.f32 0.0, %v1112
  %v1114 = vpop.f32.mrf.mxu0
  %1115 = vdwg.mxu0
  %1116 = vmatpush.bf16.msra.mxu0 %v560
  %1117 = vmatpush.bf16.msra.mxu0 %v556
  %1118 = vmatpush.bf16.msra.mxu0 %v552
  %1119 = vmatpush.bf16.msra.mxu0 %v548
  %1120 = vmatpush.bf16.msra.mxu0 %v544
  %1121 = vmatpush.bf16.msra.mxu0 %v540
  %1122 = vmatpush.bf16.msra.mxu0 %v536
  %1123 = vmatpush.bf16.msra.mxu0 %v532
  %1124 = vmatmul.bf16.gmra.mxu0 %v1089
  %v1125 = vpop.f32.mrf.mxu0
  %v1126 = vadd.f32 0.0, %v1125
  %v1127 = vpop.f32.mrf.mxu0
  %1128 = vdwg.mxu0
  %1129 = vmatpush.bf16.msra.mxu0 %v561
  %1130 = vmatpush.bf16.msra.mxu0 %v557
  %1131 = vmatpush.bf16.msra.mxu0 %v553
  %1132 = vmatpush.bf16.msra.mxu0 %v549
  %1133 = vmatpush.bf16.msra.mxu0 %v545
  %1134 = vmatpush.bf16.msra.mxu0 %v541
  %1135 = vmatpush.bf16.msra.mxu0 %v537
  %1136 = vmatpush.bf16.msra.mxu0 %v533
  %1137 = vmatmul.bf16.gmra.mxu0 %v1089
  %v1138 = vpop.f32.mrf.mxu0
  %v1139 = vadd.f32 0.0, %v1138
  %v1140 = vpop.f32.mrf.mxu0
  %1141 = vdwg.mxu0
  %v1142 = vadd.f32 %v1085, %v1100
  %v1143 = vadd.f32 %v1086, %v1113
  %v1144 = vadd.f32 %v1087, %v1126
  %v1145 = vadd.f32 %v1088, %v1139
  %v1146 = vxor.u32 %v1142, 2147483648
  %v1147 = vmul.f32 %v1146, 1.442695
  %v1148 = vpow.pop %v1147
  %v1149 = vadd.f32 %v1148, 1.0
  %v1150 = vrcp.pop %v1149
  %v1151 = vmul.f32 %v1149, %v1150
  %v1152 = vsub.f32 1.0, %v1151
  %v1153 = vmul.f32 %v1150, %v1152
  %v1154 = vadd.f32 %v1150, %v1153
  %vm1155 = vweird.f32 %v1149
  %vm1156 = vweird.f32 %v1150
  %vm1157 = vmor %vm1155, %vm1156
  %v1158 = vsel %vm1157, %v1150, %v1154
  %v1159 = vand.u32 2147483647, %v1149
  %vm1160 = vcmp.eq.f32.partialorder %v1159, 8.507059e+37
  %v1161 = vand.u32 %v1149, 2147483648
  %v1162 = vor.u32 1.1754944e-38, %v1161
  %v1163 = vsel %vm1160, %v1162, %v1158
  %v1164 = vmul.f32 1.0, %v1163
  %v1165 = vxor.u32 %v1143, 2147483648
  %v1166 = vmul.f32 %v1165, 1.442695
  %v1167 = vpow.pop %v1166
  %v1168 = vadd.f32 %v1167, 1.0
  %v1169 = vrcp.pop %v1168
  %v1170 = vmul.f32 %v1168, %v1169
  %v1171 = vsub.f32 1.0, %v1170
  %v1172 = vmul.f32 %v1169, %v1171
  %v1173 = vadd.f32 %v1169, %v1172
  %vm1174 = vweird.f32 %v1168
  %vm1175 = vweird.f32 %v1169
  %vm1176 = vmor %vm1174, %vm1175
  %v1177 = vsel %vm1176, %v1169, %v1173
  %v1178 = vand.u32 2147483647, %v1168
  %vm1179 = vcmp.eq.f32.partialorder %v1178, 8.507059e+37
  %v1180 = vand.u32 %v1168, 2147483648
  %v1181 = vor.u32 1.1754944e-38, %v1180
  %v1182 = vsel %vm1179, %v1181, %v1177
  %v1183 = vmul.f32 1.0, %v1182
  %v1184 = vtanh.pop %v1144
  %v1185 = vxor.u32 %v1145, 2147483648
  %v1186 = vmul.f32 %v1185, 1.442695
  %v1187 = vpow.pop %v1186
  %v1188 = vadd.f32 %v1187, 1.0
  %v1189 = vrcp.pop %v1188
  %v1190 = vmul.f32 %v1188, %v1189
  %v1191 = vsub.f32 1.0, %v1190
  %v1192 = vmul.f32 %v1189, %v1191
  %v1193 = vadd.f32 %v1189, %v1192
  %vm1194 = vweird.f32 %v1188
  %vm1195 = vweird.f32 %v1189
  %vm1196 = vmor %vm1194, %vm1195
  %v1197 = vsel %vm1196, %v1189, %v1193
  %v1198 = vand.u32 2147483647, %v1188
  %vm1199 = vcmp.eq.f32.partialorder %v1198, 8.507059e+37
  %v1200 = vand.u32 %v1188, 2147483648
  %v1201 = vor.u32 1.1754944e-38, %v1200
  %v1202 = vsel %vm1199, %v1201, %v1197
  %v1203 = vmul.f32 1.0, %v1202
  %v1204 = vmul.f32 %v1183, %v1082
  %v1205 = vmul.f32 %v1164, %v1184
  %v1206 = vadd.f32 %v1204, %v1205
  %v1207 = vtanh.pop %v1206
  %v1208 = vmul.f32 %v1203, %v1207
  %v1209 = vld [vmem:[#allocation2 + $0xa0] sm:$0xff]
  %v1210 = vld [vmem:[#allocation2 + $0xa8] sm:$0xff]
  %v1211 = vld [vmem:[#allocation2 + $0xb0] sm:$0xff]
  %v1212 = vld [vmem:[#allocation2 + $0xb8] sm:$0xff]
  %v1213 = vpack.c.bf16 %v1208, %v1208
  %1214 = vmatpush.bf16.msra.mxu0 %v558
  %1215 = vmatpush.bf16.msra.mxu0 %v554
  %1216 = vmatpush.bf16.msra.mxu0 %v550
  %1217 = vmatpush.bf16.msra.mxu0 %v546
  %1218 = vmatpush.bf16.msra.mxu0 %v542
  %1219 = vmatpush.bf16.msra.mxu0 %v538
  %1220 = vmatpush.bf16.msra.mxu0 %v534
  %1221 = vmatpush.bf16.msra.mxu0 %v530
  %1222 = vmatmul.bf16.gmra.mxu0 %v1213
  %v1223 = vpop.f32.mrf.mxu0
  %v1224 = vadd.f32 0.0, %v1223
  %v1225 = vpop.f32.mrf.mxu0
  %1226 = vdwg.mxu0
  %1227 = vmatpush.bf16.msra.mxu0 %v559
  %1228 = vmatpush.bf16.msra.mxu0 %v555
  %1229 = vmatpush.bf16.msra.mxu0 %v551
  %1230 = vmatpush.bf16.msra.mxu0 %v547
  %1231 = vmatpush.bf16.msra.mxu0 %v543
  %1232 = vmatpush.bf16.msra.mxu0 %v539
  %1233 = vmatpush.bf16.msra.mxu0 %v535
  %1234 = vmatpush.bf16.msra.mxu0 %v531
  %1235 = vmatmul.bf16.gmra.mxu0 %v1213
  %v1236 = vpop.f32.mrf.mxu0
  %v1237 = vadd.f32 0.0, %v1236
  %v1238 = vpop.f32.mrf.mxu0
  %1239 = vdwg.mxu0
  %1240 = vmatpush.bf16.msra.mxu0 %v560
  %1241 = vmatpush.bf16.msra.mxu0 %v556
  %1242 = vmatpush.bf16.msra.mxu0 %v552
  %1243 = vmatpush.bf16.msra.mxu0 %v548
  %1244 = vmatpush.bf16.msra.mxu0 %v544
  %1245 = vmatpush.bf16.msra.mxu0 %v540
  %1246 = vmatpush.bf16.msra.mxu0 %v536
  %1247 = vmatpush.bf16.msra.mxu0 %v532
  %1248 = vmatmul.bf16.gmra.mxu0 %v1213
  %v1249 = vpop.f32.mrf.mxu0
  %v1250 = vadd.f32 0.0, %v1249
  %v1251 = vpop.f32.mrf.mxu0
  %1252 = vdwg.mxu0
  %1253 = vmatpush.bf16.msra.mxu0 %v561
  %1254 = vmatpush.bf16.msra.mxu0 %v557
  %1255 = vmatpush.bf16.msra.mxu0 %v553
  %1256 = vmatpush.bf16.msra.mxu0 %v549
  %1257 = vmatpush.bf16.msra.mxu0 %v545
  %1258 = vmatpush.bf16.msra.mxu0 %v541
  %1259 = vmatpush.bf16.msra.mxu0 %v537
  %1260 = vmatpush.bf16.msra.mxu0 %v533
  %1261 = vmatmul.bf16.gmra.mxu0 %v1213
  %v1262 = vpop.f32.mrf.mxu0
  %v1263 = vadd.f32 0.0, %v1262
  %v1264 = vpop.f32.mrf.mxu0
  %1265 = vdwg.mxu0
  %v1266 = vadd.f32 %v1209, %v1224
  %v1267 = vadd.f32 %v1210, %v1237
  %v1268 = vadd.f32 %v1211, %v1250
  %v1269 = vadd.f32 %v1212, %v1263
  %v1270 = vxor.u32 %v1266, 2147483648
  %v1271 = vmul.f32 %v1270, 1.442695
  %v1272 = vpow.pop %v1271
  %v1273 = vadd.f32 %v1272, 1.0
  %v1274 = vrcp.pop %v1273
  %v1275 = vmul.f32 %v1273, %v1274
  %v1276 = vsub.f32 1.0, %v1275
  %v1277 = vmul.f32 %v1274, %v1276
  %v1278 = vadd.f32 %v1274, %v1277
  %vm1279 = vweird.f32 %v1273
  %vm1280 = vweird.f32 %v1274
  %vm1281 = vmor %vm1279, %vm1280
  %v1282 = vsel %vm1281, %v1274, %v1278
  %v1283 = vand.u32 2147483647, %v1273
  %vm1284 = vcmp.eq.f32.partialorder %v1283, 8.507059e+37
  %v1285 = vand.u32 %v1273, 2147483648
  %v1286 = vor.u32 1.1754944e-38, %v1285
  %v1287 = vsel %vm1284, %v1286, %v1282
  %v1288 = vmul.f32 1.0, %v1287
  %v1289 = vxor.u32 %v1267, 2147483648
  %v1290 = vmul.f32 %v1289, 1.442695
  %v1291 = vpow.pop %v1290
  %v1292 = vadd.f32 %v1291, 1.0
  %v1293 = vrcp.pop %v1292
  %v1294 = vmul.f32 %v1292, %v1293
  %v1295 = vsub.f32 1.0, %v1294
  %v1296 = vmul.f32 %v1293, %v1295
  %v1297 = vadd.f32 %v1293, %v1296
  %vm1298 = vweird.f32 %v1292
  %vm1299 = vweird.f32 %v1293
  %vm1300 = vmor %vm1298, %vm1299
  %v1301 = vsel %vm1300, %v1293, %v1297
  %v1302 = vand.u32 2147483647, %v1292
  %vm1303 = vcmp.eq.f32.partialorder %v1302, 8.507059e+37
  %v1304 = vand.u32 %v1292, 2147483648
  %v1305 = vor.u32 1.1754944e-38, %v1304
  %v1306 = vsel %vm1303, %v1305, %v1301
  %v1307 = vmul.f32 1.0, %v1306
  %v1308 = vtanh.pop %v1268
  %v1309 = vxor.u32 %v1269, 2147483648
  %v1310 = vmul.f32 %v1309, 1.442695
  %v1311 = vpow.pop %v1310
  %v1312 = vadd.f32 %v1311, 1.0
  %v1313 = vrcp.pop %v1312
  %v1314 = vmul.f32 %v1312, %v1313
  %v1315 = vsub.f32 1.0, %v1314
  %v1316 = vmul.f32 %v1313, %v1315
  %v1317 = vadd.f32 %v1313, %v1316
  %vm1318 = vweird.f32 %v1312
  %vm1319 = vweird.f32 %v1313
  %vm1320 = vmor %vm1318, %vm1319
  %v1321 = vsel %vm1320, %v1313, %v1317
  %v1322 = vand.u32 2147483647, %v1312
  %vm1323 = vcmp.eq.f32.partialorder %v1322, 8.507059e+37
  %v1324 = vand.u32 %v1312, 2147483648
  %v1325 = vor.u32 1.1754944e-38, %v1324
  %v1326 = vsel %vm1323, %v1325, %v1321
  %v1327 = vmul.f32 1.0, %v1326
  %v1328 = vmul.f32 %v1307, %v1206
  %v1329 = vmul.f32 %v1288, %v1308
  %v1330 = vadd.f32 %v1328, %v1329
  %v1331 = vtanh.pop %v1330
  %v1332 = vmul.f32 %v1327, %v1331
  %v1333 = vld [vmem:[#allocation2 + $0xc0] sm:$0xff]
  %v1334 = vld [vmem:[#allocation2 + $0xc8] sm:$0xff]
  %v1335 = vld [vmem:[#allocation2 + $0xd0] sm:$0xff]
  %v1336 = vld [vmem:[#allocation2 + $0xd8] sm:$0xff]
  %v1337 = vpack.c.bf16 %v1332, %v1332
  %1338 = vmatpush.bf16.msra.mxu0 %v558
  %1339 = vmatpush.bf16.msra.mxu0 %v554
  %1340 = vmatpush.bf16.msra.mxu0 %v550
  %1341 = vmatpush.bf16.msra.mxu0 %v546
  %1342 = vmatpush.bf16.msra.mxu0 %v542
  %1343 = vmatpush.bf16.msra.mxu0 %v538
  %1344 = vmatpush.bf16.msra.mxu0 %v534
  %1345 = vmatpush.bf16.msra.mxu0 %v530
  %1346 = vmatmul.bf16.gmra.mxu0 %v1337
  %v1347 = vpop.f32.mrf.mxu0
  %v1348 = vadd.f32 0.0, %v1347
  %v1349 = vpop.f32.mrf.mxu0
  %1350 = vdwg.mxu0
  %1351 = vmatpush.bf16.msra.mxu0 %v559
  %1352 = vmatpush.bf16.msra.mxu0 %v555
  %1353 = vmatpush.bf16.msra.mxu0 %v551
  %1354 = vmatpush.bf16.msra.mxu0 %v547
  %1355 = vmatpush.bf16.msra.mxu0 %v543
  %1356 = vmatpush.bf16.msra.mxu0 %v539
  %1357 = vmatpush.bf16.msra.mxu0 %v535
  %1358 = vmatpush.bf16.msra.mxu0 %v531
  %1359 = vmatmul.bf16.gmra.mxu0 %v1337
  %v1360 = vpop.f32.mrf.mxu0
  %v1361 = vadd.f32 0.0, %v1360
  %v1362 = vpop.f32.mrf.mxu0
  %1363 = vdwg.mxu0
  %1364 = vmatpush.bf16.msra.mxu0 %v560
  %1365 = vmatpush.bf16.msra.mxu0 %v556
  %1366 = vmatpush.bf16.msra.mxu0 %v552
  %1367 = vmatpush.bf16.msra.mxu0 %v548
  %1368 = vmatpush.bf16.msra.mxu0 %v544
  %1369 = vmatpush.bf16.msra.mxu0 %v540
  %1370 = vmatpush.bf16.msra.mxu0 %v536
  %1371 = vmatpush.bf16.msra.mxu0 %v532
  %1372 = vmatmul.bf16.gmra.mxu0 %v1337
  %v1373 = vpop.f32.mrf.mxu0
  %v1374 = vadd.f32 0.0, %v1373
  %v1375 = vpop.f32.mrf.mxu0
  %1376 = vdwg.mxu0
  %1377 = vmatpush.bf16.msra.mxu0 %v561
  %1378 = vmatpush.bf16.msra.mxu0 %v557
  %1379 = vmatpush.bf16.msra.mxu0 %v553
  %1380 = vmatpush.bf16.msra.mxu0 %v549
  %1381 = vmatpush.bf16.msra.mxu0 %v545
  %1382 = vmatpush.bf16.msra.mxu0 %v541
  %1383 = vmatpush.bf16.msra.mxu0 %v537
  %1384 = vmatpush.bf16.msra.mxu0 %v533
  %1385 = vmatmul.bf16.gmra.mxu0 %v1337
  %v1386 = vpop.f32.mrf.mxu0
  %v1387 = vadd.f32 0.0, %v1386
  %v1388 = vpop.f32.mrf.mxu0
  %1389 = vdwg.mxu0
  %v1390 = vadd.f32 %v1333, %v1348
  %v1391 = vadd.f32 %v1334, %v1361
  %v1392 = vadd.f32 %v1335, %v1374
  %v1393 = vadd.f32 %v1336, %v1387
  %v1394 = vxor.u32 %v1390, 2147483648
  %v1395 = vmul.f32 %v1394, 1.442695
  %v1396 = vpow.pop %v1395
  %v1397 = vadd.f32 %v1396, 1.0
  %v1398 = vrcp.pop %v1397
  %v1399 = vmul.f32 %v1397, %v1398
  %v1400 = vsub.f32 1.0, %v1399
  %v1401 = vmul.f32 %v1398, %v1400
  %v1402 = vadd.f32 %v1398, %v1401
  %vm1403 = vweird.f32 %v1397
  %vm1404 = vweird.f32 %v1398
  %vm1405 = vmor %vm1403, %vm1404
  %v1406 = vsel %vm1405, %v1398, %v1402
  %v1407 = vand.u32 2147483647, %v1397
  %vm1408 = vcmp.eq.f32.partialorder %v1407, 8.507059e+37
  %v1409 = vand.u32 %v1397, 2147483648
  %v1410 = vor.u32 1.1754944e-38, %v1409
  %v1411 = vsel %vm1408, %v1410, %v1406
  %v1412 = vmul.f32 1.0, %v1411
  %v1413 = vxor.u32 %v1391, 2147483648
  %v1414 = vmul.f32 %v1413, 1.442695
  %v1415 = vpow.pop %v1414
  %v1416 = vadd.f32 %v1415, 1.0
  %v1417 = vrcp.pop %v1416
  %v1418 = vmul.f32 %v1416, %v1417
  %v1419 = vsub.f32 1.0, %v1418
  %v1420 = vmul.f32 %v1417, %v1419
  %v1421 = vadd.f32 %v1417, %v1420
  %vm1422 = vweird.f32 %v1416
  %vm1423 = vweird.f32 %v1417
  %vm1424 = vmor %vm1422, %vm1423
  %v1425 = vsel %vm1424, %v1417, %v1421
  %v1426 = vand.u32 2147483647, %v1416
  %vm1427 = vcmp.eq.f32.partialorder %v1426, 8.507059e+37
  %v1428 = vand.u32 %v1416, 2147483648
  %v1429 = vor.u32 1.1754944e-38, %v1428
  %v1430 = vsel %vm1427, %v1429, %v1425
  %v1431 = vmul.f32 1.0, %v1430
  %v1432 = vtanh.pop %v1392
  %v1433 = vxor.u32 %v1393, 2147483648
  %v1434 = vmul.f32 %v1433, 1.442695
  %v1435 = vpow.pop %v1434
  %v1436 = vadd.f32 %v1435, 1.0
  %v1437 = vrcp.pop %v1436
  %v1438 = vmul.f32 %v1436, %v1437
  %v1439 = vsub.f32 1.0, %v1438
  %v1440 = vmul.f32 %v1437, %v1439
  %v1441 = vadd.f32 %v1437, %v1440
  %vm1442 = vweird.f32 %v1436
  %vm1443 = vweird.f32 %v1437
  %vm1444 = vmor %vm1442, %vm1443
  %v1445 = vsel %vm1444, %v1437, %v1441
  %v1446 = vand.u32 2147483647, %v1436
  %vm1447 = vcmp.eq.f32.partialorder %v1446, 8.507059e+37
  %v1448 = vand.u32 %v1436, 2147483648
  %v1449 = vor.u32 1.1754944e-38, %v1448
  %v1450 = vsel %vm1447, %v1449, %v1445
  %v1451 = vmul.f32 1.0, %v1450
  %v1452 = vmul.f32 %v1431, %v1330
  %v1453 = vmul.f32 %v1412, %v1432
  %v1454 = vadd.f32 %v1452, %v1453
  %v1455 = vtanh.pop %v1454
  %v1456 = vmul.f32 %v1451, %v1455
  %v1457 = vld [vmem:[#allocation2 + $0xe0] sm:$0xff]
  %v1458 = vld [vmem:[#allocation2 + $0xe8] sm:$0xff]
  %v1459 = vld [vmem:[#allocation2 + $0xf0] sm:$0xff]
  %v1460 = vld [vmem:[#allocation2 + $0xf8] sm:$0xff]
  %v1461 = vpack.c.bf16 %v1456, %v1456
  %1462 = vmatpush.bf16.msra.mxu0 %v558
  %1463 = vmatpush.bf16.msra.mxu0 %v554
  %1464 = vmatpush.bf16.msra.mxu0 %v550
  %1465 = vmatpush.bf16.msra.mxu0 %v546
  %1466 = vmatpush.bf16.msra.mxu0 %v542
  %1467 = vmatpush.bf16.msra.mxu0 %v538
  %1468 = vmatpush.bf16.msra.mxu0 %v534
  %1469 = vmatpush.bf16.msra.mxu0 %v530
  %1470 = vmatmul.bf16.gmra.mxu0 %v1461
  %v1471 = vpop.f32.mrf.mxu0
  %v1472 = vadd.f32 0.0, %v1471
  %v1473 = vpop.f32.mrf.mxu0
  %1474 = vdwg.mxu0
  %1475 = vmatpush.bf16.msra.mxu0 %v559
  %1476 = vmatpush.bf16.msra.mxu0 %v555
  %1477 = vmatpush.bf16.msra.mxu0 %v551
  %1478 = vmatpush.bf16.msra.mxu0 %v547
  %1479 = vmatpush.bf16.msra.mxu0 %v543
  %1480 = vmatpush.bf16.msra.mxu0 %v539
  %1481 = vmatpush.bf16.msra.mxu0 %v535
  %1482 = vmatpush.bf16.msra.mxu0 %v531
  %1483 = vmatmul.bf16.gmra.mxu0 %v1461
  %v1484 = vpop.f32.mrf.mxu0
  %v1485 = vadd.f32 0.0, %v1484
  %v1486 = vpop.f32.mrf.mxu0
  %1487 = vdwg.mxu0
  %1488 = vmatpush.bf16.msra.mxu0 %v560
  %1489 = vmatpush.bf16.msra.mxu0 %v556
  %1490 = vmatpush.bf16.msra.mxu0 %v552
  %1491 = vmatpush.bf16.msra.mxu0 %v548
  %1492 = vmatpush.bf16.msra.mxu0 %v544
  %1493 = vmatpush.bf16.msra.mxu0 %v540
  %1494 = vmatpush.bf16.msra.mxu0 %v536
  %1495 = vmatpush.bf16.msra.mxu0 %v532
  %1496 = vmatmul.bf16.gmra.mxu0 %v1461
  %v1497 = vpop.f32.mrf.mxu0
  %v1498 = vadd.f32 0.0, %v1497
  %v1499 = vpop.f32.mrf.mxu0
  %1500 = vdwg.mxu0
  %1501 = vmatpush.bf16.msra.mxu0 %v561
  %1502 = vmatpush.bf16.msra.mxu0 %v557
  %1503 = vmatpush.bf16.msra.mxu0 %v553
  %1504 = vmatpush.bf16.msra.mxu0 %v549
  %1505 = vmatpush.bf16.msra.mxu0 %v545
  %1506 = vmatpush.bf16.msra.mxu0 %v541
  %1507 = vmatpush.bf16.msra.mxu0 %v537
  %1508 = vmatpush.bf16.msra.mxu0 %v533
  %1509 = vmatmul.bf16.gmra.mxu0 %v1461
  %v1510 = vpop.f32.mrf.mxu0
  %v1511 = vadd.f32 0.0, %v1510
  %v1512 = vpop.f32.mrf.mxu0
  %1513 = vdwg.mxu0
  %v1514 = vadd.f32 %v1457, %v1472
  %v1515 = vadd.f32 %v1458, %v1485
  %v1516 = vadd.f32 %v1459, %v1498
  %v1517 = vadd.f32 %v1460, %v1511
  %v1518 = vxor.u32 %v1514, 2147483648
  %v1519 = vmul.f32 %v1518, 1.442695
  %v1520 = vpow.pop %v1519
  %v1521 = vadd.f32 %v1520, 1.0
  %v1522 = vrcp.pop %v1521
  %v1523 = vmul.f32 %v1521, %v1522
  %v1524 = vsub.f32 1.0, %v1523
  %v1525 = vmul.f32 %v1522, %v1524
  %v1526 = vadd.f32 %v1522, %v1525
  %vm1527 = vweird.f32 %v1521
  %vm1528 = vweird.f32 %v1522
  %vm1529 = vmor %vm1527, %vm1528
  %v1530 = vsel %vm1529, %v1522, %v1526
  %v1531 = vand.u32 2147483647, %v1521
  %vm1532 = vcmp.eq.f32.partialorder %v1531, 8.507059e+37
  %v1533 = vand.u32 %v1521, 2147483648
  %v1534 = vor.u32 1.1754944e-38, %v1533
  %v1535 = vsel %vm1532, %v1534, %v1530
  %v1536 = vmul.f32 1.0, %v1535
  %v1537 = vxor.u32 %v1515, 2147483648
  %v1538 = vmul.f32 %v1537, 1.442695
  %v1539 = vpow.pop %v1538
  %v1540 = vadd.f32 %v1539, 1.0
  %v1541 = vrcp.pop %v1540
  %v1542 = vmul.f32 %v1540, %v1541
  %v1543 = vsub.f32 1.0, %v1542
  %v1544 = vmul.f32 %v1541, %v1543
  %v1545 = vadd.f32 %v1541, %v1544
  %vm1546 = vweird.f32 %v1540
  %vm1547 = vweird.f32 %v1541
  %vm1548 = vmor %vm1546, %vm1547
  %v1549 = vsel %vm1548, %v1541, %v1545
  %v1550 = vand.u32 2147483647, %v1540
  %vm1551 = vcmp.eq.f32.partialorder %v1550, 8.507059e+37
  %v1552 = vand.u32 %v1540, 2147483648
  %v1553 = vor.u32 1.1754944e-38, %v1552
  %v1554 = vsel %vm1551, %v1553, %v1549
  %v1555 = vmul.f32 1.0, %v1554
  %v1556 = vtanh.pop %v1516
  %v1557 = vxor.u32 %v1517, 2147483648
  %v1558 = vmul.f32 %v1557, 1.442695
  %v1559 = vpow.pop %v1558
  %v1560 = vadd.f32 %v1559, 1.0
  %v1561 = vrcp.pop %v1560
  %v1562 = vmul.f32 %v1560, %v1561
  %v1563 = vsub.f32 1.0, %v1562
  %v1564 = vmul.f32 %v1561, %v1563
  %v1565 = vadd.f32 %v1561, %v1564
  %vm1566 = vweird.f32 %v1560
  %vm1567 = vweird.f32 %v1561
  %vm1568 = vmor %vm1566, %vm1567
  %v1569 = vsel %vm1568, %v1561, %v1565
  %v1570 = vand.u32 2147483647, %v1560
  %vm1571 = vcmp.eq.f32.partialorder %v1570, 8.507059e+37
  %v1572 = vand.u32 %v1560, 2147483648
  %v1573 = vor.u32 1.1754944e-38, %v1572
  %v1574 = vsel %vm1571, %v1573, %v1569
  %v1575 = vmul.f32 1.0, %v1574
  %v1576 = vmul.f32 %v1555, %v1454
  %v1577 = vmul.f32 %v1536, %v1556
  %v1578 = vadd.f32 %v1576, %v1577
  %v1579 = vtanh.pop %v1578
  %v1580 = vmul.f32 %v1575, %v1579
  %1581 = vst [vmem:[#allocation3] sm:$0xff] %v1580
  %1582 = vst [vmem:[#allocation4] sm:$0xff] %v1578
  // Predicated region
  $region30: #{seq2seq_forward.3} parent=0 // pred_check
    %p1583 = pneg %p25
  $region31: #{seq2seq_forward.3} parent=0 // pred_check_branch
    %1585 = sbr.rel (%p1583) target = $region33
  $region32: #{seq2seq_forward.3} parent=0 // pred_region
    %1586 = vst [vmem:[%s6] sm:$0xff] %v1580
    %1587 = vst [vmem:[%s7] sm:$0xff] %v1578
  $region33: #{seq2seq_forward.3} parent=0 // pred_fallthru
    _
  // Predicated region
  $region34: #{seq2seq_forward.3} parent=0 // pred_check
    _
  $region35: #{seq2seq_forward.3} parent=0 // pred_check_branch
    %1589 = sbr.rel (0) target = $region37
  $region36: #{seq2seq_forward.3} parent=0 // pred_region
    _
  $region37: #{seq2seq_forward.3} parent=0 // pred_fallthru
    _
  // Predicated region
  $region38: #{seq2seq_forward.3} parent=0 // pred_check
    _
  $region39: #{seq2seq_forward.3} parent=0 // pred_check_branch
    %1591 = sbr.rel (0) target = $region41
  $region40: #{seq2seq_forward.3} parent=0 // pred_region
    _
  $region41: #{seq2seq_forward.3} parent=0 // pred_fallthru
    _
  // Predicated region
  $region42: #{seq2seq_forward.3} parent=0 // pred_check
    _
  $region43: #{seq2seq_forward.3} parent=0 // pred_check_branch
    %1593 = sbr.rel (0) target = $region45
  $region44: #{seq2seq_forward.3} parent=0 // pred_region
    _
  $region45: #{seq2seq_forward.3} parent=0 // pred_fallthru
    _
  // Predicated region
  $region46: #{seq2seq_forward.3} parent=0 // pred_check
    _
  $region47: #{seq2seq_forward.3} parent=0 // pred_check_branch
    %1595 = sbr.rel (0) target = $region49
  $region48: #{seq2seq_forward.3} parent=0 // pred_region
    _
  $region49: #{seq2seq_forward.3} parent=0 // pred_fallthru
    _

// kernel: seq2seq_forward.4
$region0: #{seq2seq_forward.4}
  #allocation0 [shape = 'u32[]', space=smem, size = 0x4, offset = 0x4, fixed_abs, tag = 'smem constant byte address 0x4 - core index']
  #allocation1 [shape = 'u32[72,128]{1,0:T(1,128)}', space=vmem, size = 0x9000, scoped, tag = 'internal scratch']
  #allocation2 [shape = 'f32[64,512]{1,0:T(8,128)}', space=vmem, size = 0x20000, scoped, tag = 'scratch operand']
  #allocation3 [shape = 'f32[8,128]{1,0:T(8,128)}', space=vmem, size = 0x1000, scoped, tag = 'scratch operand']
  #allocation4 [shape = 'f32[8,128]{1,0:T(8,128)}', space=vmem, size = 0x1000, scoped, tag = 'scratch operand']
  %s0 = inlined_call_operand.vmem [shape: f32[1,1,64,128], index: 0, kind: input, shape index: {}]
  %s1 = inlined_call_operand.vmem [shape: bf16[128,512], index: 1, kind: input, shape index: {}]
  %s2 = inlined_call_operand.vmem [shape: f32[1,512], index: 2, kind: input, shape index: {}]
  %s3 = inlined_call_operand.vmem [shape: bf16[128,512], index: 3, kind: input, shape index: {}]
  %s4 = inlined_call_operand.vmem [shape: f32[8,128], index: 4, kind: input, shape index: {}]
  %s5 = inlined_call_operand.vmem [shape: f32[8,128], index: 5, kind: input, shape index: {}]
  %s6 = inlined_call_operand.vmem [shape: f32[1,1,64,128], index: 6, kind: output, shape index: {0}]
  %s7 = inlined_call_operand.hbm [shape: f32[8,128], index: 7, kind: output, shape index: {1}]
  %s8 = inlined_call_operand.hbm [shape: f32[8,128], index: 8, kind: output, shape index: {2}]
  %9 = xla_tuple %s6, %s7, %s8
  %s10 = sld [smem:[#allocation0]]
  $region58: #{seq2seq_forward.4} parent=0
    _
  %s12 = ssub.s32 1, %s10
  %s13 = scalar_select 0, %s12, %s10
  $region1: #{seq2seq_forward.4} parent=0
    #allocation5 [shape = 'u8[4096]{0}', space=vmem, size = 0x1000, scoped, tag = 'output window, operand 1, single buffered']
    #allocation6 [shape = 's32[1]{0}', space=sflag, size = 0x4, scoped, tag = 'scoped memory for seq2seq_forward.4']
    #allocation7 [shape = 'u8[4096]{0}', space=vmem, size = 0x1000, scoped, tag = 'output window, operand 2, single buffered']
    #allocation8 [shape = 's32[1]{0}', space=sflag, size = 0x4, scoped, tag = 'scoped memory for seq2seq_forward.4']
    %14 = vsyncpa [#allocation6], 0
    %15 = vsyncpa [#allocation8], 0
    // Predicated region
    $region2: #{seq2seq_forward.4} parent=1 // pred_check
      _
    $region3: #{seq2seq_forward.4} parent=1 // pred_check_branch
      %17 = sbr.rel (0) target = $region5
    $region4: #{seq2seq_forward.4} parent=1 // pred_region
      _
    $region5: #{seq2seq_forward.4} parent=1 // pred_fallthru
      _
    // Predicated region
    $region6: #{seq2seq_forward.4} parent=1 // pred_check
      _
    $region7: #{seq2seq_forward.4} parent=1 // pred_check_branch
      %19 = sbr.rel (0) target = $region9
    $region8: #{seq2seq_forward.4} parent=1 // pred_region
      _
    $region9: #{seq2seq_forward.4} parent=1 // pred_fallthru
      _
    // Predicated region
    $region10: #{seq2seq_forward.4} parent=1 // pred_check
      _
    $region11: #{seq2seq_forward.4} parent=1 // pred_check_branch
      %21 = sbr.rel (0) target = $region13
    $region12: #{seq2seq_forward.4} parent=1 // pred_region
      _
    $region13: #{seq2seq_forward.4} parent=1 // pred_fallthru
      _
    // Predicated region
    $region14: #{seq2seq_forward.4} parent=1 // pred_check
      _
    $region15: #{seq2seq_forward.4} parent=1 // pred_check_branch
      %23 = sbr.rel (0) target = $region17
    $region16: #{seq2seq_forward.4} parent=1 // pred_region
      _
    $region17: #{seq2seq_forward.4} parent=1 // pred_fallthru
      _
    // Predicated region
    $region18: #{seq2seq_forward.4} parent=1 // pred_check
      _
    $region19: #{seq2seq_forward.4} parent=1 // pred_check_branch
      %25 = sbr.rel (0) target = $region21
    $region20: #{seq2seq_forward.4} parent=1 // pred_region
      _
    $region21: #{seq2seq_forward.4} parent=1 // pred_fallthru
      _
    // Predicated region
    $region22: #{seq2seq_forward.4} parent=1 // pred_check
      _
    $region23: #{seq2seq_forward.4} parent=1 // pred_check_branch
      %27 = sbr.rel (0) target = $region25
    $region24: #{seq2seq_forward.4} parent=1 // pred_region
      _
    $region25: #{seq2seq_forward.4} parent=1 // pred_fallthru
      _
    %p28 = scmp.eq.s32.totalorder 0, 0
    // Predicated region
    $region26: #{seq2seq_forward.4} parent=1 // pred_check
      %p29 = pneg %p28
    $region27: #{seq2seq_forward.4} parent=1 // pred_check_branch
      %31 = sbr.rel (%p29) target = $region29
    $region28: #{seq2seq_forward.4} parent=1 // pred_region
      %v32 = vld [vmem:[%s4] sm:$0xff]
      %33 = vst [vmem:[#allocation3] sm:$0xff] %v32
      %v34 = vld [vmem:[%s5] sm:$0xff]
      %35 = vst [vmem:[#allocation4] sm:$0xff] %v34
    $region29: #{seq2seq_forward.4} parent=1 // pred_fallthru
      _
    %v36 = vld [vmem:[%s0] sm:$0xff]
    %v37 = vld [vmem:[%s0 + $0x8] sm:$0xff]
    %v38 = vld [vmem:[%s0 + $0x10] sm:$0xff]
    %v39 = vld [vmem:[%s0 + $0x18] sm:$0xff]
    %v40 = vld [vmem:[%s0 + $0x20] sm:$0xff]
    %v41 = vld [vmem:[%s0 + $0x28] sm:$0xff]
    %v42 = vld [vmem:[%s0 + $0x30] sm:$0xff]
    %v43 = vld [vmem:[%s0 + $0x38] sm:$0xff]
    %v44 = vpack.c.bf16 %v37, %v36
    %v45 = vpack.c.bf16 %v39, %v38
    %v46 = vpack.c.bf16 %v41, %v40
    %v47 = vpack.c.bf16 %v43, %v42
    %v48 = vld [vmem:[%s1] sm:$0xff]
    %v49 = vld [vmem:[%s1 + $0x8] sm:$0xff]
    %v50 = vld [vmem:[%s1 + $0x10] sm:$0xff]
    %v51 = vld [vmem:[%s1 + $0x18] sm:$0xff]
    %v52 = vld [vmem:[%s1 + $0x20] sm:$0xff]
    %v53 = vld [vmem:[%s1 + $0x28] sm:$0xff]
    %v54 = vld [vmem:[%s1 + $0x30] sm:$0xff]
    %v55 = vld [vmem:[%s1 + $0x38] sm:$0xff]
    %v56 = vld [vmem:[%s1 + $0x40] sm:$0xff]
    %v57 = vld [vmem:[%s1 + $0x48] sm:$0xff]
    %v58 = vld [vmem:[%s1 + $0x50] sm:$0xff]
    %v59 = vld [vmem:[%s1 + $0x58] sm:$0xff]
    %v60 = vld [vmem:[%s1 + $0x60] sm:$0xff]
    %v61 = vld [vmem:[%s1 + $0x68] sm:$0xff]
    %v62 = vld [vmem:[%s1 + $0x70] sm:$0xff]
    %v63 = vld [vmem:[%s1 + $0x78] sm:$0xff]
    %v64 = vld [vmem:[%s1 + $0x80] sm:$0xff]
    %v65 = vld [vmem:[%s1 + $0x88] sm:$0xff]
    %v66 = vld [vmem:[%s1 + $0x90] sm:$0xff]
    %v67 = vld [vmem:[%s1 + $0x98] sm:$0xff]
    %v68 = vld [vmem:[%s1 + $0xa0] sm:$0xff]
    %v69 = vld [vmem:[%s1 + $0xa8] sm:$0xff]
    %v70 = vld [vmem:[%s1 + $0xb0] sm:$0xff]
    %v71 = vld [vmem:[%s1 + $0xb8] sm:$0xff]
    %v72 = vld [vmem:[%s1 + $0xc0] sm:$0xff]
    %v73 = vld [vmem:[%s1 + $0xc8] sm:$0xff]
    %v74 = vld [vmem:[%s1 + $0xd0] sm:$0xff]
    %v75 = vld [vmem:[%s1 + $0xd8] sm:$0xff]
    %v76 = vld [vmem:[%s1 + $0xe0] sm:$0xff]
    %v77 = vld [vmem:[%s1 + $0xe8] sm:$0xff]
    %v78 = vld [vmem:[%s1 + $0xf0] sm:$0xff]
    %v79 = vld [vmem:[%s1 + $0xf8] sm:$0xff]
    %v80 = vld [vmem:[%s2] sm:$0xf]
    %v82 = vperm.slane %v80, 0
    %v83 = vperm.slane %v80, 1
    %v84 = vperm.slane %v80, 2
    %v85 = vperm.slane %v80, 3
    %v122 = vunpack.c.l.b16 %v48
    %v123 = vunpack.c.h.b16 %v48
    %v124 = vunpack.c.l.b16 %v49
    %v125 = vunpack.c.h.b16 %v49
    %v126 = vunpack.c.l.b16 %v50
    %v127 = vunpack.c.h.b16 %v50
    %v128 = vunpack.c.l.b16 %v51
    %v129 = vunpack.c.h.b16 %v51
    %v130 = vunpack.c.l.b16 %v52
    %v131 = vunpack.c.h.b16 %v52
    %v132 = vunpack.c.l.b16 %v53
    %v133 = vunpack.c.h.b16 %v53
    %v134 = vunpack.c.l.b16 %v54
    %v135 = vunpack.c.h.b16 %v54
    %v136 = vunpack.c.l.b16 %v55
    %v137 = vunpack.c.h.b16 %v55
    %v138 = vunpack.c.l.b16 %v56
    %v139 = vunpack.c.h.b16 %v56
    %v140 = vunpack.c.l.b16 %v57
    %v141 = vunpack.c.h.b16 %v57
    %v142 = vunpack.c.l.b16 %v58
    %v143 = vunpack.c.h.b16 %v58
    %v144 = vunpack.c.l.b16 %v59
    %v145 = vunpack.c.h.b16 %v59
    %v146 = vunpack.c.l.b16 %v60
    %v147 = vunpack.c.h.b16 %v60
    %v148 = vunpack.c.l.b16 %v61
    %v149 = vunpack.c.h.b16 %v61
    %v150 = vunpack.c.l.b16 %v62
    %v151 = vunpack.c.h.b16 %v62
    %v152 = vunpack.c.l.b16 %v63
    %v153 = vunpack.c.h.b16 %v63
    %v154 = vunpack.c.l.b16 %v64
    %v155 = vunpack.c.h.b16 %v64
    %v156 = vunpack.c.l.b16 %v65
    %v157 = vunpack.c.h.b16 %v65
    %v158 = vunpack.c.l.b16 %v66
    %v159 = vunpack.c.h.b16 %v66
    %v160 = vunpack.c.l.b16 %v67
    %v161 = vunpack.c.h.b16 %v67
    %v162 = vunpack.c.l.b16 %v68
    %v163 = vunpack.c.h.b16 %v68
    %v164 = vunpack.c.l.b16 %v69
    %v165 = vunpack.c.h.b16 %v69
    %v166 = vunpack.c.l.b16 %v70
    %v167 = vunpack.c.h.b16 %v70
    %v168 = vunpack.c.l.b16 %v71
    %v169 = vunpack.c.h.b16 %v71
    %v170 = vunpack.c.l.b16 %v72
    %v171 = vunpack.c.h.b16 %v72
    %v172 = vunpack.c.l.b16 %v73
    %v173 = vunpack.c.h.b16 %v73
    %v174 = vunpack.c.l.b16 %v74
    %v175 = vunpack.c.h.b16 %v74
    %v176 = vunpack.c.l.b16 %v75
    %v177 = vunpack.c.h.b16 %v75
    %v178 = vunpack.c.l.b16 %v76
    %v179 = vunpack.c.h.b16 %v76
    %v180 = vunpack.c.l.b16 %v77
    %v181 = vunpack.c.h.b16 %v77
    %v182 = vunpack.c.l.b16 %v78
    %v183 = vunpack.c.h.b16 %v78
    %v184 = vunpack.c.l.b16 %v79
    %v185 = vunpack.c.h.b16 %v79
    %v186 = vpack.c.b16 %v126, %v122
    %v187 = vpack.c.b16 %v127, %v123
    %v188 = vpack.c.b16 %v128, %v124
    %v189 = vpack.c.b16 %v129, %v125
    %v190 = vpack.c.b16 %v134, %v130
    %v191 = vpack.c.b16 %v135, %v131
    %v192 = vpack.c.b16 %v136, %v132
    %v193 = vpack.c.b16 %v137, %v133
    %v194 = vpack.c.b16 %v142, %v138
    %v195 = vpack.c.b16 %v143, %v139
    %v196 = vpack.c.b16 %v144, %v140
    %v197 = vpack.c.b16 %v145, %v141
    %v198 = vpack.c.b16 %v150, %v146
    %v199 = vpack.c.b16 %v151, %v147
    %v200 = vpack.c.b16 %v152, %v148
    %v201 = vpack.c.b16 %v153, %v149
    %v202 = vpack.c.b16 %v158, %v154
    %v203 = vpack.c.b16 %v159, %v155
    %v204 = vpack.c.b16 %v160, %v156
    %v205 = vpack.c.b16 %v161, %v157
    %v206 = vpack.c.b16 %v166, %v162
    %v207 = vpack.c.b16 %v167, %v163
    %v208 = vpack.c.b16 %v168, %v164
    %v209 = vpack.c.b16 %v169, %v165
    %v210 = vpack.c.b16 %v174, %v170
    %v211 = vpack.c.b16 %v175, %v171
    %v212 = vpack.c.b16 %v176, %v172
    %v213 = vpack.c.b16 %v177, %v173
    %v214 = vpack.c.b16 %v182, %v178
    %v215 = vpack.c.b16 %v183, %v179
    %v216 = vpack.c.b16 %v184, %v180
    %v217 = vpack.c.b16 %v185, %v181
    %250 = vmatpush.bf16.msra.mxu0 %v214
    %251 = vmatpush.bf16.msra.mxu0 %v210
    %252 = vmatpush.bf16.msra.mxu0 %v206
    %253 = vmatpush.bf16.msra.mxu0 %v202
    %254 = vmatpush.bf16.msra.mxu0 %v198
    %255 = vmatpush.bf16.msra.mxu0 %v194
    %256 = vmatpush.bf16.msra.mxu0 %v190
    %257 = vmatpush.bf16.msra.mxu0 %v186
    %258 = vmatmul.bf16.gmra.mxu0 %v44
    %v259 = vpop.f32.mrf.mxu0
    %v260 = vadd.f32 %v82, %v259
    %v261 = vpop.f32.mrf.mxu0
    %v262 = vadd.f32 %v82, %v261
    %263 = vmatmul.bf16.gmra.mxu0 %v45
    %v264 = vpop.f32.mrf.mxu0
    %v265 = vadd.f32 %v82, %v264
    %v266 = vpop.f32.mrf.mxu0
    %v267 = vadd.f32 %v82, %v266
    %268 = vmatmul.bf16.gmra.mxu0 %v46
    %v269 = vpop.f32.mrf.mxu0
    %v270 = vadd.f32 %v82, %v269
    %v271 = vpop.f32.mrf.mxu0
    %v272 = vadd.f32 %v82, %v271
    %273 = vmatmul.bf16.gmra.mxu0 %v47
    %v274 = vpop.f32.mrf.mxu0
    %v275 = vadd.f32 %v82, %v274
    %v276 = vpop.f32.mrf.mxu0
    %v277 = vadd.f32 %v82, %v276
    %278 = vdwg.mxu0
    %279 = vmatpush.bf16.msra.mxu0 %v215
    %280 = vmatpush.bf16.msra.mxu0 %v211
    %281 = vmatpush.bf16.msra.mxu0 %v207
    %282 = vmatpush.bf16.msra.mxu0 %v203
    %283 = vmatpush.bf16.msra.mxu0 %v199
    %284 = vmatpush.bf16.msra.mxu0 %v195
    %285 = vmatpush.bf16.msra.mxu0 %v191
    %286 = vmatpush.bf16.msra.mxu0 %v187
    %287 = vmatmul.bf16.gmra.mxu0 %v44
    %v288 = vpop.f32.mrf.mxu0
    %v289 = vadd.f32 %v83, %v288
    %v290 = vpop.f32.mrf.mxu0
    %v291 = vadd.f32 %v83, %v290
    %292 = vmatmul.bf16.gmra.mxu0 %v45
    %v293 = vpop.f32.mrf.mxu0
    %v294 = vadd.f32 %v83, %v293
    %v295 = vpop.f32.mrf.mxu0
    %v296 = vadd.f32 %v83, %v295
    %297 = vmatmul.bf16.gmra.mxu0 %v46
    %v298 = vpop.f32.mrf.mxu0
    %v299 = vadd.f32 %v83, %v298
    %v300 = vpop.f32.mrf.mxu0
    %v301 = vadd.f32 %v83, %v300
    %302 = vmatmul.bf16.gmra.mxu0 %v47
    %v303 = vpop.f32.mrf.mxu0
    %v304 = vadd.f32 %v83, %v303
    %v305 = vpop.f32.mrf.mxu0
    %v306 = vadd.f32 %v83, %v305
    %307 = vdwg.mxu0
    %308 = vmatpush.bf16.msra.mxu0 %v216
    %309 = vmatpush.bf16.msra.mxu0 %v212
    %310 = vmatpush.bf16.msra.mxu0 %v208
    %311 = vmatpush.bf16.msra.mxu0 %v204
    %312 = vmatpush.bf16.msra.mxu0 %v200
    %313 = vmatpush.bf16.msra.mxu0 %v196
    %314 = vmatpush.bf16.msra.mxu0 %v192
    %315 = vmatpush.bf16.msra.mxu0 %v188
    %316 = vmatmul.bf16.gmra.mxu0 %v44
    %v317 = vpop.f32.mrf.mxu0
    %v318 = vadd.f32 %v84, %v317
    %v319 = vpop.f32.mrf.mxu0
    %v320 = vadd.f32 %v84, %v319
    %321 = vmatmul.bf16.gmra.mxu0 %v45
    %v322 = vpop.f32.mrf.mxu0
    %v323 = vadd.f32 %v84, %v322
    %v324 = vpop.f32.mrf.mxu0
    %v325 = vadd.f32 %v84, %v324
    %326 = vmatmul.bf16.gmra.mxu0 %v46
    %v327 = vpop.f32.mrf.mxu0
    %v328 = vadd.f32 %v84, %v327
    %v329 = vpop.f32.mrf.mxu0
    %v330 = vadd.f32 %v84, %v329
    %331 = vmatmul.bf16.gmra.mxu0 %v47
    %v332 = vpop.f32.mrf.mxu0
    %v333 = vadd.f32 %v84, %v332
    %v334 = vpop.f32.mrf.mxu0
    %v335 = vadd.f32 %v84, %v334
    %336 = vdwg.mxu0
    %337 = vmatpush.bf16.msra.mxu0 %v217
    %338 = vmatpush.bf16.msra.mxu0 %v213
    %339 = vmatpush.bf16.msra.mxu0 %v209
    %340 = vmatpush.bf16.msra.mxu0 %v205
    %341 = vmatpush.bf16.msra.mxu0 %v201
    %342 = vmatpush.bf16.msra.mxu0 %v197
    %343 = vmatpush.bf16.msra.mxu0 %v193
    %344 = vmatpush.bf16.msra.mxu0 %v189
    %345 = vmatmul.bf16.gmra.mxu0 %v44
    %v346 = vpop.f32.mrf.mxu0
    %v347 = vadd.f32 %v85, %v346
    %v348 = vpop.f32.mrf.mxu0
    %v349 = vadd.f32 %v85, %v348
    %350 = vmatmul.bf16.gmra.mxu0 %v45
    %v351 = vpop.f32.mrf.mxu0
    %v352 = vadd.f32 %v85, %v351
    %v353 = vpop.f32.mrf.mxu0
    %v354 = vadd.f32 %v85, %v353
    %355 = vmatmul.bf16.gmra.mxu0 %v46
    %v356 = vpop.f32.mrf.mxu0
    %v357 = vadd.f32 %v85, %v356
    %v358 = vpop.f32.mrf.mxu0
    %v359 = vadd.f32 %v85, %v358
    %360 = vmatmul.bf16.gmra.mxu0 %v47
    %v361 = vpop.f32.mrf.mxu0
    %v362 = vadd.f32 %v85, %v361
    %v363 = vpop.f32.mrf.mxu0
    %v364 = vadd.f32 %v85, %v363
    %365 = vdwg.mxu0
    %366 = vst [vmem:[#allocation2] sm:$0xff] %v260
    %367 = vst [vmem:[#allocation2 + $0x8] sm:$0xff] %v289
    %368 = vst [vmem:[#allocation2 + $0x10] sm:$0xff] %v318
    %369 = vst [vmem:[#allocation2 + $0x18] sm:$0xff] %v347
    %370 = vst [vmem:[#allocation2 + $0x20] sm:$0xff] %v262
    %371 = vst [vmem:[#allocation2 + $0x28] sm:$0xff] %v291
    %372 = vst [vmem:[#allocation2 + $0x30] sm:$0xff] %v320
    %373 = vst [vmem:[#allocation2 + $0x38] sm:$0xff] %v349
    %374 = vst [vmem:[#allocation2 + $0x40] sm:$0xff] %v265
    %375 = vst [vmem:[#allocation2 + $0x48] sm:$0xff] %v294
    %376 = vst [vmem:[#allocation2 + $0x50] sm:$0xff] %v323
    %377 = vst [vmem:[#allocation2 + $0x58] sm:$0xff] %v352
    %378 = vst [vmem:[#allocation2 + $0x60] sm:$0xff] %v267
    %379 = vst [vmem:[#allocation2 + $0x68] sm:$0xff] %v296
    %380 = vst [vmem:[#allocation2 + $0x70] sm:$0xff] %v325
    %381 = vst [vmem:[#allocation2 + $0x78] sm:$0xff] %v354
    %382 = vst [vmem:[#allocation2 + $0x80] sm:$0xff] %v270
    %383 = vst [vmem:[#allocation2 + $0x88] sm:$0xff] %v299
    %384 = vst [vmem:[#allocation2 + $0x90] sm:$0xff] %v328
    %385 = vst [vmem:[#allocation2 + $0x98] sm:$0xff] %v357
    %386 = vst [vmem:[#allocation2 + $0xa0] sm:$0xff] %v272
    %387 = vst [vmem:[#allocation2 + $0xa8] sm:$0xff] %v301
    %388 = vst [vmem:[#allocation2 + $0xb0] sm:$0xff] %v330
    %389 = vst [vmem:[#allocation2 + $0xb8] sm:$0xff] %v359
    %390 = vst [vmem:[#allocation2 + $0xc0] sm:$0xff] %v275
    %391 = vst [vmem:[#allocation2 + $0xc8] sm:$0xff] %v304
    %392 = vst [vmem:[#allocation2 + $0xd0] sm:$0xff] %v333
    %393 = vst [vmem:[#allocation2 + $0xd8] sm:$0xff] %v362
    %394 = vst [vmem:[#allocation2 + $0xe0] sm:$0xff] %v277
    %395 = vst [vmem:[#allocation2 + $0xe8] sm:$0xff] %v306
    %396 = vst [vmem:[#allocation2 + $0xf0] sm:$0xff] %v335
    %397 = vst [vmem:[#allocation2 + $0xf8] sm:$0xff] %v364
    %v398 = vld [vmem:[#allocation3] sm:$0xff]
    %v399 = vld [vmem:[#allocation4] sm:$0xff]
    %v400 = vld [vmem:[#allocation2] sm:$0xff]
    %v401 = vld [vmem:[#allocation2 + $0x8] sm:$0xff]
    %v402 = vld [vmem:[#allocation2 + $0x10] sm:$0xff]
    %v403 = vld [vmem:[#allocation2 + $0x18] sm:$0xff]
    %v404 = vpack.c.bf16 %v398, %v398
    %v405 = vld [vmem:[%s3] sm:$0xff]
    %v406 = vld [vmem:[%s3 + $0x8] sm:$0xff]
    %v407 = vld [vmem:[%s3 + $0x10] sm:$0xff]
    %v408 = vld [vmem:[%s3 + $0x18] sm:$0xff]
    %v409 = vld [vmem:[%s3 + $0x20] sm:$0xff]
    %v410 = vld [vmem:[%s3 + $0x28] sm:$0xff]
    %v411 = vld [vmem:[%s3 + $0x30] sm:$0xff]
    %v412 = vld [vmem:[%s3 + $0x38] sm:$0xff]
    %v413 = vld [vmem:[%s3 + $0x40] sm:$0xff]
    %v414 = vld [vmem:[%s3 + $0x48] sm:$0xff]
    %v415 = vld [vmem:[%s3 + $0x50] sm:$0xff]
    %v416 = vld [vmem:[%s3 + $0x58] sm:$0xff]
    %v417 = vld [vmem:[%s3 + $0x60] sm:$0xff]
    %v418 = vld [vmem:[%s3 + $0x68] sm:$0xff]
    %v419 = vld [vmem:[%s3 + $0x70] sm:$0xff]
    %v420 = vld [vmem:[%s3 + $0x78] sm:$0xff]
    %v421 = vld [vmem:[%s3 + $0x80] sm:$0xff]
    %v422 = vld [vmem:[%s3 + $0x88] sm:$0xff]
    %v423 = vld [vmem:[%s3 + $0x90] sm:$0xff]
    %v424 = vld [vmem:[%s3 + $0x98] sm:$0xff]
    %v425 = vld [vmem:[%s3 + $0xa0] sm:$0xff]
    %v426 = vld [vmem:[%s3 + $0xa8] sm:$0xff]
    %v427 = vld [vmem:[%s3 + $0xb0] sm:$0xff]
    %v428 = vld [vmem:[%s3 + $0xb8] sm:$0xff]
    %v429 = vld [vmem:[%s3 + $0xc0] sm:$0xff]
    %v430 = vld [vmem:[%s3 + $0xc8] sm:$0xff]
    %v431 = vld [vmem:[%s3 + $0xd0] sm:$0xff]
    %v432 = vld [vmem:[%s3 + $0xd8] sm:$0xff]
    %v433 = vld [vmem:[%s3 + $0xe0] sm:$0xff]
    %v434 = vld [vmem:[%s3 + $0xe8] sm:$0xff]
    %v435 = vld [vmem:[%s3 + $0xf0] sm:$0xff]
    %v436 = vld [vmem:[%s3 + $0xf8] sm:$0xff]
    %v469 = vunpack.c.l.b16 %v405
    %v470 = vunpack.c.h.b16 %v405
    %v471 = vunpack.c.l.b16 %v406
    %v472 = vunpack.c.h.b16 %v406
    %v473 = vunpack.c.l.b16 %v407
    %v474 = vunpack.c.h.b16 %v407
    %v475 = vunpack.c.l.b16 %v408
    %v476 = vunpack.c.h.b16 %v408
    %v477 = vunpack.c.l.b16 %v409
    %v478 = vunpack.c.h.b16 %v409
    %v479 = vunpack.c.l.b16 %v410
    %v480 = vunpack.c.h.b16 %v410
    %v481 = vunpack.c.l.b16 %v411
    %v482 = vunpack.c.h.b16 %v411
    %v483 = vunpack.c.l.b16 %v412
    %v484 = vunpack.c.h.b16 %v412
    %v485 = vunpack.c.l.b16 %v413
    %v486 = vunpack.c.h.b16 %v413
    %v487 = vunpack.c.l.b16 %v414
    %v488 = vunpack.c.h.b16 %v414
    %v489 = vunpack.c.l.b16 %v415
    %v490 = vunpack.c.h.b16 %v415
    %v491 = vunpack.c.l.b16 %v416
    %v492 = vunpack.c.h.b16 %v416
    %v493 = vunpack.c.l.b16 %v417
    %v494 = vunpack.c.h.b16 %v417
    %v495 = vunpack.c.l.b16 %v418
    %v496 = vunpack.c.h.b16 %v418
    %v497 = vunpack.c.l.b16 %v419
    %v498 = vunpack.c.h.b16 %v419
    %v499 = vunpack.c.l.b16 %v420
    %v500 = vunpack.c.h.b16 %v420
    %v501 = vunpack.c.l.b16 %v421
    %v502 = vunpack.c.h.b16 %v421
    %v503 = vunpack.c.l.b16 %v422
    %v504 = vunpack.c.h.b16 %v422
    %v505 = vunpack.c.l.b16 %v423
    %v506 = vunpack.c.h.b16 %v423
    %v507 = vunpack.c.l.b16 %v424
    %v508 = vunpack.c.h.b16 %v424
    %v509 = vunpack.c.l.b16 %v425
    %v510 = vunpack.c.h.b16 %v425
    %v511 = vunpack.c.l.b16 %v426
    %v512 = vunpack.c.h.b16 %v426
    %v513 = vunpack.c.l.b16 %v427
    %v514 = vunpack.c.h.b16 %v427
    %v515 = vunpack.c.l.b16 %v428
    %v516 = vunpack.c.h.b16 %v428
    %v517 = vunpack.c.l.b16 %v429
    %v518 = vunpack.c.h.b16 %v429
    %v519 = vunpack.c.l.b16 %v430
    %v520 = vunpack.c.h.b16 %v430
    %v521 = vunpack.c.l.b16 %v431
    %v522 = vunpack.c.h.b16 %v431
    %v523 = vunpack.c.l.b16 %v432
    %v524 = vunpack.c.h.b16 %v432
    %v525 = vunpack.c.l.b16 %v433
    %v526 = vunpack.c.h.b16 %v433
    %v527 = vunpack.c.l.b16 %v434
    %v528 = vunpack.c.h.b16 %v434
    %v529 = vunpack.c.l.b16 %v435
    %v530 = vunpack.c.h.b16 %v435
    %v531 = vunpack.c.l.b16 %v436
    %v532 = vunpack.c.h.b16 %v436
    %v533 = vpack.c.b16 %v473, %v469
    %v534 = vpack.c.b16 %v474, %v470
    %v535 = vpack.c.b16 %v475, %v471
    %v536 = vpack.c.b16 %v476, %v472
    %v537 = vpack.c.b16 %v481, %v477
    %v538 = vpack.c.b16 %v482, %v478
    %v539 = vpack.c.b16 %v483, %v479
    %v540 = vpack.c.b16 %v484, %v480
    %v541 = vpack.c.b16 %v489, %v485
    %v542 = vpack.c.b16 %v490, %v486
    %v543 = vpack.c.b16 %v491, %v487
    %v544 = vpack.c.b16 %v492, %v488
    %v545 = vpack.c.b16 %v497, %v493
    %v546 = vpack.c.b16 %v498, %v494
    %v547 = vpack.c.b16 %v499, %v495
    %v548 = vpack.c.b16 %v500, %v496
    %v549 = vpack.c.b16 %v505, %v501
    %v550 = vpack.c.b16 %v506, %v502
    %v551 = vpack.c.b16 %v507, %v503
    %v552 = vpack.c.b16 %v508, %v504
    %v553 = vpack.c.b16 %v513, %v509
    %v554 = vpack.c.b16 %v514, %v510
    %v555 = vpack.c.b16 %v515, %v511
    %v556 = vpack.c.b16 %v516, %v512
    %v557 = vpack.c.b16 %v521, %v517
    %v558 = vpack.c.b16 %v522, %v518
    %v559 = vpack.c.b16 %v523, %v519
    %v560 = vpack.c.b16 %v524, %v520
    %v561 = vpack.c.b16 %v529, %v525
    %v562 = vpack.c.b16 %v530, %v526
    %v563 = vpack.c.b16 %v531, %v527
    %v564 = vpack.c.b16 %v532, %v528
    %597 = vmatpush.bf16.msra.mxu0 %v561
    %598 = vmatpush.bf16.msra.mxu0 %v557
    %599 = vmatpush.bf16.msra.mxu0 %v553
    %600 = vmatpush.bf16.msra.mxu0 %v549
    %601 = vmatpush.bf16.msra.mxu0 %v545
    %602 = vmatpush.bf16.msra.mxu0 %v541
    %603 = vmatpush.bf16.msra.mxu0 %v537
    %604 = vmatpush.bf16.msra.mxu0 %v533
    %605 = vmatmul.bf16.gmra.mxu0 %v404
    %v606 = vpop.f32.mrf.mxu0
    %v607 = vadd.f32 0.0, %v606
    %v608 = vpop.f32.mrf.mxu0
    %609 = vdwg.mxu0
    %610 = vmatpush.bf16.msra.mxu0 %v562
    %611 = vmatpush.bf16.msra.mxu0 %v558
    %612 = vmatpush.bf16.msra.mxu0 %v554
    %613 = vmatpush.bf16.msra.mxu0 %v550
    %614 = vmatpush.bf16.msra.mxu0 %v546
    %615 = vmatpush.bf16.msra.mxu0 %v542
    %616 = vmatpush.bf16.msra.mxu0 %v538
    %617 = vmatpush.bf16.msra.mxu0 %v534
    %618 = vmatmul.bf16.gmra.mxu0 %v404
    %v619 = vpop.f32.mrf.mxu0
    %v620 = vadd.f32 0.0, %v619
    %v621 = vpop.f32.mrf.mxu0
    %622 = vdwg.mxu0
    %623 = vmatpush.bf16.msra.mxu0 %v563
    %624 = vmatpush.bf16.msra.mxu0 %v559
    %625 = vmatpush.bf16.msra.mxu0 %v555
    %626 = vmatpush.bf16.msra.mxu0 %v551
    %627 = vmatpush.bf16.msra.mxu0 %v547
    %628 = vmatpush.bf16.msra.mxu0 %v543
    %629 = vmatpush.bf16.msra.mxu0 %v539
    %630 = vmatpush.bf16.msra.mxu0 %v535
    %631 = vmatmul.bf16.gmra.mxu0 %v404
    %v632 = vpop.f32.mrf.mxu0
    %v633 = vadd.f32 0.0, %v632
    %v634 = vpop.f32.mrf.mxu0
    %635 = vdwg.mxu0
    %636 = vmatpush.bf16.msra.mxu0 %v564
    %637 = vmatpush.bf16.msra.mxu0 %v560
    %638 = vmatpush.bf16.msra.mxu0 %v556
    %639 = vmatpush.bf16.msra.mxu0 %v552
    %640 = vmatpush.bf16.msra.mxu0 %v548
    %641 = vmatpush.bf16.msra.mxu0 %v544
    %642 = vmatpush.bf16.msra.mxu0 %v540
    %643 = vmatpush.bf16.msra.mxu0 %v536
    %644 = vmatmul.bf16.gmra.mxu0 %v404
    %v645 = vpop.f32.mrf.mxu0
    %v646 = vadd.f32 0.0, %v645
    %v647 = vpop.f32.mrf.mxu0
    %648 = vdwg.mxu0
    %v649 = vadd.f32 %v400, %v607
    %v650 = vadd.f32 %v401, %v620
    %v651 = vadd.f32 %v402, %v633
    %v652 = vadd.f32 %v403, %v646
    %v653 = vxor.u32 %v649, 2147483648
    %v654 = vmul.f32 %v653, 1.442695
    %v655 = vpow.pop %v654
    %v656 = vadd.f32 %v655, 1.0
    %v657 = vrcp.pop %v656
    %v658 = vmul.f32 %v656, %v657
    %v659 = vsub.f32 1.0, %v658
    %v660 = vmul.f32 %v657, %v659
    %v661 = vadd.f32 %v657, %v660
    %vm662 = vweird.f32 %v656
    %vm663 = vweird.f32 %v657
    %vm664 = vmor %vm662, %vm663
    %v665 = vsel %vm664, %v657, %v661
    %v666 = vand.u32 2147483647, %v656
    %vm667 = vcmp.eq.f32.partialorder %v666, 8.507059e+37
    %v668 = vand.u32 %v656, 2147483648
    %v669 = vor.u32 1.1754944e-38, %v668
    %v670 = vsel %vm667, %v669, %v665
    %v671 = vmul.f32 1.0, %v670
    %v672 = vxor.u32 %v650, 2147483648
    %v673 = vmul.f32 %v672, 1.442695
    %v674 = vpow.pop %v673
    %v675 = vadd.f32 %v674, 1.0
    %v676 = vrcp.pop %v675
    %v677 = vmul.f32 %v675, %v676
    %v678 = vsub.f32 1.0, %v677
    %v679 = vmul.f32 %v676, %v678
    %v680 = vadd.f32 %v676, %v679
    %vm681 = vweird.f32 %v675
    %vm682 = vweird.f32 %v676
    %vm683 = vmor %vm681, %vm682
    %v684 = vsel %vm683, %v676, %v680
    %v685 = vand.u32 2147483647, %v675
    %vm686 = vcmp.eq.f32.partialorder %v685, 8.507059e+37
    %v687 = vand.u32 %v675, 2147483648
    %v688 = vor.u32 1.1754944e-38, %v687
    %v689 = vsel %vm686, %v688, %v684
    %v690 = vmul.f32 1.0, %v689
    %v691 = vtanh.pop %v651
    %v692 = vxor.u32 %v652, 2147483648
    %v693 = vmul.f32 %v692, 1.442695
    %v694 = vpow.pop %v693
    %v695 = vadd.f32 %v694, 1.0
    %v696 = vrcp.pop %v695
    %v697 = vmul.f32 %v695, %v696
    %v698 = vsub.f32 1.0, %v697
    %v699 = vmul.f32 %v696, %v698
    %v700 = vadd.f32 %v696, %v699
    %vm701 = vweird.f32 %v695
    %vm702 = vweird.f32 %v696
    %vm703 = vmor %vm701, %vm702
    %v704 = vsel %vm703, %v696, %v700
    %v705 = vand.u32 2147483647, %v695
    %vm706 = vcmp.eq.f32.partialorder %v705, 8.507059e+37
    %v707 = vand.u32 %v695, 2147483648
    %v708 = vor.u32 1.1754944e-38, %v707
    %v709 = vsel %vm706, %v708, %v704
    %v710 = vmul.f32 1.0, %v709
    %v711 = vmul.f32 %v690, %v399
    %v712 = vmul.f32 %v671, %v691
    %v713 = vadd.f32 %v711, %v712
    %v714 = vtanh.pop %v713
    %v715 = vmul.f32 %v710, %v714
    %716 = vst [vmem:[%s6] sm:$0xff] %v715
    %v717 = vld [vmem:[#allocation2 + $0x20] sm:$0xff]
    %v718 = vld [vmem:[#allocation2 + $0x28] sm:$0xff]
    %v719 = vld [vmem:[#allocation2 + $0x30] sm:$0xff]
    %v720 = vld [vmem:[#allocation2 + $0x38] sm:$0xff]
    %v721 = vpack.c.bf16 %v715, %v715
    %v722 = vld [vmem:[%s3] sm:$0xff]
    %v723 = vld [vmem:[%s3 + $0x8] sm:$0xff]
    %v724 = vld [vmem:[%s3 + $0x10] sm:$0xff]
    %v725 = vld [vmem:[%s3 + $0x18] sm:$0xff]
    %v726 = vld [vmem:[%s3 + $0x20] sm:$0xff]
    %v727 = vld [vmem:[%s3 + $0x28] sm:$0xff]
    %v728 = vld [vmem:[%s3 + $0x30] sm:$0xff]
    %v729 = vld [vmem:[%s3 + $0x38] sm:$0xff]
    %v730 = vld [vmem:[%s3 + $0x40] sm:$0xff]
    %v731 = vld [vmem:[%s3 + $0x48] sm:$0xff]
    %v732 = vld [vmem:[%s3 + $0x50] sm:$0xff]
    %v733 = vld [vmem:[%s3 + $0x58] sm:$0xff]
    %v734 = vld [vmem:[%s3 + $0x60] sm:$0xff]
    %v735 = vld [vmem:[%s3 + $0x68] sm:$0xff]
    %v736 = vld [vmem:[%s3 + $0x70] sm:$0xff]
    %v737 = vld [vmem:[%s3 + $0x78] sm:$0xff]
    %v738 = vld [vmem:[%s3 + $0x80] sm:$0xff]
    %v739 = vld [vmem:[%s3 + $0x88] sm:$0xff]
    %v740 = vld [vmem:[%s3 + $0x90] sm:$0xff]
    %v741 = vld [vmem:[%s3 + $0x98] sm:$0xff]
    %v742 = vld [vmem:[%s3 + $0xa0] sm:$0xff]
    %v743 = vld [vmem:[%s3 + $0xa8] sm:$0xff]
    %v744 = vld [vmem:[%s3 + $0xb0] sm:$0xff]
    %v745 = vld [vmem:[%s3 + $0xb8] sm:$0xff]
    %v746 = vld [vmem:[%s3 + $0xc0] sm:$0xff]
    %v747 = vld [vmem:[%s3 + $0xc8] sm:$0xff]
    %v748 = vld [vmem:[%s3 + $0xd0] sm:$0xff]
    %v749 = vld [vmem:[%s3 + $0xd8] sm:$0xff]
    %v750 = vld [vmem:[%s3 + $0xe0] sm:$0xff]
    %v751 = vld [vmem:[%s3 + $0xe8] sm:$0xff]
    %v752 = vld [vmem:[%s3 + $0xf0] sm:$0xff]
    %v753 = vld [vmem:[%s3 + $0xf8] sm:$0xff]
    %v786 = vunpack.c.l.b16 %v722
    %v787 = vunpack.c.h.b16 %v722
    %v788 = vunpack.c.l.b16 %v723
    %v789 = vunpack.c.h.b16 %v723
    %v790 = vunpack.c.l.b16 %v724
    %v791 = vunpack.c.h.b16 %v724
    %v792 = vunpack.c.l.b16 %v725
    %v793 = vunpack.c.h.b16 %v725
    %v794 = vunpack.c.l.b16 %v726
    %v795 = vunpack.c.h.b16 %v726
    %v796 = vunpack.c.l.b16 %v727
    %v797 = vunpack.c.h.b16 %v727
    %v798 = vunpack.c.l.b16 %v728
    %v799 = vunpack.c.h.b16 %v728
    %v800 = vunpack.c.l.b16 %v729
    %v801 = vunpack.c.h.b16 %v729
    %v802 = vunpack.c.l.b16 %v730
    %v803 = vunpack.c.h.b16 %v730
    %v804 = vunpack.c.l.b16 %v731
    %v805 = vunpack.c.h.b16 %v731
    %v806 = vunpack.c.l.b16 %v732
    %v807 = vunpack.c.h.b16 %v732
    %v808 = vunpack.c.l.b16 %v733
    %v809 = vunpack.c.h.b16 %v733
    %v810 = vunpack.c.l.b16 %v734
    %v811 = vunpack.c.h.b16 %v734
    %v812 = vunpack.c.l.b16 %v735
    %v813 = vunpack.c.h.b16 %v735
    %v814 = vunpack.c.l.b16 %v736
    %v815 = vunpack.c.h.b16 %v736
    %v816 = vunpack.c.l.b16 %v737
    %v817 = vunpack.c.h.b16 %v737
    %v818 = vunpack.c.l.b16 %v738
    %v819 = vunpack.c.h.b16 %v738
    %v820 = vunpack.c.l.b16 %v739
    %v821 = vunpack.c.h.b16 %v739
    %v822 = vunpack.c.l.b16 %v740
    %v823 = vunpack.c.h.b16 %v740
    %v824 = vunpack.c.l.b16 %v741
    %v825 = vunpack.c.h.b16 %v741
    %v826 = vunpack.c.l.b16 %v742
    %v827 = vunpack.c.h.b16 %v742
    %v828 = vunpack.c.l.b16 %v743
    %v829 = vunpack.c.h.b16 %v743
    %v830 = vunpack.c.l.b16 %v744
    %v831 = vunpack.c.h.b16 %v744
    %v832 = vunpack.c.l.b16 %v745
    %v833 = vunpack.c.h.b16 %v745
    %v834 = vunpack.c.l.b16 %v746
    %v835 = vunpack.c.h.b16 %v746
    %v836 = vunpack.c.l.b16 %v747
    %v837 = vunpack.c.h.b16 %v747
    %v838 = vunpack.c.l.b16 %v748
    %v839 = vunpack.c.h.b16 %v748
    %v840 = vunpack.c.l.b16 %v749
    %v841 = vunpack.c.h.b16 %v749
    %v842 = vunpack.c.l.b16 %v750
    %v843 = vunpack.c.h.b16 %v750
    %v844 = vunpack.c.l.b16 %v751
    %v845 = vunpack.c.h.b16 %v751
    %v846 = vunpack.c.l.b16 %v752
    %v847 = vunpack.c.h.b16 %v752
    %v848 = vunpack.c.l.b16 %v753
    %v849 = vunpack.c.h.b16 %v753
    %v850 = vpack.c.b16 %v790, %v786
    %v851 = vpack.c.b16 %v791, %v787
    %v852 = vpack.c.b16 %v792, %v788
    %v853 = vpack.c.b16 %v793, %v789
    %v854 = vpack.c.b16 %v798, %v794
    %v855 = vpack.c.b16 %v799, %v795
    %v856 = vpack.c.b16 %v800, %v796
    %v857 = vpack.c.b16 %v801, %v797
    %v858 = vpack.c.b16 %v806, %v802
    %v859 = vpack.c.b16 %v807, %v803
    %v860 = vpack.c.b16 %v808, %v804
    %v861 = vpack.c.b16 %v809, %v805
    %v862 = vpack.c.b16 %v814, %v810
    %v863 = vpack.c.b16 %v815, %v811
    %v864 = vpack.c.b16 %v816, %v812
    %v865 = vpack.c.b16 %v817, %v813
    %v866 = vpack.c.b16 %v822, %v818
    %v867 = vpack.c.b16 %v823, %v819
    %v868 = vpack.c.b16 %v824, %v820
    %v869 = vpack.c.b16 %v825, %v821
    %v870 = vpack.c.b16 %v830, %v826
    %v871 = vpack.c.b16 %v831, %v827
    %v872 = vpack.c.b16 %v832, %v828
    %v873 = vpack.c.b16 %v833, %v829
    %v874 = vpack.c.b16 %v838, %v834
    %v875 = vpack.c.b16 %v839, %v835
    %v876 = vpack.c.b16 %v840, %v836
    %v877 = vpack.c.b16 %v841, %v837
    %v878 = vpack.c.b16 %v846, %v842
    %v879 = vpack.c.b16 %v847, %v843
    %v880 = vpack.c.b16 %v848, %v844
    %v881 = vpack.c.b16 %v849, %v845
    %914 = vmatpush.bf16.msra.mxu0 %v878
    %915 = vmatpush.bf16.msra.mxu0 %v874
    %916 = vmatpush.bf16.msra.mxu0 %v870
    %917 = vmatpush.bf16.msra.mxu0 %v866
    %918 = vmatpush.bf16.msra.mxu0 %v862
    %919 = vmatpush.bf16.msra.mxu0 %v858
    %920 = vmatpush.bf16.msra.mxu0 %v854
    %921 = vmatpush.bf16.msra.mxu0 %v850
    %922 = vmatmul.bf16.gmra.mxu0 %v721
    %v923 = vpop.f32.mrf.mxu0
    %v924 = vadd.f32 0.0, %v923
    %v925 = vpop.f32.mrf.mxu0
    %926 = vdwg.mxu0
    %927 = vmatpush.bf16.msra.mxu0 %v879
    %928 = vmatpush.bf16.msra.mxu0 %v875
    %929 = vmatpush.bf16.msra.mxu0 %v871
    %930 = vmatpush.bf16.msra.mxu0 %v867
    %931 = vmatpush.bf16.msra.mxu0 %v863
    %932 = vmatpush.bf16.msra.mxu0 %v859
    %933 = vmatpush.bf16.msra.mxu0 %v855
    %934 = vmatpush.bf16.msra.mxu0 %v851
    %935 = vmatmul.bf16.gmra.mxu0 %v721
    %v936 = vpop.f32.mrf.mxu0
    %v937 = vadd.f32 0.0, %v936
    %v938 = vpop.f32.mrf.mxu0
    %939 = vdwg.mxu0
    %940 = vmatpush.bf16.msra.mxu0 %v880
    %941 = vmatpush.bf16.msra.mxu0 %v876
    %942 = vmatpush.bf16.msra.mxu0 %v872
    %943 = vmatpush.bf16.msra.mxu0 %v868
    %944 = vmatpush.bf16.msra.mxu0 %v864
    %945 = vmatpush.bf16.msra.mxu0 %v860
    %946 = vmatpush.bf16.msra.mxu0 %v856
    %947 = vmatpush.bf16.msra.mxu0 %v852
    %948 = vmatmul.bf16.gmra.mxu0 %v721
    %v949 = vpop.f32.mrf.mxu0
    %v950 = vadd.f32 0.0, %v949
    %v951 = vpop.f32.mrf.mxu0
    %952 = vdwg.mxu0
    %953 = vmatpush.bf16.msra.mxu0 %v881
    %954 = vmatpush.bf16.msra.mxu0 %v877
    %955 = vmatpush.bf16.msra.mxu0 %v873
    %956 = vmatpush.bf16.msra.mxu0 %v869
    %957 = vmatpush.bf16.msra.mxu0 %v865
    %958 = vmatpush.bf16.msra.mxu0 %v861
    %959 = vmatpush.bf16.msra.mxu0 %v857
    %960 = vmatpush.bf16.msra.mxu0 %v853
    %961 = vmatmul.bf16.gmra.mxu0 %v721
    %v962 = vpop.f32.mrf.mxu0
    %v963 = vadd.f32 0.0, %v962
    %v964 = vpop.f32.mrf.mxu0
    %965 = vdwg.mxu0
    %v966 = vadd.f32 %v717, %v924
    %v967 = vadd.f32 %v718, %v937
    %v968 = vadd.f32 %v719, %v950
    %v969 = vadd.f32 %v720, %v963
    %v970 = vxor.u32 %v966, 2147483648
    %v971 = vmul.f32 %v970, 1.442695
    %v972 = vpow.pop %v971
    %v973 = vadd.f32 %v972, 1.0
    %v974 = vrcp.pop %v973
    %v975 = vmul.f32 %v973, %v974
    %v976 = vsub.f32 1.0, %v975
    %v977 = vmul.f32 %v974, %v976
    %v978 = vadd.f32 %v974, %v977
    %vm979 = vweird.f32 %v973
    %vm980 = vweird.f32 %v974
    %vm981 = vmor %vm979, %vm980
    %v982 = vsel %vm981, %v974, %v978
    %v983 = vand.u32 2147483647, %v973
    %vm984 = vcmp.eq.f32.partialorder %v983, 8.507059e+37
    %v985 = vand.u32 %v973, 2147483648
    %v986 = vor.u32 1.1754944e-38, %v985
    %v987 = vsel %vm984, %v986, %v982
    %v988 = vmul.f32 1.0, %v987
    %v989 = vxor.u32 %v967, 2147483648
    %v990 = vmul.f32 %v989, 1.442695
    %v991 = vpow.pop %v990
    %v992 = vadd.f32 %v991, 1.0
    %v993 = vrcp.pop %v992
    %v994 = vmul.f32 %v992, %v993
    %v995 = vsub.f32 1.0, %v994
    %v996 = vmul.f32 %v993, %v995
    %v997 = vadd.f32 %v993, %v996
    %vm998 = vweird.f32 %v992
    %vm999 = vweird.f32 %v993
    %vm1000 = vmor %vm998, %vm999
    %v1001 = vsel %vm1000, %v993, %v997
    %v1002 = vand.u32 2147483647, %v992
    %vm1003 = vcmp.eq.f32.partialorder %v1002, 8.507059e+37
    %v1004 = vand.u32 %v992, 2147483648
    %v1005 = vor.u32 1.1754944e-38, %v1004
    %v1006 = vsel %vm1003, %v1005, %v1001
    %v1007 = vmul.f32 1.0, %v1006
    %v1008 = vtanh.pop %v968
    %v1009 = vxor.u32 %v969, 2147483648
    %v1010 = vmul.f32 %v1009, 1.442695
    %v1011 = vpow.pop %v1010
    %v1012 = vadd.f32 %v1011, 1.0
    %v1013 = vrcp.pop %v1012
    %v1014 = vmul.f32 %v1012, %v1013
    %v1015 = vsub.f32 1.0, %v1014
    %v1016 = vmul.f32 %v1013, %v1015
    %v1017 = vadd.f32 %v1013, %v1016
    %vm1018 = vweird.f32 %v1012
    %vm1019 = vweird.f32 %v1013
    %vm1020 = vmor %vm1018, %vm1019
    %v1021 = vsel %vm1020, %v1013, %v1017
    %v1022 = vand.u32 2147483647, %v1012
    %vm1023 = vcmp.eq.f32.partialorder %v1022, 8.507059e+37
    %v1024 = vand.u32 %v1012, 2147483648
    %v1025 = vor.u32 1.1754944e-38, %v1024
    %v1026 = vsel %vm1023, %v1025, %v1021
    %v1027 = vmul.f32 1.0, %v1026
    %v1028 = vmul.f32 %v1007, %v713
    %v1029 = vmul.f32 %v988, %v1008
    %v1030 = vadd.f32 %v1028, %v1029
    %v1031 = vtanh.pop %v1030
    %v1032 = vmul.f32 %v1027, %v1031
    %1033 = vst [vmem:[%s6 + $0x8] sm:$0xff] %v1032
    %v1034 = vld [vmem:[#allocation2 + $0x40] sm:$0xff]
    %v1035 = vld [vmem:[#allocation2 + $0x48] sm:$0xff]
    %v1036 = vld [vmem:[#allocation2 + $0x50] sm:$0xff]
    %v1037 = vld [vmem:[#allocation2 + $0x58] sm:$0xff]
    %v1038 = vpack.c.bf16 %v1032, %v1032
    %v1039 = vld [vmem:[%s3] sm:$0xff]
    %v1040 = vld [vmem:[%s3 + $0x8] sm:$0xff]
    %v1041 = vld [vmem:[%s3 + $0x10] sm:$0xff]
    %v1042 = vld [vmem:[%s3 + $0x18] sm:$0xff]
    %v1043 = vld [vmem:[%s3 + $0x20] sm:$0xff]
    %v1044 = vld [vmem:[%s3 + $0x28] sm:$0xff]
    %v1045 = vld [vmem:[%s3 + $0x30] sm:$0xff]
    %v1046 = vld [vmem:[%s3 + $0x38] sm:$0xff]
    %v1047 = vld [vmem:[%s3 + $0x40] sm:$0xff]
    %v1048 = vld [vmem:[%s3 + $0x48] sm:$0xff]
    %v1049 = vld [vmem:[%s3 + $0x50] sm:$0xff]
    %v1050 = vld [vmem:[%s3 + $0x58] sm:$0xff]
    %v1051 = vld [vmem:[%s3 + $0x60] sm:$0xff]
    %v1052 = vld [vmem:[%s3 + $0x68] sm:$0xff]
    %v1053 = vld [vmem:[%s3 + $0x70] sm:$0xff]
    %v1054 = vld [vmem:[%s3 + $0x78] sm:$0xff]
    %v1055 = vld [vmem:[%s3 + $0x80] sm:$0xff]
    %v1056 = vld [vmem:[%s3 + $0x88] sm:$0xff]
    %v1057 = vld [vmem:[%s3 + $0x90] sm:$0xff]
    %v1058 = vld [vmem:[%s3 + $0x98] sm:$0xff]
    %v1059 = vld [vmem:[%s3 + $0xa0] sm:$0xff]
    %v1060 = vld [vmem:[%s3 + $0xa8] sm:$0xff]
    %v1061 = vld [vmem:[%s3 + $0xb0] sm:$0xff]
    %v1062 = vld [vmem:[%s3 + $0xb8] sm:$0xff]
    %v1063 = vld [vmem:[%s3 + $0xc0] sm:$0xff]
    %v1064 = vld [vmem:[%s3 + $0xc8] sm:$0xff]
    %v1065 = vld [vmem:[%s3 + $0xd0] sm:$0xff]
    %v1066 = vld [vmem:[%s3 + $0xd8] sm:$0xff]
    %v1067 = vld [vmem:[%s3 + $0xe0] sm:$0xff]
    %v1068 = vld [vmem:[%s3 + $0xe8] sm:$0xff]
    %v1069 = vld [vmem:[%s3 + $0xf0] sm:$0xff]
    %v1070 = vld [vmem:[%s3 + $0xf8] sm:$0xff]
    %v1103 = vunpack.c.l.b16 %v1039
    %v1104 = vunpack.c.h.b16 %v1039
    %v1105 = vunpack.c.l.b16 %v1040
    %v1106 = vunpack.c.h.b16 %v1040
    %v1107 = vunpack.c.l.b16 %v1041
    %v1108 = vunpack.c.h.b16 %v1041
    %v1109 = vunpack.c.l.b16 %v1042
    %v1110 = vunpack.c.h.b16 %v1042
    %v1111 = vunpack.c.l.b16 %v1043
    %v1112 = vunpack.c.h.b16 %v1043
    %v1113 = vunpack.c.l.b16 %v1044
    %v1114 = vunpack.c.h.b16 %v1044
    %v1115 = vunpack.c.l.b16 %v1045
    %v1116 = vunpack.c.h.b16 %v1045
    %v1117 = vunpack.c.l.b16 %v1046
    %v1118 = vunpack.c.h.b16 %v1046
    %v1119 = vunpack.c.l.b16 %v1047
    %v1120 = vunpack.c.h.b16 %v1047
    %v1121 = vunpack.c.l.b16 %v1048
    %v1122 = vunpack.c.h.b16 %v1048
    %v1123 = vunpack.c.l.b16 %v1049
    %v1124 = vunpack.c.h.b16 %v1049
    %v1125 = vunpack.c.l.b16 %v1050
    %v1126 = vunpack.c.h.b16 %v1050
    %v1127 = vunpack.c.l.b16 %v1051
    %v1128 = vunpack.c.h.b16 %v1051
    %v1129 = vunpack.c.l.b16 %v1052
    %v1130 = vunpack.c.h.b16 %v1052
    %v1131 = vunpack.c.l.b16 %v1053
    %v1132 = vunpack.c.h.b16 %v1053
    %v1133 = vunpack.c.l.b16 %v1054
    %v1134 = vunpack.c.h.b16 %v1054
    %v1135 = vunpack.c.l.b16 %v1055
    %v1136 = vunpack.c.h.b16 %v1055
    %v1137 = vunpack.c.l.b16 %v1056
    %v1138 = vunpack.c.h.b16 %v1056
    %v1139 = vunpack.c.l.b16 %v1057
    %v1140 = vunpack.c.h.b16 %v1057
    %v1141 = vunpack.c.l.b16 %v1058
    %v1142 = vunpack.c.h.b16 %v1058
    %v1143 = vunpack.c.l.b16 %v1059
    %v1144 = vunpack.c.h.b16 %v1059
    %v1145 = vunpack.c.l.b16 %v1060
    %v1146 = vunpack.c.h.b16 %v1060
    %v1147 = vunpack.c.l.b16 %v1061
    %v1148 = vunpack.c.h.b16 %v1061
    %v1149 = vunpack.c.l.b16 %v1062
    %v1150 = vunpack.c.h.b16 %v1062
    %v1151 = vunpack.c.l.b16 %v1063
    %v1152 = vunpack.c.h.b16 %v1063
    %v1153 = vunpack.c.l.b16 %v1064
    %v1154 = vunpack.c.h.b16 %v1064
    %v1155 = vunpack.c.l.b16 %v1065
    %v1156 = vunpack.c.h.b16 %v1065
    %v1157 = vunpack.c.l.b16 %v1066
    %v1158 = vunpack.c.h.b16 %v1066
    %v1159 = vunpack.c.l.b16 %v1067
    %v1160 = vunpack.c.h.b16 %v1067
    %v1161 = vunpack.c.l.b16 %v1068
    %v1162 = vunpack.c.h.b16 %v1068
    %v1163 = vunpack.c.l.b16 %v1069
    %v1164 = vunpack.c.h.b16 %v1069
    %v1165 = vunpack.c.l.b16 %v1070
    %v1166 = vunpack.c.h.b16 %v1070
    %v1167 = vpack.c.b16 %v1107, %v1103
    %v1168 = vpack.c.b16 %v1108, %v1104
    %v1169 = vpack.c.b16 %v1109, %v1105
    %v1170 = vpack.c.b16 %v1110, %v1106
    %v1171 = vpack.c.b16 %v1115, %v1111
    %v1172 = vpack.c.b16 %v1116, %v1112
    %v1173 = vpack.c.b16 %v1117, %v1113
    %v1174 = vpack.c.b16 %v1118, %v1114
    %v1175 = vpack.c.b16 %v1123, %v1119
    %v1176 = vpack.c.b16 %v1124, %v1120
    %v1177 = vpack.c.b16 %v1125, %v1121
    %v1178 = vpack.c.b16 %v1126, %v1122
    %v1179 = vpack.c.b16 %v1131, %v1127
    %v1180 = vpack.c.b16 %v1132, %v1128
    %v1181 = vpack.c.b16 %v1133, %v1129
    %v1182 = vpack.c.b16 %v1134, %v1130
    %v1183 = vpack.c.b16 %v1139, %v1135
    %v1184 = vpack.c.b16 %v1140, %v1136
    %v1185 = vpack.c.b16 %v1141, %v1137
    %v1186 = vpack.c.b16 %v1142, %v1138
    %v1187 = vpack.c.b16 %v1147, %v1143
    %v1188 = vpack.c.b16 %v1148, %v1144
    %v1189 = vpack.c.b16 %v1149, %v1145
    %v1190 = vpack.c.b16 %v1150, %v1146
    %v1191 = vpack.c.b16 %v1155, %v1151
    %v1192 = vpack.c.b16 %v1156, %v1152
    %v1193 = vpack.c.b16 %v1157, %v1153
    %v1194 = vpack.c.b16 %v1158, %v1154
    %v1195 = vpack.c.b16 %v1163, %v1159
    %v1196 = vpack.c.b16 %v1164, %v1160
    %v1197 = vpack.c.b16 %v1165, %v1161
    %v1198 = vpack.c.b16 %v1166, %v1162
    %1231 = vmatpush.bf16.msra.mxu0 %v1195
    %1232 = vmatpush.bf16.msra.mxu0 %v1191
    %1233 = vmatpush.bf16.msra.mxu0 %v1187
    %1234 = vmatpush.bf16.msra.mxu0 %v1183
    %1235 = vmatpush.bf16.msra.mxu0 %v1179
    %1236 = vmatpush.bf16.msra.mxu0 %v1175
    %1237 = vmatpush.bf16.msra.mxu0 %v1171
    %1238 = vmatpush.bf16.msra.mxu0 %v1167
    %1239 = vmatmul.bf16.gmra.mxu0 %v1038
    %v1240 = vpop.f32.mrf.mxu0
    %v1241 = vadd.f32 0.0, %v1240
    %v1242 = vpop.f32.mrf.mxu0
    %1243 = vdwg.mxu0
    %1244 = vmatpush.bf16.msra.mxu0 %v1196
    %1245 = vmatpush.bf16.msra.mxu0 %v1192
    %1246 = vmatpush.bf16.msra.mxu0 %v1188
    %1247 = vmatpush.bf16.msra.mxu0 %v1184
    %1248 = vmatpush.bf16.msra.mxu0 %v1180
    %1249 = vmatpush.bf16.msra.mxu0 %v1176
    %1250 = vmatpush.bf16.msra.mxu0 %v1172
    %1251 = vmatpush.bf16.msra.mxu0 %v1168
    %1252 = vmatmul.bf16.gmra.mxu0 %v1038
    %v1253 = vpop.f32.mrf.mxu0
    %v1254 = vadd.f32 0.0, %v1253
    %v1255 = vpop.f32.mrf.mxu0
    %1256 = vdwg.mxu0
    %1257 = vmatpush.bf16.msra.mxu0 %v1197
    %1258 = vmatpush.bf16.msra.mxu0 %v1193
    %1259 = vmatpush.bf16.msra.mxu0 %v1189
    %1260 = vmatpush.bf16.msra.mxu0 %v1185
    %1261 = vmatpush.bf16.msra.mxu0 %v1181
    %1262 = vmatpush.bf16.msra.mxu0 %v1177
    %1263 = vmatpush.bf16.msra.mxu0 %v1173
    %1264 = vmatpush.bf16.msra.mxu0 %v1169
    %1265 = vmatmul.bf16.gmra.mxu0 %v1038
    %v1266 = vpop.f32.mrf.mxu0
    %v1267 = vadd.f32 0.0, %v1266
    %v1268 = vpop.f32.mrf.mxu0
    %1269 = vdwg.mxu0
    %1270 = vmatpush.bf16.msra.mxu0 %v1198
    %1271 = vmatpush.bf16.msra.mxu0 %v1194
    %1272 = vmatpush.bf16.msra.mxu0 %v1190
    %1273 = vmatpush.bf16.msra.mxu0 %v1186
    %1274 = vmatpush.bf16.msra.mxu0 %v1182
    %1275 = vmatpush.bf16.msra.mxu0 %v1178
    %1276 = vmatpush.bf16.msra.mxu0 %v1174
    %1277 = vmatpush.bf16.msra.mxu0 %v1170
    %1278 = vmatmul.bf16.gmra.mxu0 %v1038
    %v1279 = vpop.f32.mrf.mxu0
    %v1280 = vadd.f32 0.0, %v1279
    %v1281 = vpop.f32.mrf.mxu0
    %1282 = vdwg.mxu0
    %v1283 = vadd.f32 %v1034, %v1241
    %v1284 = vadd.f32 %v1035, %v1254
    %v1285 = vadd.f32 %v1036, %v1267
    %v1286 = vadd.f32 %v1037, %v1280
    %v1287 = vxor.u32 %v1283, 2147483648
    %v1288 = vmul.f32 %v1287, 1.442695
    %v1289 = vpow.pop %v1288
    %v1290 = vadd.f32 %v1289, 1.0
    %v1291 = vrcp.pop %v1290
    %v1292 = vmul.f32 %v1290, %v1291
    %v1293 = vsub.f32 1.0, %v1292
    %v1294 = vmul.f32 %v1291, %v1293
    %v1295 = vadd.f32 %v1291, %v1294
    %vm1296 = vweird.f32 %v1290
    %vm1297 = vweird.f32 %v1291
    %vm1298 = vmor %vm1296, %vm1297
    %v1299 = vsel %vm1298, %v1291, %v1295
    %v1300 = vand.u32 2147483647, %v1290
    %vm1301 = vcmp.eq.f32.partialorder %v1300, 8.507059e+37
    %v1302 = vand.u32 %v1290, 2147483648
    %v1303 = vor.u32 1.1754944e-38, %v1302
    %v1304 = vsel %vm1301, %v1303, %v1299
    %v1305 = vmul.f32 1.0, %v1304
    %v1306 = vxor.u32 %v1284, 2147483648
    %v1307 = vmul.f32 %v1306, 1.442695
    %v1308 = vpow.pop %v1307
    %v1309 = vadd.f32 %v1308, 1.0
    %v1310 = vrcp.pop %v1309
    %v1311 = vmul.f32 %v1309, %v1310
    %v1312 = vsub.f32 1.0, %v1311
    %v1313 = vmul.f32 %v1310, %v1312
    %v1314 = vadd.f32 %v1310, %v1313
    %vm1315 = vweird.f32 %v1309
    %vm1316 = vweird.f32 %v1310
    %vm1317 = vmor %vm1315, %vm1316
    %v1318 = vsel %vm1317, %v1310, %v1314
    %v1319 = vand.u32 2147483647, %v1309
    %vm1320 = vcmp.eq.f32.partialorder %v1319, 8.507059e+37
    %v1321 = vand.u32 %v1309, 2147483648
    %v1322 = vor.u32 1.1754944e-38, %v1321
    %v1323 = vsel %vm1320, %v1322, %v1318
    %v1324 = vmul.f32 1.0, %v1323
    %v1325 = vtanh.pop %v1285
    %v1326 = vxor.u32 %v1286, 2147483648
    %v1327 = vmul.f32 %v1326, 1.442695
    %v1328 = vpow.pop %v1327
    %v1329 = vadd.f32 %v1328, 1.0
    %v1330 = vrcp.pop %v1329
    %v1331 = vmul.f32 %v1329, %v1330
    %v1332 = vsub.f32 1.0, %v1331
    %v1333 = vmul.f32 %v1330, %v1332
    %v1334 = vadd.f32 %v1330, %v1333
    %vm1335 = vweird.f32 %v1329
    %vm1336 = vweird.f32 %v1330
    %vm1337 = vmor %vm1335, %vm1336
    %v1338 = vsel %vm1337, %v1330, %v1334
    %v1339 = vand.u32 2147483647, %v1329
    %vm1340 = vcmp.eq.f32.partialorder %v1339, 8.507059e+37
    %v1341 = vand.u32 %v1329, 2147483648
    %v1342 = vor.u32 1.1754944e-38, %v1341
    %v1343 = vsel %vm1340, %v1342, %v1338
    %v1344 = vmul.f32 1.0, %v1343
    %v1345 = vmul.f32 %v1324, %v1030
    %v1346 = vmul.f32 %v1305, %v1325
    %v1347 = vadd.f32 %v1345, %v1346
    %v1348 = vtanh.pop %v1347
    %v1349 = vmul.f32 %v1344, %v1348
    %1350 = vst [vmem:[%s6 + $0x10] sm:$0xff] %v1349
    %v1351 = vld [vmem:[#allocation2 + $0x60] sm:$0xff]
    %v1352 = vld [vmem:[#allocation2 + $0x68] sm:$0xff]
    %v1353 = vld [vmem:[#allocation2 + $0x70] sm:$0xff]
    %v1354 = vld [vmem:[#allocation2 + $0x78] sm:$0xff]
    %v1355 = vpack.c.bf16 %v1349, %v1349
    %v1356 = vld [vmem:[%s3] sm:$0xff]
    %v1357 = vld [vmem:[%s3 + $0x8] sm:$0xff]
    %v1358 = vld [vmem:[%s3 + $0x10] sm:$0xff]
    %v1359 = vld [vmem:[%s3 + $0x18] sm:$0xff]
    %v1360 = vld [vmem:[%s3 + $0x20] sm:$0xff]
    %v1361 = vld [vmem:[%s3 + $0x28] sm:$0xff]
    %v1362 = vld [vmem:[%s3 + $0x30] sm:$0xff]
    %v1363 = vld [vmem:[%s3 + $0x38] sm:$0xff]
    %v1364 = vld [vmem:[%s3 + $0x40] sm:$0xff]
    %v1365 = vld [vmem:[%s3 + $0x48] sm:$0xff]
    %v1366 = vld [vmem:[%s3 + $0x50] sm:$0xff]
    %v1367 = vld [vmem:[%s3 + $0x58] sm:$0xff]
    %v1368 = vld [vmem:[%s3 + $0x60] sm:$0xff]
    %v1369 = vld [vmem:[%s3 + $0x68] sm:$0xff]
    %v1370 = vld [vmem:[%s3 + $0x70] sm:$0xff]
    %v1371 = vld [vmem:[%s3 + $0x78] sm:$0xff]
    %v1372 = vld [vmem:[%s3 + $0x80] sm:$0xff]
    %v1373 = vld [vmem:[%s3 + $0x88] sm:$0xff]
    %v1374 = vld [vmem:[%s3 + $0x90] sm:$0xff]
    %v1375 = vld [vmem:[%s3 + $0x98] sm:$0xff]
    %v1376 = vld [vmem:[%s3 + $0xa0] sm:$0xff]
    %v1377 = vld [vmem:[%s3 + $0xa8] sm:$0xff]
    %v1378 = vld [vmem:[%s3 + $0xb0] sm:$0xff]
    %v1379 = vld [vmem:[%s3 + $0xb8] sm:$0xff]
    %v1380 = vld [vmem:[%s3 + $0xc0] sm:$0xff]
    %v1381 = vld [vmem:[%s3 + $0xc8] sm:$0xff]
    %v1382 = vld [vmem:[%s3 + $0xd0] sm:$0xff]
    %v1383 = vld [vmem:[%s3 + $0xd8] sm:$0xff]
    %v1384 = vld [vmem:[%s3 + $0xe0] sm:$0xff]
    %v1385 = vld [vmem:[%s3 + $0xe8] sm:$0xff]
    %v1386 = vld [vmem:[%s3 + $0xf0] sm:$0xff]
    %v1387 = vld [vmem:[%s3 + $0xf8] sm:$0xff]
    %v1420 = vunpack.c.l.b16 %v1356
    %v1421 = vunpack.c.h.b16 %v1356
    %v1422 = vunpack.c.l.b16 %v1357
    %v1423 = vunpack.c.h.b16 %v1357
    %v1424 = vunpack.c.l.b16 %v1358
    %v1425 = vunpack.c.h.b16 %v1358
    %v1426 = vunpack.c.l.b16 %v1359
    %v1427 = vunpack.c.h.b16 %v1359
    %v1428 = vunpack.c.l.b16 %v1360
    %v1429 = vunpack.c.h.b16 %v1360
    %v1430 = vunpack.c.l.b16 %v1361
    %v1431 = vunpack.c.h.b16 %v1361
    %v1432 = vunpack.c.l.b16 %v1362
    %v1433 = vunpack.c.h.b16 %v1362
    %v1434 = vunpack.c.l.b16 %v1363
    %v1435 = vunpack.c.h.b16 %v1363
    %v1436 = vunpack.c.l.b16 %v1364
    %v1437 = vunpack.c.h.b16 %v1364
    %v1438 = vunpack.c.l.b16 %v1365
    %v1439 = vunpack.c.h.b16 %v1365
    %v1440 = vunpack.c.l.b16 %v1366
    %v1441 = vunpack.c.h.b16 %v1366
    %v1442 = vunpack.c.l.b16 %v1367
    %v1443 = vunpack.c.h.b16 %v1367
    %v1444 = vunpack.c.l.b16 %v1368
    %v1445 = vunpack.c.h.b16 %v1368
    %v1446 = vunpack.c.l.b16 %v1369
    %v1447 = vunpack.c.h.b16 %v1369
    %v1448 = vunpack.c.l.b16 %v1370
    %v1449 = vunpack.c.h.b16 %v1370
    %v1450 = vunpack.c.l.b16 %v1371
    %v1451 = vunpack.c.h.b16 %v1371
    %v1452 = vunpack.c.l.b16 %v1372
    %v1453 = vunpack.c.h.b16 %v1372
    %v1454 = vunpack.c.l.b16 %v1373
    %v1455 = vunpack.c.h.b16 %v1373
    %v1456 = vunpack.c.l.b16 %v1374
    %v1457 = vunpack.c.h.b16 %v1374
    %v1458 = vunpack.c.l.b16 %v1375
    %v1459 = vunpack.c.h.b16 %v1375
    %v1460 = vunpack.c.l.b16 %v1376
    %v1461 = vunpack.c.h.b16 %v1376
    %v1462 = vunpack.c.l.b16 %v1377
    %v1463 = vunpack.c.h.b16 %v1377
    %v1464 = vunpack.c.l.b16 %v1378
    %v1465 = vunpack.c.h.b16 %v1378
    %v1466 = vunpack.c.l.b16 %v1379
    %v1467 = vunpack.c.h.b16 %v1379
    %v1468 = vunpack.c.l.b16 %v1380
    %v1469 = vunpack.c.h.b16 %v1380
    %v1470 = vunpack.c.l.b16 %v1381
    %v1471 = vunpack.c.h.b16 %v1381
    %v1472 = vunpack.c.l.b16 %v1382
    %v1473 = vunpack.c.h.b16 %v1382
    %v1474 = vunpack.c.l.b16 %v1383
    %v1475 = vunpack.c.h.b16 %v1383
    %v1476 = vunpack.c.l.b16 %v1384
    %v1477 = vunpack.c.h.b16 %v1384
    %v1478 = vunpack.c.l.b16 %v1385
    %v1479 = vunpack.c.h.b16 %v1385
    %v1480 = vunpack.c.l.b16 %v1386
    %v1481 = vunpack.c.h.b16 %v1386
    %v1482 = vunpack.c.l.b16 %v1387
    %v1483 = vunpack.c.h.b16 %v1387
    %v1484 = vpack.c.b16 %v1424, %v1420
    %v1485 = vpack.c.b16 %v1425, %v1421
    %v1486 = vpack.c.b16 %v1426, %v1422
    %v1487 = vpack.c.b16 %v1427, %v1423
    %v1488 = vpack.c.b16 %v1432, %v1428
    %v1489 = vpack.c.b16 %v1433, %v1429
    %v1490 = vpack.c.b16 %v1434, %v1430
    %v1491 = vpack.c.b16 %v1435, %v1431
    %v1492 = vpack.c.b16 %v1440, %v1436
    %v1493 = vpack.c.b16 %v1441, %v1437
    %v1494 = vpack.c.b16 %v1442, %v1438
    %v1495 = vpack.c.b16 %v1443, %v1439
    %v1496 = vpack.c.b16 %v1448, %v1444
    %v1497 = vpack.c.b16 %v1449, %v1445
    %v1498 = vpack.c.b16 %v1450, %v1446
    %v1499 = vpack.c.b16 %v1451, %v1447
    %v1500 = vpack.c.b16 %v1456, %v1452
    %v1501 = vpack.c.b16 %v1457, %v1453
    %v1502 = vpack.c.b16 %v1458, %v1454
    %v1503 = vpack.c.b16 %v1459, %v1455
    %v1504 = vpack.c.b16 %v1464, %v1460
    %v1505 = vpack.c.b16 %v1465, %v1461
    %v1506 = vpack.c.b16 %v1466, %v1462
    %v1507 = vpack.c.b16 %v1467, %v1463
    %v1508 = vpack.c.b16 %v1472, %v1468
    %v1509 = vpack.c.b16 %v1473, %v1469
    %v1510 = vpack.c.b16 %v1474, %v1470
    %v1511 = vpack.c.b16 %v1475, %v1471
    %v1512 = vpack.c.b16 %v1480, %v1476
    %v1513 = vpack.c.b16 %v1481, %v1477
    %v1514 = vpack.c.b16 %v1482, %v1478
    %v1515 = vpack.c.b16 %v1483, %v1479
    %1548 = vmatpush.bf16.msra.mxu0 %v1512
    %1549 = vmatpush.bf16.msra.mxu0 %v1508
    %1550 = vmatpush.bf16.msra.mxu0 %v1504
    %1551 = vmatpush.bf16.msra.mxu0 %v1500
    %1552 = vmatpush.bf16.msra.mxu0 %v1496
    %1553 = vmatpush.bf16.msra.mxu0 %v1492
    %1554 = vmatpush.bf16.msra.mxu0 %v1488
    %1555 = vmatpush.bf16.msra.mxu0 %v1484
    %1556 = vmatmul.bf16.gmra.mxu0 %v1355
    %v1557 = vpop.f32.mrf.mxu0
    %v1558 = vadd.f32 0.0, %v1557
    %v1559 = vpop.f32.mrf.mxu0
    %1560 = vdwg.mxu0
    %1561 = vmatpush.bf16.msra.mxu0 %v1513
    %1562 = vmatpush.bf16.msra.mxu0 %v1509
    %1563 = vmatpush.bf16.msra.mxu0 %v1505
    %1564 = vmatpush.bf16.msra.mxu0 %v1501
    %1565 = vmatpush.bf16.msra.mxu0 %v1497
    %1566 = vmatpush.bf16.msra.mxu0 %v1493
    %1567 = vmatpush.bf16.msra.mxu0 %v1489
    %1568 = vmatpush.bf16.msra.mxu0 %v1485
    %1569 = vmatmul.bf16.gmra.mxu0 %v1355
    %v1570 = vpop.f32.mrf.mxu0
    %v1571 = vadd.f32 0.0, %v1570
    %v1572 = vpop.f32.mrf.mxu0
    %1573 = vdwg.mxu0
    %1574 = vmatpush.bf16.msra.mxu0 %v1514
    %1575 = vmatpush.bf16.msra.mxu0 %v1510
    %1576 = vmatpush.bf16.msra.mxu0 %v1506
    %1577 = vmatpush.bf16.msra.mxu0 %v1502
    %1578 = vmatpush.bf16.msra.mxu0 %v1498
    %1579 = vmatpush.bf16.msra.mxu0 %v1494
    %1580 = vmatpush.bf16.msra.mxu0 %v1490
    %1581 = vmatpush.bf16.msra.mxu0 %v1486
    %1582 = vmatmul.bf16.gmra.mxu0 %v1355
    %v1583 = vpop.f32.mrf.mxu0
    %v1584 = vadd.f32 0.0, %v1583
    %v1585 = vpop.f32.mrf.mxu0
    %1586 = vdwg.mxu0
    %1587 = vmatpush.bf16.msra.mxu0 %v1515
    %1588 = vmatpush.bf16.msra.mxu0 %v1511
    %1589 = vmatpush.bf16.msra.mxu0 %v1507
    %1590 = vmatpush.bf16.msra.mxu0 %v1503
    %1591 = vmatpush.bf16.msra.mxu0 %v1499
    %1592 = vmatpush.bf16.msra.mxu0 %v1495
    %1593 = vmatpush.bf16.msra.mxu0 %v1491
    %1594 = vmatpush.bf16.msra.mxu0 %v1487
    %1595 = vmatmul.bf16.gmra.mxu0 %v1355
    %v1596 = vpop.f32.mrf.mxu0
    %v1597 = vadd.f32 0.0, %v1596
    %v1598 = vpop.f32.mrf.mxu0
    %1599 = vdwg.mxu0
    %v1600 = vadd.f32 %v1351, %v1558
    %v1601 = vadd.f32 %v1352, %v1571
    %v1602 = vadd.f32 %v1353, %v1584
    %v1603 = vadd.f32 %v1354, %v1597
    %v1604 = vxor.u32 %v1600, 2147483648
    %v1605 = vmul.f32 %v1604, 1.442695
    %v1606 = vpow.pop %v1605
    %v1607 = vadd.f32 %v1606, 1.0
    %v1608 = vrcp.pop %v1607
    %v1609 = vmul.f32 %v1607, %v1608
    %v1610 = vsub.f32 1.0, %v1609
    %v1611 = vmul.f32 %v1608, %v1610
    %v1612 = vadd.f32 %v1608, %v1611
    %vm1613 = vweird.f32 %v1607
    %vm1614 = vweird.f32 %v1608
    %vm1615 = vmor %vm1613, %vm1614
    %v1616 = vsel %vm1615, %v1608, %v1612
    %v1617 = vand.u32 2147483647, %v1607
    %vm1618 = vcmp.eq.f32.partialorder %v1617, 8.507059e+37
    %v1619 = vand.u32 %v1607, 2147483648
    %v1620 = vor.u32 1.1754944e-38, %v1619
    %v1621 = vsel %vm1618, %v1620, %v1616
    %v1622 = vmul.f32 1.0, %v1621
    %v1623 = vxor.u32 %v1601, 2147483648
    %v1624 = vmul.f32 %v1623, 1.442695
    %v1625 = vpow.pop %v1624
    %v1626 = vadd.f32 %v1625, 1.0
    %v1627 = vrcp.pop %v1626
    %v1628 = vmul.f32 %v1626, %v1627
    %v1629 = vsub.f32 1.0, %v1628
    %v1630 = vmul.f32 %v1627, %v1629
    %v1631 = vadd.f32 %v1627, %v1630
    %vm1632 = vweird.f32 %v1626
    %vm1633 = vweird.f32 %v1627
    %vm1634 = vmor %vm1632, %vm1633
    %v1635 = vsel %vm1634, %v1627, %v1631
    %v1636 = vand.u32 2147483647, %v1626
    %vm1637 = vcmp.eq.f32.partialorder %v1636, 8.507059e+37
    %v1638 = vand.u32 %v1626, 2147483648
    %v1639 = vor.u32 1.1754944e-38, %v1638
    %v1640 = vsel %vm1637, %v1639, %v1635
    %v1641 = vmul.f32 1.0, %v1640
    %v1642 = vtanh.pop %v1602
    %v1643 = vxor.u32 %v1603, 2147483648
    %v1644 = vmul.f32 %v1643, 1.442695
    %v1645 = vpow.pop %v1644
    %v1646 = vadd.f32 %v1645, 1.0
    %v1647 = vrcp.pop %v1646
    %v1648 = vmul.f32 %v1646, %v1647
    %v1649 = vsub.f32 1.0, %v1648
    %v1650 = vmul.f32 %v1647, %v1649
    %v1651 = vadd.f32 %v1647, %v1650
    %vm1652 = vweird.f32 %v1646
    %vm1653 = vweird.f32 %v1647
    %vm1654 = vmor %vm1652, %vm1653
    %v1655 = vsel %vm1654, %v1647, %v1651
    %v1656 = vand.u32 2147483647, %v1646
    %vm1657 = vcmp.eq.f32.partialorder %v1656, 8.507059e+37
    %v1658 = vand.u32 %v1646, 2147483648
    %v1659 = vor.u32 1.1754944e-38, %v1658
    %v1660 = vsel %vm1657, %v1659, %v1655
    %v1661 = vmul.f32 1.0, %v1660
    %v1662 = vmul.f32 %v1641, %v1347
    %v1663 = vmul.f32 %v1622, %v1642
    %v1664 = vadd.f32 %v1662, %v1663
    %v1665 = vtanh.pop %v1664
    %v1666 = vmul.f32 %v1661, %v1665
    %1667 = vst [vmem:[%s6 + $0x18] sm:$0xff] %v1666
    %v1668 = vld [vmem:[#allocation2 + $0x80] sm:$0xff]
    %v1669 = vld [vmem:[#allocation2 + $0x88] sm:$0xff]
    %v1670 = vld [vmem:[#allocation2 + $0x90] sm:$0xff]
    %v1671 = vld [vmem:[#allocation2 + $0x98] sm:$0xff]
    %v1672 = vpack.c.bf16 %v1666, %v1666
    %v1673 = vld [vmem:[%s3] sm:$0xff]
    %v1674 = vld [vmem:[%s3 + $0x8] sm:$0xff]
    %v1675 = vld [vmem:[%s3 + $0x10] sm:$0xff]
    %v1676 = vld [vmem:[%s3 + $0x18] sm:$0xff]
    %v1677 = vld [vmem:[%s3 + $0x20] sm:$0xff]
    %v1678 = vld [vmem:[%s3 + $0x28] sm:$0xff]
    %v1679 = vld [vmem:[%s3 + $0x30] sm:$0xff]
    %v1680 = vld [vmem:[%s3 + $0x38] sm:$0xff]
    %v1681 = vld [vmem:[%s3 + $0x40] sm:$0xff]
    %v1682 = vld [vmem:[%s3 + $0x48] sm:$0xff]
    %v1683 = vld [vmem:[%s3 + $0x50] sm:$0xff]
    %v1684 = vld [vmem:[%s3 + $0x58] sm:$0xff]
    %v1685 = vld [vmem:[%s3 + $0x60] sm:$0xff]
    %v1686 = vld [vmem:[%s3 + $0x68] sm:$0xff]
    %v1687 = vld [vmem:[%s3 + $0x70] sm:$0xff]
    %v1688 = vld [vmem:[%s3 + $0x78] sm:$0xff]
    %v1689 = vld [vmem:[%s3 + $0x80] sm:$0xff]
    %v1690 = vld [vmem:[%s3 + $0x88] sm:$0xff]
    %v1691 = vld [vmem:[%s3 + $0x90] sm:$0xff]
    %v1692 = vld [vmem:[%s3 + $0x98] sm:$0xff]
    %v1693 = vld [vmem:[%s3 + $0xa0] sm:$0xff]
    %v1694 = vld [vmem:[%s3 + $0xa8] sm:$0xff]
    %v1695 = vld [vmem:[%s3 + $0xb0] sm:$0xff]
    %v1696 = vld [vmem:[%s3 + $0xb8] sm:$0xff]
    %v1697 = vld [vmem:[%s3 + $0xc0] sm:$0xff]
    %v1698 = vld [vmem:[%s3 + $0xc8] sm:$0xff]
    %v1699 = vld [vmem:[%s3 + $0xd0] sm:$0xff]
    %v1700 = vld [vmem:[%s3 + $0xd8] sm:$0xff]
    %v1701 = vld [vmem:[%s3 + $0xe0] sm:$0xff]
    %v1702 = vld [vmem:[%s3 + $0xe8] sm:$0xff]
    %v1703 = vld [vmem:[%s3 + $0xf0] sm:$0xff]
    %v1704 = vld [vmem:[%s3 + $0xf8] sm:$0xff]
    %v1737 = vunpack.c.l.b16 %v1673
    %v1738 = vunpack.c.h.b16 %v1673
    %v1739 = vunpack.c.l.b16 %v1674
    %v1740 = vunpack.c.h.b16 %v1674
    %v1741 = vunpack.c.l.b16 %v1675
    %v1742 = vunpack.c.h.b16 %v1675
    %v1743 = vunpack.c.l.b16 %v1676
    %v1744 = vunpack.c.h.b16 %v1676
    %v1745 = vunpack.c.l.b16 %v1677
    %v1746 = vunpack.c.h.b16 %v1677
    %v1747 = vunpack.c.l.b16 %v1678
    %v1748 = vunpack.c.h.b16 %v1678
    %v1749 = vunpack.c.l.b16 %v1679
    %v1750 = vunpack.c.h.b16 %v1679
    %v1751 = vunpack.c.l.b16 %v1680
    %v1752 = vunpack.c.h.b16 %v1680
    %v1753 = vunpack.c.l.b16 %v1681
    %v1754 = vunpack.c.h.b16 %v1681
    %v1755 = vunpack.c.l.b16 %v1682
    %v1756 = vunpack.c.h.b16 %v1682
    %v1757 = vunpack.c.l.b16 %v1683
    %v1758 = vunpack.c.h.b16 %v1683
    %v1759 = vunpack.c.l.b16 %v1684
    %v1760 = vunpack.c.h.b16 %v1684
    %v1761 = vunpack.c.l.b16 %v1685
    %v1762 = vunpack.c.h.b16 %v1685
    %v1763 = vunpack.c.l.b16 %v1686
    %v1764 = vunpack.c.h.b16 %v1686
    %v1765 = vunpack.c.l.b16 %v1687
    %v1766 = vunpack.c.h.b16 %v1687
    %v1767 = vunpack.c.l.b16 %v1688
    %v1768 = vunpack.c.h.b16 %v1688
    %v1769 = vunpack.c.l.b16 %v1689
    %v1770 = vunpack.c.h.b16 %v1689
    %v1771 = vunpack.c.l.b16 %v1690
    %v1772 = vunpack.c.h.b16 %v1690
    %v1773 = vunpack.c.l.b16 %v1691
    %v1774 = vunpack.c.h.b16 %v1691
    %v1775 = vunpack.c.l.b16 %v1692
    %v1776 = vunpack.c.h.b16 %v1692
    %v1777 = vunpack.c.l.b16 %v1693
    %v1778 = vunpack.c.h.b16 %v1693
    %v1779 = vunpack.c.l.b16 %v1694
    %v1780 = vunpack.c.h.b16 %v1694
    %v1781 = vunpack.c.l.b16 %v1695
    %v1782 = vunpack.c.h.b16 %v1695
    %v1783 = vunpack.c.l.b16 %v1696
    %v1784 = vunpack.c.h.b16 %v1696
    %v1785 = vunpack.c.l.b16 %v1697
    %v1786 = vunpack.c.h.b16 %v1697
    %v1787 = vunpack.c.l.b16 %v1698
    %v1788 = vunpack.c.h.b16 %v1698
    %v1789 = vunpack.c.l.b16 %v1699
    %v1790 = vunpack.c.h.b16 %v1699
    %v1791 = vunpack.c.l.b16 %v1700
    %v1792 = vunpack.c.h.b16 %v1700
    %v1793 = vunpack.c.l.b16 %v1701
    %v1794 = vunpack.c.h.b16 %v1701
    %v1795 = vunpack.c.l.b16 %v1702
    %v1796 = vunpack.c.h.b16 %v1702
    %v1797 = vunpack.c.l.b16 %v1703
    %v1798 = vunpack.c.h.b16 %v1703
    %v1799 = vunpack.c.l.b16 %v1704
    %v1800 = vunpack.c.h.b16 %v1704
    %v1801 = vpack.c.b16 %v1741, %v1737
    %v1802 = vpack.c.b16 %v1742, %v1738
    %v1803 = vpack.c.b16 %v1743, %v1739
    %v1804 = vpack.c.b16 %v1744, %v1740
    %v1805 = vpack.c.b16 %v1749, %v1745
    %v1806 = vpack.c.b16 %v1750, %v1746
    %v1807 = vpack.c.b16 %v1751, %v1747
    %v1808 = vpack.c.b16 %v1752, %v1748
    %v1809 = vpack.c.b16 %v1757, %v1753
    %v1810 = vpack.c.b16 %v1758, %v1754
    %v1811 = vpack.c.b16 %v1759, %v1755
    %v1812 = vpack.c.b16 %v1760, %v1756
    %v1813 = vpack.c.b16 %v1765, %v1761
    %v1814 = vpack.c.b16 %v1766, %v1762
    %v1815 = vpack.c.b16 %v1767, %v1763
    %v1816 = vpack.c.b16 %v1768, %v1764
    %v1817 = vpack.c.b16 %v1773, %v1769
    %v1818 = vpack.c.b16 %v1774, %v1770
    %v1819 = vpack.c.b16 %v1775, %v1771
    %v1820 = vpack.c.b16 %v1776, %v1772
    %v1821 = vpack.c.b16 %v1781, %v1777
    %v1822 = vpack.c.b16 %v1782, %v1778
    %v1823 = vpack.c.b16 %v1783, %v1779
    %v1824 = vpack.c.b16 %v1784, %v1780
    %v1825 = vpack.c.b16 %v1789, %v1785
    %v1826 = vpack.c.b16 %v1790, %v1786
    %v1827 = vpack.c.b16 %v1791, %v1787
    %v1828 = vpack.c.b16 %v1792, %v1788
    %v1829 = vpack.c.b16 %v1797, %v1793
    %v1830 = vpack.c.b16 %v1798, %v1794
    %v1831 = vpack.c.b16 %v1799, %v1795
    %v1832 = vpack.c.b16 %v1800, %v1796
    %1865 = vmatpush.bf16.msra.mxu0 %v1829
    %1866 = vmatpush.bf16.msra.mxu0 %v1825
    %1867 = vmatpush.bf16.msra.mxu0 %v1821
    %1868 = vmatpush.bf16.msra.mxu0 %v1817
    %1869 = vmatpush.bf16.msra.mxu0 %v1813
    %1870 = vmatpush.bf16.msra.mxu0 %v1809
    %1871 = vmatpush.bf16.msra.mxu0 %v1805
    %1872 = vmatpush.bf16.msra.mxu0 %v1801
    %1873 = vmatmul.bf16.gmra.mxu0 %v1672
    %v1874 = vpop.f32.mrf.mxu0
    %v1875 = vadd.f32 0.0, %v1874
    %v1876 = vpop.f32.mrf.mxu0
    %1877 = vdwg.mxu0
    %1878 = vmatpush.bf16.msra.mxu0 %v1830
    %1879 = vmatpush.bf16.msra.mxu0 %v1826
    %1880 = vmatpush.bf16.msra.mxu0 %v1822
    %1881 = vmatpush.bf16.msra.mxu0 %v1818
    %1882 = vmatpush.bf16.msra.mxu0 %v1814
    %1883 = vmatpush.bf16.msra.mxu0 %v1810
    %1884 = vmatpush.bf16.msra.mxu0 %v1806
    %1885 = vmatpush.bf16.msra.mxu0 %v1802
    %1886 = vmatmul.bf16.gmra.mxu0 %v1672
    %v1887 = vpop.f32.mrf.mxu0
    %v1888 = vadd.f32 0.0, %v1887
    %v1889 = vpop.f32.mrf.mxu0
    %1890 = vdwg.mxu0
    %1891 = vmatpush.bf16.msra.mxu0 %v1831
    %1892 = vmatpush.bf16.msra.mxu0 %v1827
    %1893 = vmatpush.bf16.msra.mxu0 %v1823
    %1894 = vmatpush.bf16.msra.mxu0 %v1819
    %1895 = vmatpush.bf16.msra.mxu0 %v1815
    %1896 = vmatpush.bf16.msra.mxu0 %v1811
    %1897 = vmatpush.bf16.msra.mxu0 %v1807
    %1898 = vmatpush.bf16.msra.mxu0 %v1803
    %1899 = vmatmul.bf16.gmra.mxu0 %v1672
    %v1900 = vpop.f32.mrf.mxu0
    %v1901 = vadd.f32 0.0, %v1900
    %v1902 = vpop.f32.mrf.mxu0
    %1903 = vdwg.mxu0
    %1904 = vmatpush.bf16.msra.mxu0 %v1832
    %1905 = vmatpush.bf16.msra.mxu0 %v1828
    %1906 = vmatpush.bf16.msra.mxu0 %v1824
    %1907 = vmatpush.bf16.msra.mxu0 %v1820
    %1908 = vmatpush.bf16.msra.mxu0 %v1816
    %1909 = vmatpush.bf16.msra.mxu0 %v1812
    %1910 = vmatpush.bf16.msra.mxu0 %v1808
    %1911 = vmatpush.bf16.msra.mxu0 %v1804
    %1912 = vmatmul.bf16.gmra.mxu0 %v1672
    %v1913 = vpop.f32.mrf.mxu0
    %v1914 = vadd.f32 0.0, %v1913
    %v1915 = vpop.f32.mrf.mxu0
    %1916 = vdwg.mxu0
    %v1917 = vadd.f32 %v1668, %v1875
    %v1918 = vadd.f32 %v1669, %v1888
    %v1919 = vadd.f32 %v1670, %v1901
    %v1920 = vadd.f32 %v1671, %v1914
    %v1921 = vxor.u32 %v1917, 2147483648
    %v1922 = vmul.f32 %v1921, 1.442695
    %v1923 = vpow.pop %v1922
    %v1924 = vadd.f32 %v1923, 1.0
    %v1925 = vrcp.pop %v1924
    %v1926 = vmul.f32 %v1924, %v1925
    %v1927 = vsub.f32 1.0, %v1926
    %v1928 = vmul.f32 %v1925, %v1927
    %v1929 = vadd.f32 %v1925, %v1928
    %vm1930 = vweird.f32 %v1924
    %vm1931 = vweird.f32 %v1925
    %vm1932 = vmor %vm1930, %vm1931
    %v1933 = vsel %vm1932, %v1925, %v1929
    %v1934 = vand.u32 2147483647, %v1924
    %vm1935 = vcmp.eq.f32.partialorder %v1934, 8.507059e+37
    %v1936 = vand.u32 %v1924, 2147483648
    %v1937 = vor.u32 1.1754944e-38, %v1936
    %v1938 = vsel %vm1935, %v1937, %v1933
    %v1939 = vmul.f32 1.0, %v1938
    %v1940 = vxor.u32 %v1918, 2147483648
    %v1941 = vmul.f32 %v1940, 1.442695
    %v1942 = vpow.pop %v1941
    %v1943 = vadd.f32 %v1942, 1.0
    %v1944 = vrcp.pop %v1943
    %v1945 = vmul.f32 %v1943, %v1944
    %v1946 = vsub.f32 1.0, %v1945
    %v1947 = vmul.f32 %v1944, %v1946
    %v1948 = vadd.f32 %v1944, %v1947
    %vm1949 = vweird.f32 %v1943
    %vm1950 = vweird.f32 %v1944
    %vm1951 = vmor %vm1949, %vm1950
    %v1952 = vsel %vm1951, %v1944, %v1948
    %v1953 = vand.u32 2147483647, %v1943
    %vm1954 = vcmp.eq.f32.partialorder %v1953, 8.507059e+37
    %v1955 = vand.u32 %v1943, 2147483648
    %v1956 = vor.u32 1.1754944e-38, %v1955
    %v1957 = vsel %vm1954, %v1956, %v1952
    %v1958 = vmul.f32 1.0, %v1957
    %v1959 = vtanh.pop %v1919
    %v1960 = vxor.u32 %v1920, 2147483648
    %v1961 = vmul.f32 %v1960, 1.442695
    %v1962 = vpow.pop %v1961
    %v1963 = vadd.f32 %v1962, 1.0
    %v1964 = vrcp.pop %v1963
    %v1965 = vmul.f32 %v1963, %v1964
    %v1966 = vsub.f32 1.0, %v1965
    %v1967 = vmul.f32 %v1964, %v1966
    %v1968 = vadd.f32 %v1964, %v1967
    %vm1969 = vweird.f32 %v1963
    %vm1970 = vweird.f32 %v1964
    %vm1971 = vmor %vm1969, %vm1970
    %v1972 = vsel %vm1971, %v1964, %v1968
    %v1973 = vand.u32 2147483647, %v1963
    %vm1974 = vcmp.eq.f32.partialorder %v1973, 8.507059e+37
    %v1975 = vand.u32 %v1963, 2147483648
    %v1976 = vor.u32 1.1754944e-38, %v1975
    %v1977 = vsel %vm1974, %v1976, %v1972
    %v1978 = vmul.f32 1.0, %v1977
    %v1979 = vmul.f32 %v1958, %v1664
    %v1980 = vmul.f32 %v1939, %v1959
    %v1981 = vadd.f32 %v1979, %v1980
    %v1982 = vtanh.pop %v1981
    %v1983 = vmul.f32 %v1978, %v1982
    %1984 = vst [vmem:[%s6 + $0x20] sm:$0xff] %v1983
    %v1985 = vld [vmem:[#allocation2 + $0xa0] sm:$0xff]
    %v1986 = vld [vmem:[#allocation2 + $0xa8] sm:$0xff]
    %v1987 = vld [vmem:[#allocation2 + $0xb0] sm:$0xff]
    %v1988 = vld [vmem:[#allocation2 + $0xb8] sm:$0xff]
    %v1989 = vpack.c.bf16 %v1983, %v1983
    %v1990 = vld [vmem:[%s3] sm:$0xff]
    %v1991 = vld [vmem:[%s3 + $0x8] sm:$0xff]
    %v1992 = vld [vmem:[%s3 + $0x10] sm:$0xff]
    %v1993 = vld [vmem:[%s3 + $0x18] sm:$0xff]
    %v1994 = vld [vmem:[%s3 + $0x20] sm:$0xff]
    %v1995 = vld [vmem:[%s3 + $0x28] sm:$0xff]
    %v1996 = vld [vmem:[%s3 + $0x30] sm:$0xff]
    %v1997 = vld [vmem:[%s3 + $0x38] sm:$0xff]
    %v1998 = vld [vmem:[%s3 + $0x40] sm:$0xff]
    %v1999 = vld [vmem:[%s3 + $0x48] sm:$0xff]
    %v2000 = vld [vmem:[%s3 + $0x50] sm:$0xff]
    %v2001 = vld [vmem:[%s3 + $0x58] sm:$0xff]
    %v2002 = vld [vmem:[%s3 + $0x60] sm:$0xff]
    %v2003 = vld [vmem:[%s3 + $0x68] sm:$0xff]
    %v2004 = vld [vmem:[%s3 + $0x70] sm:$0xff]
    %v2005 = vld [vmem:[%s3 + $0x78] sm:$0xff]
    %v2006 = vld [vmem:[%s3 + $0x80] sm:$0xff]
    %v2007 = vld [vmem:[%s3 + $0x88] sm:$0xff]
    %v2008 = vld [vmem:[%s3 + $0x90] sm:$0xff]
    %v2009 = vld [vmem:[%s3 + $0x98] sm:$0xff]
    %v2010 = vld [vmem:[%s3 + $0xa0] sm:$0xff]
    %v2011 = vld [vmem:[%s3 + $0xa8] sm:$0xff]
    %v2012 = vld [vmem:[%s3 + $0xb0] sm:$0xff]
    %v2013 = vld [vmem:[%s3 + $0xb8] sm:$0xff]
    %v2014 = vld [vmem:[%s3 + $0xc0] sm:$0xff]
    %v2015 = vld [vmem:[%s3 + $0xc8] sm:$0xff]
    %v2016 = vld [vmem:[%s3 + $0xd0] sm:$0xff]
    %v2017 = vld [vmem:[%s3 + $0xd8] sm:$0xff]
    %v2018 = vld [vmem:[%s3 + $0xe0] sm:$0xff]
    %v2019 = vld [vmem:[%s3 + $0xe8] sm:$0xff]
    %v2020 = vld [vmem:[%s3 + $0xf0] sm:$0xff]
    %v2021 = vld [vmem:[%s3 + $0xf8] sm:$0xff]
    %v2054 = vunpack.c.l.b16 %v1990
    %v2055 = vunpack.c.h.b16 %v1990
    %v2056 = vunpack.c.l.b16 %v1991
    %v2057 = vunpack.c.h.b16 %v1991
    %v2058 = vunpack.c.l.b16 %v1992
    %v2059 = vunpack.c.h.b16 %v1992
    %v2060 = vunpack.c.l.b16 %v1993
    %v2061 = vunpack.c.h.b16 %v1993
    %v2062 = vunpack.c.l.b16 %v1994
    %v2063 = vunpack.c.h.b16 %v1994
    %v2064 = vunpack.c.l.b16 %v1995
    %v2065 = vunpack.c.h.b16 %v1995
    %v2066 = vunpack.c.l.b16 %v1996
    %v2067 = vunpack.c.h.b16 %v1996
    %v2068 = vunpack.c.l.b16 %v1997
    %v2069 = vunpack.c.h.b16 %v1997
    %v2070 = vunpack.c.l.b16 %v1998
    %v2071 = vunpack.c.h.b16 %v1998
    %v2072 = vunpack.c.l.b16 %v1999
    %v2073 = vunpack.c.h.b16 %v1999
    %v2074 = vunpack.c.l.b16 %v2000
    %v2075 = vunpack.c.h.b16 %v2000
    %v2076 = vunpack.c.l.b16 %v2001
    %v2077 = vunpack.c.h.b16 %v2001
    %v2078 = vunpack.c.l.b16 %v2002
    %v2079 = vunpack.c.h.b16 %v2002
    %v2080 = vunpack.c.l.b16 %v2003
    %v2081 = vunpack.c.h.b16 %v2003
    %v2082 = vunpack.c.l.b16 %v2004
    %v2083 = vunpack.c.h.b16 %v2004
    %v2084 = vunpack.c.l.b16 %v2005
    %v2085 = vunpack.c.h.b16 %v2005
    %v2086 = vunpack.c.l.b16 %v2006
    %v2087 = vunpack.c.h.b16 %v2006
    %v2088 = vunpack.c.l.b16 %v2007
    %v2089 = vunpack.c.h.b16 %v2007
    %v2090 = vunpack.c.l.b16 %v2008
    %v2091 = vunpack.c.h.b16 %v2008
    %v2092 = vunpack.c.l.b16 %v2009
    %v2093 = vunpack.c.h.b16 %v2009
    %v2094 = vunpack.c.l.b16 %v2010
    %v2095 = vunpack.c.h.b16 %v2010
    %v2096 = vunpack.c.l.b16 %v2011
    %v2097 = vunpack.c.h.b16 %v2011
    %v2098 = vunpack.c.l.b16 %v2012
    %v2099 = vunpack.c.h.b16 %v2012
    %v2100 = vunpack.c.l.b16 %v2013
    %v2101 = vunpack.c.h.b16 %v2013
    %v2102 = vunpack.c.l.b16 %v2014
    %v2103 = vunpack.c.h.b16 %v2014
    %v2104 = vunpack.c.l.b16 %v2015
    %v2105 = vunpack.c.h.b16 %v2015
    %v2106 = vunpack.c.l.b16 %v2016
    %v2107 = vunpack.c.h.b16 %v2016
    %v2108 = vunpack.c.l.b16 %v2017
    %v2109 = vunpack.c.h.b16 %v2017
    %v2110 = vunpack.c.l.b16 %v2018
    %v2111 = vunpack.c.h.b16 %v2018
    %v2112 = vunpack.c.l.b16 %v2019
    %v2113 = vunpack.c.h.b16 %v2019
    %v2114 = vunpack.c.l.b16 %v2020
    %v2115 = vunpack.c.h.b16 %v2020
    %v2116 = vunpack.c.l.b16 %v2021
    %v2117 = vunpack.c.h.b16 %v2021
    %v2118 = vpack.c.b16 %v2058, %v2054
    %v2119 = vpack.c.b16 %v2059, %v2055
    %v2120 = vpack.c.b16 %v2060, %v2056
    %v2121 = vpack.c.b16 %v2061, %v2057
    %v2122 = vpack.c.b16 %v2066, %v2062
    %v2123 = vpack.c.b16 %v2067, %v2063
    %v2124 = vpack.c.b16 %v2068, %v2064
    %v2125 = vpack.c.b16 %v2069, %v2065
    %v2126 = vpack.c.b16 %v2074, %v2070
    %v2127 = vpack.c.b16 %v2075, %v2071
    %v2128 = vpack.c.b16 %v2076, %v2072
    %v2129 = vpack.c.b16 %v2077, %v2073
    %v2130 = vpack.c.b16 %v2082, %v2078
    %v2131 = vpack.c.b16 %v2083, %v2079
    %v2132 = vpack.c.b16 %v2084, %v2080
    %v2133 = vpack.c.b16 %v2085, %v2081
    %v2134 = vpack.c.b16 %v2090, %v2086
    %v2135 = vpack.c.b16 %v2091, %v2087
    %v2136 = vpack.c.b16 %v2092, %v2088
    %v2137 = vpack.c.b16 %v2093, %v2089
    %v2138 = vpack.c.b16 %v2098, %v2094
    %v2139 = vpack.c.b16 %v2099, %v2095
    %v2140 = vpack.c.b16 %v2100, %v2096
    %v2141 = vpack.c.b16 %v2101, %v2097
    %v2142 = vpack.c.b16 %v2106, %v2102
    %v2143 = vpack.c.b16 %v2107, %v2103
    %v2144 = vpack.c.b16 %v2108, %v2104
    %v2145 = vpack.c.b16 %v2109, %v2105
    %v2146 = vpack.c.b16 %v2114, %v2110
    %v2147 = vpack.c.b16 %v2115, %v2111
    %v2148 = vpack.c.b16 %v2116, %v2112
    %v2149 = vpack.c.b16 %v2117, %v2113
    %2182 = vmatpush.bf16.msra.mxu0 %v2146
    %2183 = vmatpush.bf16.msra.mxu0 %v2142
    %2184 = vmatpush.bf16.msra.mxu0 %v2138
    %2185 = vmatpush.bf16.msra.mxu0 %v2134
    %2186 = vmatpush.bf16.msra.mxu0 %v2130
    %2187 = vmatpush.bf16.msra.mxu0 %v2126
    %2188 = vmatpush.bf16.msra.mxu0 %v2122
    %2189 = vmatpush.bf16.msra.mxu0 %v2118
    %2190 = vmatmul.bf16.gmra.mxu0 %v1989
    %v2191 = vpop.f32.mrf.mxu0
    %v2192 = vadd.f32 0.0, %v2191
    %v2193 = vpop.f32.mrf.mxu0
    %2194 = vdwg.mxu0
    %2195 = vmatpush.bf16.msra.mxu0 %v2147
    %2196 = vmatpush.bf16.msra.mxu0 %v2143
    %2197 = vmatpush.bf16.msra.mxu0 %v2139
    %2198 = vmatpush.bf16.msra.mxu0 %v2135
    %2199 = vmatpush.bf16.msra.mxu0 %v2131
    %2200 = vmatpush.bf16.msra.mxu0 %v2127
    %2201 = vmatpush.bf16.msra.mxu0 %v2123
    %2202 = vmatpush.bf16.msra.mxu0 %v2119
    %2203 = vmatmul.bf16.gmra.mxu0 %v1989
    %v2204 = vpop.f32.mrf.mxu0
    %v2205 = vadd.f32 0.0, %v2204
    %v2206 = vpop.f32.mrf.mxu0
    %2207 = vdwg.mxu0
    %2208 = vmatpush.bf16.msra.mxu0 %v2148
    %2209 = vmatpush.bf16.msra.mxu0 %v2144
    %2210 = vmatpush.bf16.msra.mxu0 %v2140
    %2211 = vmatpush.bf16.msra.mxu0 %v2136
    %2212 = vmatpush.bf16.msra.mxu0 %v2132
    %2213 = vmatpush.bf16.msra.mxu0 %v2128
    %2214 = vmatpush.bf16.msra.mxu0 %v2124
    %2215 = vmatpush.bf16.msra.mxu0 %v2120
    %2216 = vmatmul.bf16.gmra.mxu0 %v1989
    %v2217 = vpop.f32.mrf.mxu0
    %v2218 = vadd.f32 0.0, %v2217
    %v2219 = vpop.f32.mrf.mxu0
    %2220 = vdwg.mxu0
    %2221 = vmatpush.bf16.msra.mxu0 %v2149
    %2222 = vmatpush.bf16.msra.mxu0 %v2145
    %2223 = vmatpush.bf16.msra.mxu0 %v2141
    %2224 = vmatpush.bf16.msra.mxu0 %v2137
    %2225 = vmatpush.bf16.msra.mxu0 %v2133
    %2226 = vmatpush.bf16.msra.mxu0 %v2129
    %2227 = vmatpush.bf16.msra.mxu0 %v2125
    %2228 = vmatpush.bf16.msra.mxu0 %v2121
    %2229 = vmatmul.bf16.gmra.mxu0 %v1989
    %v2230 = vpop.f32.mrf.mxu0
    %v2231 = vadd.f32 0.0, %v2230
    %v2232 = vpop.f32.mrf.mxu0
    %2233 = vdwg.mxu0
    %v2234 = vadd.f32 %v1985, %v2192
    %v2235 = vadd.f32 %v1986, %v2205
    %v2236 = vadd.f32 %v1987, %v2218
    %v2237 = vadd.f32 %v1988, %v2231
    %v2238 = vxor.u32 %v2234, 2147483648
    %v2239 = vmul.f32 %v2238, 1.442695
    %v2240 = vpow.pop %v2239
    %v2241 = vadd.f32 %v2240, 1.0
    %v2242 = vrcp.pop %v2241
    %v2243 = vmul.f32 %v2241, %v2242
    %v2244 = vsub.f32 1.0, %v2243
    %v2245 = vmul.f32 %v2242, %v2244
    %v2246 = vadd.f32 %v2242, %v2245
    %vm2247 = vweird.f32 %v2241
    %vm2248 = vweird.f32 %v2242
    %vm2249 = vmor %vm2247, %vm2248
    %v2250 = vsel %vm2249, %v2242, %v2246
    %v2251 = vand.u32 2147483647, %v2241
    %vm2252 = vcmp.eq.f32.partialorder %v2251, 8.507059e+37
    %v2253 = vand.u32 %v2241, 2147483648
    %v2254 = vor.u32 1.1754944e-38, %v2253
    %v2255 = vsel %vm2252, %v2254, %v2250
    %v2256 = vmul.f32 1.0, %v2255
    %v2257 = vxor.u32 %v2235, 2147483648
    %v2258 = vmul.f32 %v2257, 1.442695
    %v2259 = vpow.pop %v2258
    %v2260 = vadd.f32 %v2259, 1.0
    %v2261 = vrcp.pop %v2260
    %v2262 = vmul.f32 %v2260, %v2261
    %v2263 = vsub.f32 1.0, %v2262
    %v2264 = vmul.f32 %v2261, %v2263
    %v2265 = vadd.f32 %v2261, %v2264
    %vm2266 = vweird.f32 %v2260
    %vm2267 = vweird.f32 %v2261
    %vm2268 = vmor %vm2266, %vm2267
    %v2269 = vsel %vm2268, %v2261, %v2265
    %v2270 = vand.u32 2147483647, %v2260
    %vm2271 = vcmp.eq.f32.partialorder %v2270, 8.507059e+37
    %v2272 = vand.u32 %v2260, 2147483648
    %v2273 = vor.u32 1.1754944e-38, %v2272
    %v2274 = vsel %vm2271, %v2273, %v2269
    %v2275 = vmul.f32 1.0, %v2274
    %v2276 = vtanh.pop %v2236
    %v2277 = vxor.u32 %v2237, 2147483648
    %v2278 = vmul.f32 %v2277, 1.442695
    %v2279 = vpow.pop %v2278
    %v2280 = vadd.f32 %v2279, 1.0
    %v2281 = vrcp.pop %v2280
    %v2282 = vmul.f32 %v2280, %v2281
    %v2283 = vsub.f32 1.0, %v2282
    %v2284 = vmul.f32 %v2281, %v2283
    %v2285 = vadd.f32 %v2281, %v2284
    %vm2286 = vweird.f32 %v2280
    %vm2287 = vweird.f32 %v2281
    %vm2288 = vmor %vm2286, %vm2287
    %v2289 = vsel %vm2288, %v2281, %v2285
    %v2290 = vand.u32 2147483647, %v2280
    %vm2291 = vcmp.eq.f32.partialorder %v2290, 8.507059e+37
    %v2292 = vand.u32 %v2280, 2147483648
    %v2293 = vor.u32 1.1754944e-38, %v2292
    %v2294 = vsel %vm2291, %v2293, %v2289
    %v2295 = vmul.f32 1.0, %v2294
    %v2296 = vmul.f32 %v2275, %v1981
    %v2297 = vmul.f32 %v2256, %v2276
    %v2298 = vadd.f32 %v2296, %v2297
    %v2299 = vtanh.pop %v2298
    %v2300 = vmul.f32 %v2295, %v2299
    %2301 = vst [vmem:[%s6 + $0x28] sm:$0xff] %v2300
    %v2302 = vld [vmem:[#allocation2 + $0xc0] sm:$0xff]
    %v2303 = vld [vmem:[#allocation2 + $0xc8] sm:$0xff]
    %v2304 = vld [vmem:[#allocation2 + $0xd0] sm:$0xff]
    %v2305 = vld [vmem:[#allocation2 + $0xd8] sm:$0xff]
    %v2306 = vpack.c.bf16 %v2300, %v2300
    %v2307 = vld [vmem:[%s3] sm:$0xff]
    %v2308 = vld [vmem:[%s3 + $0x8] sm:$0xff]
    %v2309 = vld [vmem:[%s3 + $0x10] sm:$0xff]
    %v2310 = vld [vmem:[%s3 + $0x18] sm:$0xff]
    %v2311 = vld [vmem:[%s3 + $0x20] sm:$0xff]
    %v2312 = vld [vmem:[%s3 + $0x28] sm:$0xff]
    %v2313 = vld [vmem:[%s3 + $0x30] sm:$0xff]
    %v2314 = vld [vmem:[%s3 + $0x38] sm:$0xff]
    %v2315 = vld [vmem:[%s3 + $0x40] sm:$0xff]
    %v2316 = vld [vmem:[%s3 + $0x48] sm:$0xff]
    %v2317 = vld [vmem:[%s3 + $0x50] sm:$0xff]
    %v2318 = vld [vmem:[%s3 + $0x58] sm:$0xff]
    %v2319 = vld [vmem:[%s3 + $0x60] sm:$0xff]
    %v2320 = vld [vmem:[%s3 + $0x68] sm:$0xff]
    %v2321 = vld [vmem:[%s3 + $0x70] sm:$0xff]
    %v2322 = vld [vmem:[%s3 + $0x78] sm:$0xff]
    %v2323 = vld [vmem:[%s3 + $0x80] sm:$0xff]
    %v2324 = vld [vmem:[%s3 + $0x88] sm:$0xff]
    %v2325 = vld [vmem:[%s3 + $0x90] sm:$0xff]
    %v2326 = vld [vmem:[%s3 + $0x98] sm:$0xff]
    %v2327 = vld [vmem:[%s3 + $0xa0] sm:$0xff]
    %v2328 = vld [vmem:[%s3 + $0xa8] sm:$0xff]
    %v2329 = vld [vmem:[%s3 + $0xb0] sm:$0xff]
    %v2330 = vld [vmem:[%s3 + $0xb8] sm:$0xff]
    %v2331 = vld [vmem:[%s3 + $0xc0] sm:$0xff]
    %v2332 = vld [vmem:[%s3 + $0xc8] sm:$0xff]
    %v2333 = vld [vmem:[%s3 + $0xd0] sm:$0xff]
    %v2334 = vld [vmem:[%s3 + $0xd8] sm:$0xff]
    %v2335 = vld [vmem:[%s3 + $0xe0] sm:$0xff]
    %v2336 = vld [vmem:[%s3 + $0xe8] sm:$0xff]
    %v2337 = vld [vmem:[%s3 + $0xf0] sm:$0xff]
    %v2338 = vld [vmem:[%s3 + $0xf8] sm:$0xff]
    %v2371 = vunpack.c.l.b16 %v2307
    %v2372 = vunpack.c.h.b16 %v2307
    %v2373 = vunpack.c.l.b16 %v2308
    %v2374 = vunpack.c.h.b16 %v2308
    %v2375 = vunpack.c.l.b16 %v2309
    %v2376 = vunpack.c.h.b16 %v2309
    %v2377 = vunpack.c.l.b16 %v2310
    %v2378 = vunpack.c.h.b16 %v2310
    %v2379 = vunpack.c.l.b16 %v2311
    %v2380 = vunpack.c.h.b16 %v2311
    %v2381 = vunpack.c.l.b16 %v2312
    %v2382 = vunpack.c.h.b16 %v2312
    %v2383 = vunpack.c.l.b16 %v2313
    %v2384 = vunpack.c.h.b16 %v2313
    %v2385 = vunpack.c.l.b16 %v2314
    %v2386 = vunpack.c.h.b16 %v2314
    %v2387 = vunpack.c.l.b16 %v2315
    %v2388 = vunpack.c.h.b16 %v2315
    %v2389 = vunpack.c.l.b16 %v2316
    %v2390 = vunpack.c.h.b16 %v2316
    %v2391 = vunpack.c.l.b16 %v2317
    %v2392 = vunpack.c.h.b16 %v2317
    %v2393 = vunpack.c.l.b16 %v2318
    %v2394 = vunpack.c.h.b16 %v2318
    %v2395 = vunpack.c.l.b16 %v2319
    %v2396 = vunpack.c.h.b16 %v2319
    %v2397 = vunpack.c.l.b16 %v2320
    %v2398 = vunpack.c.h.b16 %v2320
    %v2399 = vunpack.c.l.b16 %v2321
    %v2400 = vunpack.c.h.b16 %v2321
    %v2401 = vunpack.c.l.b16 %v2322
    %v2402 = vunpack.c.h.b16 %v2322
    %v2403 = vunpack.c.l.b16 %v2323
    %v2404 = vunpack.c.h.b16 %v2323
    %v2405 = vunpack.c.l.b16 %v2324
    %v2406 = vunpack.c.h.b16 %v2324
    %v2407 = vunpack.c.l.b16 %v2325
    %v2408 = vunpack.c.h.b16 %v2325
    %v2409 = vunpack.c.l.b16 %v2326
    %v2410 = vunpack.c.h.b16 %v2326
    %v2411 = vunpack.c.l.b16 %v2327
    %v2412 = vunpack.c.h.b16 %v2327
    %v2413 = vunpack.c.l.b16 %v2328
    %v2414 = vunpack.c.h.b16 %v2328
    %v2415 = vunpack.c.l.b16 %v2329
    %v2416 = vunpack.c.h.b16 %v2329
    %v2417 = vunpack.c.l.b16 %v2330
    %v2418 = vunpack.c.h.b16 %v2330
    %v2419 = vunpack.c.l.b16 %v2331
    %v2420 = vunpack.c.h.b16 %v2331
    %v2421 = vunpack.c.l.b16 %v2332
    %v2422 = vunpack.c.h.b16 %v2332
    %v2423 = vunpack.c.l.b16 %v2333
    %v2424 = vunpack.c.h.b16 %v2333
    %v2425 = vunpack.c.l.b16 %v2334
    %v2426 = vunpack.c.h.b16 %v2334
    %v2427 = vunpack.c.l.b16 %v2335
    %v2428 = vunpack.c.h.b16 %v2335
    %v2429 = vunpack.c.l.b16 %v2336
    %v2430 = vunpack.c.h.b16 %v2336
    %v2431 = vunpack.c.l.b16 %v2337
    %v2432 = vunpack.c.h.b16 %v2337
    %v2433 = vunpack.c.l.b16 %v2338
    %v2434 = vunpack.c.h.b16 %v2338
    %v2435 = vpack.c.b16 %v2375, %v2371
    %v2436 = vpack.c.b16 %v2376, %v2372
    %v2437 = vpack.c.b16 %v2377, %v2373
    %v2438 = vpack.c.b16 %v2378, %v2374
    %v2439 = vpack.c.b16 %v2383, %v2379
    %v2440 = vpack.c.b16 %v2384, %v2380
    %v2441 = vpack.c.b16 %v2385, %v2381
    %v2442 = vpack.c.b16 %v2386, %v2382
    %v2443 = vpack.c.b16 %v2391, %v2387
    %v2444 = vpack.c.b16 %v2392, %v2388
    %v2445 = vpack.c.b16 %v2393, %v2389
    %v2446 = vpack.c.b16 %v2394, %v2390
    %v2447 = vpack.c.b16 %v2399, %v2395
    %v2448 = vpack.c.b16 %v2400, %v2396
    %v2449 = vpack.c.b16 %v2401, %v2397
    %v2450 = vpack.c.b16 %v2402, %v2398
    %v2451 = vpack.c.b16 %v2407, %v2403
    %v2452 = vpack.c.b16 %v2408, %v2404
    %v2453 = vpack.c.b16 %v2409, %v2405
    %v2454 = vpack.c.b16 %v2410, %v2406
    %v2455 = vpack.c.b16 %v2415, %v2411
    %v2456 = vpack.c.b16 %v2416, %v2412
    %v2457 = vpack.c.b16 %v2417, %v2413
    %v2458 = vpack.c.b16 %v2418, %v2414
    %v2459 = vpack.c.b16 %v2423, %v2419
    %v2460 = vpack.c.b16 %v2424, %v2420
    %v2461 = vpack.c.b16 %v2425, %v2421
    %v2462 = vpack.c.b16 %v2426, %v2422
    %v2463 = vpack.c.b16 %v2431, %v2427
    %v2464 = vpack.c.b16 %v2432, %v2428
    %v2465 = vpack.c.b16 %v2433, %v2429
    %v2466 = vpack.c.b16 %v2434, %v2430
    %2499 = vmatpush.bf16.msra.mxu0 %v2463
    %2500 = vmatpush.bf16.msra.mxu0 %v2459
    %2501 = vmatpush.bf16.msra.mxu0 %v2455
    %2502 = vmatpush.bf16.msra.mxu0 %v2451
    %2503 = vmatpush.bf16.msra.mxu0 %v2447
    %2504 = vmatpush.bf16.msra.mxu0 %v2443
    %2505 = vmatpush.bf16.msra.mxu0 %v2439
    %2506 = vmatpush.bf16.msra.mxu0 %v2435
    %2507 = vmatmul.bf16.gmra.mxu0 %v2306
    %v2508 = vpop.f32.mrf.mxu0
    %v2509 = vadd.f32 0.0, %v2508
    %v2510 = vpop.f32.mrf.mxu0
    %2511 = vdwg.mxu0
    %2512 = vmatpush.bf16.msra.mxu0 %v2464
    %2513 = vmatpush.bf16.msra.mxu0 %v2460
    %2514 = vmatpush.bf16.msra.mxu0 %v2456
    %2515 = vmatpush.bf16.msra.mxu0 %v2452
    %2516 = vmatpush.bf16.msra.mxu0 %v2448
    %2517 = vmatpush.bf16.msra.mxu0 %v2444
    %2518 = vmatpush.bf16.msra.mxu0 %v2440
    %2519 = vmatpush.bf16.msra.mxu0 %v2436
    %2520 = vmatmul.bf16.gmra.mxu0 %v2306
    %v2521 = vpop.f32.mrf.mxu0
    %v2522 = vadd.f32 0.0, %v2521
    %v2523 = vpop.f32.mrf.mxu0
    %2524 = vdwg.mxu0
    %2525 = vmatpush.bf16.msra.mxu0 %v2465
    %2526 = vmatpush.bf16.msra.mxu0 %v2461
    %2527 = vmatpush.bf16.msra.mxu0 %v2457
    %2528 = vmatpush.bf16.msra.mxu0 %v2453
    %2529 = vmatpush.bf16.msra.mxu0 %v2449
    %2530 = vmatpush.bf16.msra.mxu0 %v2445
    %2531 = vmatpush.bf16.msra.mxu0 %v2441
    %2532 = vmatpush.bf16.msra.mxu0 %v2437
    %2533 = vmatmul.bf16.gmra.mxu0 %v2306
    %v2534 = vpop.f32.mrf.mxu0
    %v2535 = vadd.f32 0.0, %v2534
    %v2536 = vpop.f32.mrf.mxu0
    %2537 = vdwg.mxu0
    %2538 = vmatpush.bf16.msra.mxu0 %v2466
    %2539 = vmatpush.bf16.msra.mxu0 %v2462
    %2540 = vmatpush.bf16.msra.mxu0 %v2458
    %2541 = vmatpush.bf16.msra.mxu0 %v2454
    %2542 = vmatpush.bf16.msra.mxu0 %v2450
    %2543 = vmatpush.bf16.msra.mxu0 %v2446
    %2544 = vmatpush.bf16.msra.mxu0 %v2442
    %2545 = vmatpush.bf16.msra.mxu0 %v2438
    %2546 = vmatmul.bf16.gmra.mxu0 %v2306
    %v2547 = vpop.f32.mrf.mxu0
    %v2548 = vadd.f32 0.0, %v2547
    %v2549 = vpop.f32.mrf.mxu0
    %2550 = vdwg.mxu0
    %v2551 = vadd.f32 %v2302, %v2509
    %v2552 = vadd.f32 %v2303, %v2522
    %v2553 = vadd.f32 %v2304, %v2535
    %v2554 = vadd.f32 %v2305, %v2548
    %v2555 = vxor.u32 %v2551, 2147483648
    %v2556 = vmul.f32 %v2555, 1.442695
    %v2557 = vpow.pop %v2556
    %v2558 = vadd.f32 %v2557, 1.0
    %v2559 = vrcp.pop %v2558
    %v2560 = vmul.f32 %v2558, %v2559
    %v2561 = vsub.f32 1.0, %v2560
    %v2562 = vmul.f32 %v2559, %v2561
    %v2563 = vadd.f32 %v2559, %v2562
    %vm2564 = vweird.f32 %v2558
    %vm2565 = vweird.f32 %v2559
    %vm2566 = vmor %vm2564, %vm2565
    %v2567 = vsel %vm2566, %v2559, %v2563
    %v2568 = vand.u32 2147483647, %v2558
    %vm2569 = vcmp.eq.f32.partialorder %v2568, 8.507059e+37
    %v2570 = vand.u32 %v2558, 2147483648
    %v2571 = vor.u32 1.1754944e-38, %v2570
    %v2572 = vsel %vm2569, %v2571, %v2567
    %v2573 = vmul.f32 1.0, %v2572
    %v2574 = vxor.u32 %v2552, 2147483648
    %v2575 = vmul.f32 %v2574, 1.442695
    %v2576 = vpow.pop %v2575
    %v2577 = vadd.f32 %v2576, 1.0
    %v2578 = vrcp.pop %v2577
    %v2579 = vmul.f32 %v2577, %v2578
    %v2580 = vsub.f32 1.0, %v2579
    %v2581 = vmul.f32 %v2578, %v2580
    %v2582 = vadd.f32 %v2578, %v2581
    %vm2583 = vweird.f32 %v2577
    %vm2584 = vweird.f32 %v2578
    %vm2585 = vmor %vm2583, %vm2584
    %v2586 = vsel %vm2585, %v2578, %v2582
    %v2587 = vand.u32 2147483647, %v2577
    %vm2588 = vcmp.eq.f32.partialorder %v2587, 8.507059e+37
    %v2589 = vand.u32 %v2577, 2147483648
    %v2590 = vor.u32 1.1754944e-38, %v2589
    %v2591 = vsel %vm2588, %v2590, %v2586
    %v2592 = vmul.f32 1.0, %v2591
    %v2593 = vtanh.pop %v2553
    %v2594 = vxor.u32 %v2554, 2147483648
    %v2595 = vmul.f32 %v2594, 1.442695
    %v2596 = vpow.pop %v2595
    %v2597 = vadd.f32 %v2596, 1.0
    %v2598 = vrcp.pop %v2597
    %v2599 = vmul.f32 %v2597, %v2598
    %v2600 = vsub.f32 1.0, %v2599
    %v2601 = vmul.f32 %v2598, %v2600
    %v2602 = vadd.f32 %v2598, %v2601
    %vm2603 = vweird.f32 %v2597
    %vm2604 = vweird.f32 %v2598
    %vm2605 = vmor %vm2603, %vm2604
    %v2606 = vsel %vm2605, %v2598, %v2602
    %v2607 = vand.u32 2147483647, %v2597
    %vm2608 = vcmp.eq.f32.partialorder %v2607, 8.507059e+37
    %v2609 = vand.u32 %v2597, 2147483648
    %v2610 = vor.u32 1.1754944e-38, %v2609
    %v2611 = vsel %vm2608, %v2610, %v2606
    %v2612 = vmul.f32 1.0, %v2611
    %v2613 = vmul.f32 %v2592, %v2298
    %v2614 = vmul.f32 %v2573, %v2593
    %v2615 = vadd.f32 %v2613, %v2614
    %v2616 = vtanh.pop %v2615
    %v2617 = vmul.f32 %v2612, %v2616
    %2618 = vst [vmem:[%s6 + $0x30] sm:$0xff] %v2617
    %v2619 = vld [vmem:[#allocation2 + $0xe0] sm:$0xff]
    %v2620 = vld [vmem:[#allocation2 + $0xe8] sm:$0xff]
    %v2621 = vld [vmem:[#allocation2 + $0xf0] sm:$0xff]
    %v2622 = vld [vmem:[#allocation2 + $0xf8] sm:$0xff]
    %v2623 = vpack.c.bf16 %v2617, %v2617
    %v2624 = vld [vmem:[%s3] sm:$0xff]
    %v2625 = vld [vmem:[%s3 + $0x8] sm:$0xff]
    %v2626 = vld [vmem:[%s3 + $0x10] sm:$0xff]
    %v2627 = vld [vmem:[%s3 + $0x18] sm:$0xff]
    %v2628 = vld [vmem:[%s3 + $0x20] sm:$0xff]
    %v2629 = vld [vmem:[%s3 + $0x28] sm:$0xff]
    %v2630 = vld [vmem:[%s3 + $0x30] sm:$0xff]
    %v2631 = vld [vmem:[%s3 + $0x38] sm:$0xff]
    %v2632 = vld [vmem:[%s3 + $0x40] sm:$0xff]
    %v2633 = vld [vmem:[%s3 + $0x48] sm:$0xff]
    %v2634 = vld [vmem:[%s3 + $0x50] sm:$0xff]
    %v2635 = vld [vmem:[%s3 + $0x58] sm:$0xff]
    %v2636 = vld [vmem:[%s3 + $0x60] sm:$0xff]
    %v2637 = vld [vmem:[%s3 + $0x68] sm:$0xff]
    %v2638 = vld [vmem:[%s3 + $0x70] sm:$0xff]
    %v2639 = vld [vmem:[%s3 + $0x78] sm:$0xff]
    %v2640 = vld [vmem:[%s3 + $0x80] sm:$0xff]
    %v2641 = vld [vmem:[%s3 + $0x88] sm:$0xff]
    %v2642 = vld [vmem:[%s3 + $0x90] sm:$0xff]
    %v2643 = vld [vmem:[%s3 + $0x98] sm:$0xff]
    %v2644 = vld [vmem:[%s3 + $0xa0] sm:$0xff]
    %v2645 = vld [vmem:[%s3 + $0xa8] sm:$0xff]
    %v2646 = vld [vmem:[%s3 + $0xb0] sm:$0xff]
    %v2647 = vld [vmem:[%s3 + $0xb8] sm:$0xff]
    %v2648 = vld [vmem:[%s3 + $0xc0] sm:$0xff]
    %v2649 = vld [vmem:[%s3 + $0xc8] sm:$0xff]
    %v2650 = vld [vmem:[%s3 + $0xd0] sm:$0xff]
    %v2651 = vld [vmem:[%s3 + $0xd8] sm:$0xff]
    %v2652 = vld [vmem:[%s3 + $0xe0] sm:$0xff]
    %v2653 = vld [vmem:[%s3 + $0xe8] sm:$0xff]
    %v2654 = vld [vmem:[%s3 + $0xf0] sm:$0xff]
    %v2655 = vld [vmem:[%s3 + $0xf8] sm:$0xff]
    %v2688 = vunpack.c.l.b16 %v2624
    %v2689 = vunpack.c.h.b16 %v2624
    %v2690 = vunpack.c.l.b16 %v2625
    %v2691 = vunpack.c.h.b16 %v2625
    %v2692 = vunpack.c.l.b16 %v2626
    %v2693 = vunpack.c.h.b16 %v2626
    %v2694 = vunpack.c.l.b16 %v2627
    %v2695 = vunpack.c.h.b16 %v2627
    %v2696 = vunpack.c.l.b16 %v2628
    %v2697 = vunpack.c.h.b16 %v2628
    %v2698 = vunpack.c.l.b16 %v2629
    %v2699 = vunpack.c.h.b16 %v2629
    %v2700 = vunpack.c.l.b16 %v2630
    %v2701 = vunpack.c.h.b16 %v2630
    %v2702 = vunpack.c.l.b16 %v2631
    %v2703 = vunpack.c.h.b16 %v2631
    %v2704 = vunpack.c.l.b16 %v2632
    %v2705 = vunpack.c.h.b16 %v2632
    %v2706 = vunpack.c.l.b16 %v2633
    %v2707 = vunpack.c.h.b16 %v2633
    %v2708 = vunpack.c.l.b16 %v2634
    %v2709 = vunpack.c.h.b16 %v2634
    %v2710 = vunpack.c.l.b16 %v2635
    %v2711 = vunpack.c.h.b16 %v2635
    %v2712 = vunpack.c.l.b16 %v2636
    %v2713 = vunpack.c.h.b16 %v2636
    %v2714 = vunpack.c.l.b16 %v2637
    %v2715 = vunpack.c.h.b16 %v2637
    %v2716 = vunpack.c.l.b16 %v2638
    %v2717 = vunpack.c.h.b16 %v2638
    %v2718 = vunpack.c.l.b16 %v2639
    %v2719 = vunpack.c.h.b16 %v2639
    %v2720 = vunpack.c.l.b16 %v2640
    %v2721 = vunpack.c.h.b16 %v2640
    %v2722 = vunpack.c.l.b16 %v2641
    %v2723 = vunpack.c.h.b16 %v2641
    %v2724 = vunpack.c.l.b16 %v2642
    %v2725 = vunpack.c.h.b16 %v2642
    %v2726 = vunpack.c.l.b16 %v2643
    %v2727 = vunpack.c.h.b16 %v2643
    %v2728 = vunpack.c.l.b16 %v2644
    %v2729 = vunpack.c.h.b16 %v2644
    %v2730 = vunpack.c.l.b16 %v2645
    %v2731 = vunpack.c.h.b16 %v2645
    %v2732 = vunpack.c.l.b16 %v2646
    %v2733 = vunpack.c.h.b16 %v2646
    %v2734 = vunpack.c.l.b16 %v2647
    %v2735 = vunpack.c.h.b16 %v2647
    %v2736 = vunpack.c.l.b16 %v2648
    %v2737 = vunpack.c.h.b16 %v2648
    %v2738 = vunpack.c.l.b16 %v2649
    %v2739 = vunpack.c.h.b16 %v2649
    %v2740 = vunpack.c.l.b16 %v2650
    %v2741 = vunpack.c.h.b16 %v2650
    %v2742 = vunpack.c.l.b16 %v2651
    %v2743 = vunpack.c.h.b16 %v2651
    %v2744 = vunpack.c.l.b16 %v2652
    %v2745 = vunpack.c.h.b16 %v2652
    %v2746 = vunpack.c.l.b16 %v2653
    %v2747 = vunpack.c.h.b16 %v2653
    %v2748 = vunpack.c.l.b16 %v2654
    %v2749 = vunpack.c.h.b16 %v2654
    %v2750 = vunpack.c.l.b16 %v2655
    %v2751 = vunpack.c.h.b16 %v2655
    %v2752 = vpack.c.b16 %v2692, %v2688
    %v2753 = vpack.c.b16 %v2693, %v2689
    %v2754 = vpack.c.b16 %v2694, %v2690
    %v2755 = vpack.c.b16 %v2695, %v2691
    %v2756 = vpack.c.b16 %v2700, %v2696
    %v2757 = vpack.c.b16 %v2701, %v2697
    %v2758 = vpack.c.b16 %v2702, %v2698
    %v2759 = vpack.c.b16 %v2703, %v2699
    %v2760 = vpack.c.b16 %v2708, %v2704
    %v2761 = vpack.c.b16 %v2709, %v2705
    %v2762 = vpack.c.b16 %v2710, %v2706
    %v2763 = vpack.c.b16 %v2711, %v2707
    %v2764 = vpack.c.b16 %v2716, %v2712
    %v2765 = vpack.c.b16 %v2717, %v2713
    %v2766 = vpack.c.b16 %v2718, %v2714
    %v2767 = vpack.c.b16 %v2719, %v2715
    %v2768 = vpack.c.b16 %v2724, %v2720
    %v2769 = vpack.c.b16 %v2725, %v2721
    %v2770 = vpack.c.b16 %v2726, %v2722
    %v2771 = vpack.c.b16 %v2727, %v2723
    %v2772 = vpack.c.b16 %v2732, %v2728
    %v2773 = vpack.c.b16 %v2733, %v2729
    %v2774 = vpack.c.b16 %v2734, %v2730
    %v2775 = vpack.c.b16 %v2735, %v2731
    %v2776 = vpack.c.b16 %v2740, %v2736
    %v2777 = vpack.c.b16 %v2741, %v2737
    %v2778 = vpack.c.b16 %v2742, %v2738
    %v2779 = vpack.c.b16 %v2743, %v2739
    %v2780 = vpack.c.b16 %v2748, %v2744
    %v2781 = vpack.c.b16 %v2749, %v2745
    %v2782 = vpack.c.b16 %v2750, %v2746
    %v2783 = vpack.c.b16 %v2751, %v2747
    %2816 = vmatpush.bf16.msra.mxu0 %v2780
    %2817 = vmatpush.bf16.msra.mxu0 %v2776
    %2818 = vmatpush.bf16.msra.mxu0 %v2772
    %2819 = vmatpush.bf16.msra.mxu0 %v2768
    %2820 = vmatpush.bf16.msra.mxu0 %v2764
    %2821 = vmatpush.bf16.msra.mxu0 %v2760
    %2822 = vmatpush.bf16.msra.mxu0 %v2756
    %2823 = vmatpush.bf16.msra.mxu0 %v2752
    %2824 = vmatmul.bf16.gmra.mxu0 %v2623
    %v2825 = vpop.f32.mrf.mxu0
    %v2826 = vadd.f32 0.0, %v2825
    %v2827 = vpop.f32.mrf.mxu0
    %2828 = vdwg.mxu0
    %2829 = vmatpush.bf16.msra.mxu0 %v2781
    %2830 = vmatpush.bf16.msra.mxu0 %v2777
    %2831 = vmatpush.bf16.msra.mxu0 %v2773
    %2832 = vmatpush.bf16.msra.mxu0 %v2769
    %2833 = vmatpush.bf16.msra.mxu0 %v2765
    %2834 = vmatpush.bf16.msra.mxu0 %v2761
    %2835 = vmatpush.bf16.msra.mxu0 %v2757
    %2836 = vmatpush.bf16.msra.mxu0 %v2753
    %2837 = vmatmul.bf16.gmra.mxu0 %v2623
    %v2838 = vpop.f32.mrf.mxu0
    %v2839 = vadd.f32 0.0, %v2838
    %v2840 = vpop.f32.mrf.mxu0
    %2841 = vdwg.mxu0
    %2842 = vmatpush.bf16.msra.mxu0 %v2782
    %2843 = vmatpush.bf16.msra.mxu0 %v2778
    %2844 = vmatpush.bf16.msra.mxu0 %v2774
    %2845 = vmatpush.bf16.msra.mxu0 %v2770
    %2846 = vmatpush.bf16.msra.mxu0 %v2766
    %2847 = vmatpush.bf16.msra.mxu0 %v2762
    %2848 = vmatpush.bf16.msra.mxu0 %v2758
    %2849 = vmatpush.bf16.msra.mxu0 %v2754
    %2850 = vmatmul.bf16.gmra.mxu0 %v2623
    %v2851 = vpop.f32.mrf.mxu0
    %v2852 = vadd.f32 0.0, %v2851
    %v2853 = vpop.f32.mrf.mxu0
    %2854 = vdwg.mxu0
    %2855 = vmatpush.bf16.msra.mxu0 %v2783
    %2856 = vmatpush.bf16.msra.mxu0 %v2779
    %2857 = vmatpush.bf16.msra.mxu0 %v2775
    %2858 = vmatpush.bf16.msra.mxu0 %v2771
    %2859 = vmatpush.bf16.msra.mxu0 %v2767
    %2860 = vmatpush.bf16.msra.mxu0 %v2763
    %2861 = vmatpush.bf16.msra.mxu0 %v2759
    %2862 = vmatpush.bf16.msra.mxu0 %v2755
    %2863 = vmatmul.bf16.gmra.mxu0 %v2623
    %v2864 = vpop.f32.mrf.mxu0
    %v2865 = vadd.f32 0.0, %v2864
    %v2866 = vpop.f32.mrf.mxu0
    %2867 = vdwg.mxu0
    %v2868 = vadd.f32 %v2619, %v2826
    %v2869 = vadd.f32 %v2620, %v2839
    %v2870 = vadd.f32 %v2621, %v2852
    %v2871 = vadd.f32 %v2622, %v2865
    %v2872 = vxor.u32 %v2868, 2147483648
    %v2873 = vmul.f32 %v2872, 1.442695
    %v2874 = vpow.pop %v2873
    %v2875 = vadd.f32 %v2874, 1.0
    %v2876 = vrcp.pop %v2875
    %v2877 = vmul.f32 %v2875, %v2876
    %v2878 = vsub.f32 1.0, %v2877
    %v2879 = vmul.f32 %v2876, %v2878
    %v2880 = vadd.f32 %v2876, %v2879
    %vm2881 = vweird.f32 %v2875
    %vm2882 = vweird.f32 %v2876
    %vm2883 = vmor %vm2881, %vm2882
    %v2884 = vsel %vm2883, %v2876, %v2880
    %v2885 = vand.u32 2147483647, %v2875
    %vm2886 = vcmp.eq.f32.partialorder %v2885, 8.507059e+37
    %v2887 = vand.u32 %v2875, 2147483648
    %v2888 = vor.u32 1.1754944e-38, %v2887
    %v2889 = vsel %vm2886, %v2888, %v2884
    %v2890 = vmul.f32 1.0, %v2889
    %v2891 = vxor.u32 %v2869, 2147483648
    %v2892 = vmul.f32 %v2891, 1.442695
    %v2893 = vpow.pop %v2892
    %v2894 = vadd.f32 %v2893, 1.0
    %v2895 = vrcp.pop %v2894
    %v2896 = vmul.f32 %v2894, %v2895
    %v2897 = vsub.f32 1.0, %v2896
    %v2898 = vmul.f32 %v2895, %v2897
    %v2899 = vadd.f32 %v2895, %v2898
    %vm2900 = vweird.f32 %v2894
    %vm2901 = vweird.f32 %v2895
    %vm2902 = vmor %vm2900, %vm2901
    %v2903 = vsel %vm2902, %v2895, %v2899
    %v2904 = vand.u32 2147483647, %v2894
    %vm2905 = vcmp.eq.f32.partialorder %v2904, 8.507059e+37
    %v2906 = vand.u32 %v2894, 2147483648
    %v2907 = vor.u32 1.1754944e-38, %v2906
    %v2908 = vsel %vm2905, %v2907, %v2903
    %v2909 = vmul.f32 1.0, %v2908
    %v2910 = vtanh.pop %v2870
    %v2911 = vxor.u32 %v2871, 2147483648
    %v2912 = vmul.f32 %v2911, 1.442695
    %v2913 = vpow.pop %v2912
    %v2914 = vadd.f32 %v2913, 1.0
    %v2915 = vrcp.pop %v2914
    %v2916 = vmul.f32 %v2914, %v2915
    %v2917 = vsub.f32 1.0, %v2916
    %v2918 = vmul.f32 %v2915, %v2917
    %v2919 = vadd.f32 %v2915, %v2918
    %vm2920 = vweird.f32 %v2914
    %vm2921 = vweird.f32 %v2915
    %vm2922 = vmor %vm2920, %vm2921
    %v2923 = vsel %vm2922, %v2915, %v2919
    %v2924 = vand.u32 2147483647, %v2914
    %vm2925 = vcmp.eq.f32.partialorder %v2924, 8.507059e+37
    %v2926 = vand.u32 %v2914, 2147483648
    %v2927 = vor.u32 1.1754944e-38, %v2926
    %v2928 = vsel %vm2925, %v2927, %v2923
    %v2929 = vmul.f32 1.0, %v2928
    %v2930 = vmul.f32 %v2909, %v2615
    %v2931 = vmul.f32 %v2890, %v2910
    %v2932 = vadd.f32 %v2930, %v2931
    %v2933 = vtanh.pop %v2932
    %v2934 = vmul.f32 %v2929, %v2933
    %2935 = vst [vmem:[%s6 + $0x38] sm:$0xff] %v2934
    %2936 = vst [vmem:[#allocation3] sm:$0xff] %v2934
    %2937 = vst [vmem:[#allocation4] sm:$0xff] %v2932
    // Predicated region
    $region30: #{seq2seq_forward.4} parent=1 // pred_check
      %p2938 = pneg %p28
    $region31: #{seq2seq_forward.4} parent=1 // pred_check_branch
      %2940 = sbr.rel (%p2938) target = $region33
    $region32: #{seq2seq_forward.4} parent=1 // pred_region
      %2941 = vst [vmem:[#allocation5] sm:$0xff] %v2934
      %2942 = vst [vmem:[#allocation7] sm:$0xff] %v2932
    $region33: #{seq2seq_forward.4} parent=1 // pred_fallthru
      _
    // Predicated region
    $region34: #{seq2seq_forward.4} parent=1 // pred_check
      _
    $region35: #{seq2seq_forward.4} parent=1 // pred_check_branch
      %2944 = sbr.rel (0) target = $region37
    $region36: #{seq2seq_forward.4} parent=1 // pred_region
      _
    $region37: #{seq2seq_forward.4} parent=1 // pred_fallthru
      _
    // Predicated region
    $region38: #{seq2seq_forward.4} parent=1 // pred_check
      _
    $region39: #{seq2seq_forward.4} parent=1 // pred_check_branch
      %2946 = sbr.rel (0) target = $region41
    $region40: #{seq2seq_forward.4} parent=1 // pred_region
      %2948 = vsyncadd [#allocation6], 0
      %s2950 = sshll.u32 [#allocation5], 4
      %s2951 = int_to_ptr.vmem [resolvable:$true] %s2950
      %s2952 = sshll.u32 %s7, 4
      %s2953 = int_to_ptr.hbm [resolvable:$true] %s2952
      %2955 = dma.vmem_to_hbm [thread:$0]  %s2951, 128, %s2953, [#allocation6]
    $region41: #{seq2seq_forward.4} parent=1 // pred_fallthru
      _
    // Predicated region
    $region42: #{seq2seq_forward.4} parent=1 // pred_check
      _
    $region43: #{seq2seq_forward.4} parent=1 // pred_check_branch
      %2957 = sbr.rel (0) target = $region45
    $region44: #{seq2seq_forward.4} parent=1 // pred_region
      %2959 = vsyncadd [#allocation8], 0
      %s2961 = sshll.u32 [#allocation7], 4
      %s2962 = int_to_ptr.vmem [resolvable:$true] %s2961
      %s2963 = sshll.u32 %s8, 4
      %s2964 = int_to_ptr.hbm [resolvable:$true] %s2963
      %2966 = dma.vmem_to_hbm [thread:$0]  %s2962, 128, %s2964, [#allocation8]
    $region45: #{seq2seq_forward.4} parent=1 // pred_fallthru
      _
    // Predicated region
    $region46: #{seq2seq_forward.4} parent=1 // pred_check
      _
    $region47: #{seq2seq_forward.4} parent=1 // pred_check_branch
      %2968 = sbr.rel (0) target = $region49
    $region48: #{seq2seq_forward.4} parent=1 // pred_region
      _
    $region49: #{seq2seq_forward.4} parent=1 // pred_fallthru
      _
    // Predicated region
    $region50: #{seq2seq_forward.4} parent=1 // pred_check
      _
    $region51: #{seq2seq_forward.4} parent=1 // pred_check_branch
      %2970 = sbr.rel (0) target = $region53
    $region52: #{seq2seq_forward.4} parent=1 // pred_region
      %2972 = dma.done [#allocation6], 128
    $region53: #{seq2seq_forward.4} parent=1 // pred_fallthru
      _
    // Predicated region
    $region54: #{seq2seq_forward.4} parent=1 // pred_check
      _
    $region55: #{seq2seq_forward.4} parent=1 // pred_check_branch
      %2974 = sbr.rel (0) target = $region57
    $region56: #{seq2seq_forward.4} parent=1 // pred_region
      %2976 = dma.done [#allocation8], 128
    $region57: #{seq2seq_forward.4} parent=1 // pred_fallthru
      _
    %2977 = vsyncpa [#allocation6], 1
    %2978 = vsyncpa [#allocation8], 1

</llo_original>
